<compile_context>
chip_gen: v5e
topology: v5e:2x2
jax: 0.10.0
libtpu: 0.0.40
codegen_flags: <defaults>
</compile_context>

<pallas_src>
import functools
from collections import namedtuple

import numpy as np
import jax
import jax.numpy as jnp
from jax.experimental import pallas as pl
from jax.experimental.pallas import tpu as pltpu


ConvGeo = namedtuple("ConvGeo", "cin cout k s p hp wp oh ow")


def _round_up(x, m):
    return (x + m - 1) // m * m


def _planner_geometry(H, W):
    """Static per-layer geometry for an (H, W) input image."""
    defs = [(3, 32, 5, 2, 2), (32, 64, 5, 2, 2), (64, 128, 5, 2, 2)]
    geos = []
    h, w = H, W
    for cin, cout, k, s, p in defs:
        hp, wp = h + 2 * p, w + 2 * p
        oh, ow = (hp - k) // s + 1, (wp - k) // s + 1
        geos.append(ConvGeo(cin, cout, k, s, p, hp, wp, oh, ow))
        h, w = oh, ow
    # powerup_conv: 128 -> 16, 3x3, stride 1, pad 1 on the (h, w) feature map
    hp, wp = h + 2, w + 2
    gpw = ConvGeo(128, 16, 3, 1, 1, hp, wp, hp - 2, wp - 2)
    return tuple(geos), gpw


def _kpad(g):
    return _round_up(g.k * g.wp * g.cin, 128)


# ---------------------------------------------------------------------------
# Weight repacking (one-time, outside jit): conv HWIO -> row-Toeplitz matmul
# ---------------------------------------------------------------------------
def _row_toeplitz(w_hwio, g):
    """(k,k,cin,cout) HWIO weights -> (Kpad, ow*cout) matrix such that
    out_row(oh) = patch_slab(oh) @ W_row computes one full output row
    (all ow, all cout) of the conv, where patch_slab(oh) is the contiguous
    slice A_pad[b, s*oh*wp*cin : (s*oh+k)*wp*cin] of the flattened padded
    activation (row-major h, w, c)."""
    k, _, cin, cout = w_hwio.shape
    cols = []
    for ow in range(g.ow):
        per_ki = []
        for ki in range(k):
            blk = w_hwio[ki].reshape(k * cin, cout)
            top = g.s * ow * cin
            bot = (g.wp - g.s * ow - k) * cin
            per_ki.append(jnp.pad(blk, ((top, bot), (0, 0))))
        cols.append(jnp.concatenate(per_ki, axis=0))
    wrow = jnp.concatenate(cols, axis=1)                 # (k*wp*cin, ow*cout)
    kdim = k * g.wp * cin
    return jnp.pad(wrow, ((0, _kpad(g) - kdim), (0, 0)))  # lane-friendly K


def init_params(key):
    """Deterministic PyTorch-Conv2d-style uniform init, weights in HWIO."""
    def conv_params(k_, ksize, cin, cout):
        kw, kb = jax.random.split(k_)
        bound = 1.0 / float(cin * ksize * ksize) ** 0.5
        w = jax.random.uniform(kw, (ksize, ksize, cin, cout), jnp.float32,
                               -bound, bound)
        b = jax.random.uniform(kb, (cout,), jnp.float32, -bound, bound)
        return w, b

    keys = jax.random.split(key, 6)
    return {
        "conv1": conv_params(keys[0], 5, 3, 32),
        "conv2": conv_params(keys[1], 5, 32, 64),
        "conv3": conv_params(keys[2], 5, 64, 128),
        "path_conv": conv_params(keys[3], 1, 128, 1),
        "powerup_conv": conv_params(keys[4], 3, 128, 16),
        "powerup_classifier": conv_params(keys[5], 1, 16, 1),
    }


def prepare_params(params, H, W):
    """One-time repack of raw conv weights into the lane-dense operands the
    fused kernel consumes (done eagerly, outside jit)."""
    (g1, g2, g3), gpw = _planner_geometry(H, W)

    def conv_pack(name, g):
        w, b = params[name]
        return _row_toeplitz(w, g), jnp.tile(b, g.ow)[None, :]

    w1, b1 = conv_pack("conv1", g1)
    w2, b2 = conv_pack("conv2", g2)
    w3, b3 = conv_pack("conv3", g3)
    wpw, bpw = conv_pack("powerup_conv", gpw)

    wp_vec = params["path_conv"][0].reshape(g3.cout, 1)           # (128, 1)
    wpath = jnp.kron(jnp.eye(g3.ow, dtype=jnp.float32), wp_vec)   # (ow*128, ow)
    bpath = params["path_conv"][1].reshape(1, 1)

    wcls = params["powerup_classifier"][0].reshape(1, gpw.cout)   # (1, 16)
    bcls = params["powerup_classifier"][1].reshape(1, 1)

    return {"w1": w1, "b1": b1, "w2": w2, "b2": b2, "w3": w3, "b3": b3,
            "wpath": wpath, "bpath": bpath,
            "wpw": wpw, "bpw": bpw, "wcls": wcls, "bcls": bcls}


# ---------------------------------------------------------------------------
# The single fused Pallas kernel
# ---------------------------------------------------------------------------
def _planner_kernel(*refs, B, g1, g2, g3, gpw, with_powerup):
    if with_powerup:
        (x0, w1, b1, w2, b2, w3, b3, wpath, bpath, wpw, bpw, wcls, bcls,
         aim_o, pw_o, a1, a2, col1, col2, col3, apw, colpw) = refs
    else:
        (x0, w1, b1, w2, b2, w3, b3, wpath, bpath,
         aim_o, a1, a2, col1, col2, col3) = refs

    def conv_block(a_ref, w_ref, b_ref, col_ref, g, relu):
        """Implicit im2col + one MXU matmul for a whole conv layer.
        a_ref   : (B, hp*wp*cin) zero-padded activations, row-major (h, w, c)
        col_ref : (oh*B, Kpad) scratch; row (oh, b) = contiguous patch slab
        returns : (oh*B, ow*cout) value; row (oh, b), col (ow, cout)."""
        kdim = g.k * g.wp * g.cin
        if col_ref.shape[1] > kdim:           # zero K-padding columns once
            col_ref[...] = jnp.zeros_like(col_ref)
        for oh in range(g.oh):                # static unroll; contiguous slabs
            src = g.s * oh * g.wp * g.cin
            col_ref[oh * B:(oh + 1) * B, 0:kdim] = a_ref[:, src:src + kdim]
        acc = jnp.dot(col_ref[...], w_ref[...],
                      preferred_element_type=jnp.float32)
        acc = acc + b_ref[...]                # bias (+ ReLU) in f32
        if relu:
            acc = jnp.maximum(acc, 0.0)
        return acc

    def scatter_padded(val, g, a_next_ref, wp_next, pad_next):
        """Write conv output rows into the next layer's zero-padded buffer."""
        a_next_ref[...] = jnp.zeros_like(a_next_ref)
        width = g.ow * g.cout
        for oh in range(g.oh):
            dst = ((oh + pad_next) * wp_next + pad_next) * g.cout
            a_next_ref[:, dst:dst + width] = val[oh * B:(oh + 1) * B, :]

    # ---- backbone (all activations stay in VMEM) -------------------------
    out1 = conv_block(x0, w1, b1, col1, g1, relu=True)
    scatter_padded(out1, g1, a1, g2.wp, g2.p)
    out2 = conv_block(a1, w2, b2, col2, g2, relu=True)
    scatter_padded(out2, g2, a2, g3.wp, g3.p)
    feats = conv_block(a2, w3, b3, col3, g3, relu=True)      # (oh*B, ow*128)

    # ---- path head: 1x1 conv folded into the soft-argmax -----------------
    logits = jnp.dot(feats, wpath[...],
                     preferred_element_type=jnp.float32) + bpath[...]
    xs = np.linspace(-1.0, 1.0, g3.ow)
    ys = np.linspace(-1.0, 1.0, g3.oh)
    cells = [(oh, ow, logits[oh * B:(oh + 1) * B, ow:ow + 1])
             for oh in range(g3.oh) for ow in range(g3.ow)]
    m = cells[0][2]
    for _, _, l in cells[1:]:
        m = jnp.maximum(m, l)
    exps = [(oh, ow, jnp.exp(l - m)) for oh, ow, l in cells]
    denom = exps[0][2]
    for _, _, e in exps[1:]:
        denom = denom + e
    inv = pl.reciprocal(denom, approx=True)    # EUP slot
    inv = inv * (2.0 - denom * inv)            # one Newton step -> f32 accuracy
    x_c = sum(e * float(xs[ow]) for _, ow, e in exps) * inv
    y_c = sum(e * float(ys[oh]) for oh, _, e in exps) * inv
    aim_o[...] = jnp.concatenate([x_c, y_c], axis=1)          # (B, 2) [x, y]

    # ---- powerup head -----------------------------------------------------
    if with_powerup:
        scatter_padded(feats, g3, apw, gpw.wp, gpw.p)
        pwf = conv_block(apw, wpw, bpw, colpw, gpw, relu=False)  # (oh*B, ow*16)
        acc = None          # spatial mean of the 16-channel powerup features
        for oh in range(gpw.oh):
            for ow in range(gpw.ow):
                blk = pwf[oh * B:(oh + 1) * B,
                          ow * gpw.cout:(ow + 1) * gpw.cout]
                acc = blk if acc is None else acc + blk
        mean16 = acc * (1.0 / float(gpw.oh * gpw.ow))
        # 1x1 classifier and spatial mean commute (both linear before sigmoid)
        logit_pw = jnp.sum(mean16 * wcls[...], axis=1, keepdims=True) + bcls[...]
        pw_o[...] = 1.0 / (1.0 + jnp.exp(-logit_pw))


# ---------------------------------------------------------------------------
# Forward wrapper: layout plumbing only, then one pallas_call
# ---------------------------------------------------------------------------
def planner_forward(prepped, img_nchw, return_powerup=False):
    B, _, H, W = img_nchw.shape
    (g1, g2, g3), gpw = _planner_geometry(H, W)

    x = jnp.transpose(img_nchw, (0, 2, 3, 1))                       # NCHW->NHWC
    xp = jnp.pad(x, ((0, 0), (g1.p, g1.p), (g1.p, g1.p), (0, 0)))
    x0 = xp.reshape(B, g1.hp * g1.wp * g1.cin)                      # lane-dense

    scratch = [
        pltpu.VMEM((B, g2.hp * g2.wp * g2.cin), jnp.float32),       # a1 padded
        pltpu.VMEM((B, g3.hp * g3.wp * g3.cin), jnp.float32),       # a2 padded
        pltpu.VMEM((g1.oh * B, _kpad(g1)), jnp.float32),            # col1
        pltpu.VMEM((g2.oh * B, _kpad(g2)), jnp.float32),            # col2
        pltpu.VMEM((g3.oh * B, _kpad(g3)), jnp.float32),            # col3
    ]
    args = [x0, prepped["w1"], prepped["b1"], prepped["w2"], prepped["b2"],
            prepped["w3"], prepped["b3"], prepped["wpath"], prepped["bpath"]]
    if return_powerup:
        args += [prepped["wpw"], prepped["bpw"],
                 prepped["wcls"], prepped["bcls"]]
        scratch += [
            pltpu.VMEM((B, gpw.hp * gpw.wp * gpw.cin), jnp.float32),  # apw
            pltpu.VMEM((gpw.oh * B, _kpad(gpw)), jnp.float32),        # colpw
        ]
        out_shape = (jax.ShapeDtypeStruct((B, 2), jnp.float32),
                     jax.ShapeDtypeStruct((B, 1), jnp.float32))
    else:
        out_shape = jax.ShapeDtypeStruct((B, 2), jnp.float32)

    kernel = functools.partial(_planner_kernel, B=B, g1=g1, g2=g2, g3=g3,
                               gpw=gpw, with_powerup=return_powerup)
    out = pl.pallas_call(
        kernel,
        out_shape=out_shape,
        scratch_shapes=scratch,
        compiler_params=pltpu.CompilerParams(
            vmem_limit_bytes=32 * 1024 * 1024),   # safe on v5e/v6e/v7x
    )(*args)

    if return_powerup:
        aim_point, powerup_present = out
        return aim_point, powerup_present
    return out


# ---------------------------------------------------------------------------
if __name__ == "__main__":
    key = jax.random.PRNGKey(0)
    pkey, ikey = jax.random.split(key)
    raw_params = init_params(pkey)

    # NCHW input consistent with the PyTorch module: (B=2, C=3, H=16, W=16)
    img = jax.random.normal(ikey, (2, 3, 16, 16), jnp.float32)

    prepped = prepare_params(raw_params, H=16, W=16)   # one-time weight repack
    fwd = jax.jit(planner_forward, static_argnums=2)

    aim_point, powerup_present = fwd(prepped, img, True)
    aim_only = fwd(prepped, img, False)
    jax.block_until_ready((aim_point, powerup_present, aim_only))

    assert aim_point.shape == (2, 2)
    assert powerup_present.shape == (2, 1)
    assert aim_only.shape == (2, 2)
    assert bool(jnp.all(jnp.isfinite(aim_point)))
    assert bool(jnp.all(jnp.isfinite(powerup_present)))
    print("KERNEL_OK")
</pallas_src>

<mosaic_0001>
module attributes {stable_mosaic.version = 11 : i64} {
  func.func @_planner_kernel(%arg0: memref<2x1200xf32, #tpu.memory_space<vmem>>, %arg1: memref<384x256xf32, #tpu.memory_space<vmem>>, %arg2: memref<1x256xf32, #tpu.memory_space<vmem>>, %arg3: memref<1920x256xf32, #tpu.memory_space<vmem>>, %arg4: memref<1x256xf32, #tpu.memory_space<vmem>>, %arg5: memref<2560x256xf32, #tpu.memory_space<vmem>>, %arg6: memref<1x256xf32, #tpu.memory_space<vmem>>, %arg7: memref<256x2xf32, #tpu.memory_space<vmem>>, %arg8: memref<1x1xf32, #tpu.memory_space<vmem>>, %arg9: memref<1536x32xf32, #tpu.memory_space<vmem>>, %arg10: memref<1x32xf32, #tpu.memory_space<vmem>>, %arg11: memref<1x16xf32, #tpu.memory_space<vmem>>, %arg12: memref<1x1xf32, #tpu.memory_space<vmem>>, %arg13: memref<2x2xf32, #tpu.memory_space<vmem>>, %arg14: memref<2x1xf32, #tpu.memory_space<vmem>>, %arg15: memref<2x4608xf32, #tpu.memory_space<vmem>>, %arg16: memref<2x4096xf32, #tpu.memory_space<vmem>>, %arg17: memref<16x384xf32, #tpu.memory_space<vmem>>, %arg18: memref<8x1920xf32, #tpu.memory_space<vmem>>, %arg19: memref<4x2560xf32, #tpu.memory_space<vmem>>, %arg20: memref<2x2048xf32, #tpu.memory_space<vmem>>, %arg21: memref<4x1536xf32, #tpu.memory_space<vmem>>) attributes {dimension_semantics = [], scalar_prefetch = 0 : i64, scratch_operands = 7 : i64, tpu.core_type = #tpu.core_type<tc>} {
    %cst = arith.constant 0.000000e+00 : f32
    %0 = vector.broadcast %cst : f32 to vector<16x384xf32>
    %c0 = arith.constant 0 : index
    %c0_0 = arith.constant 0 : index
    %1 = vector.load %arg17[%c0, %c0_0] : memref<16x384xf32, #tpu.memory_space<vmem>>, vector<16x384xf32>
    tpu.vector_store %arg17[%c0, %c0_0], %0 {strides = array<i32>} : memref<16x384xf32, #tpu.memory_space<vmem>>, vector<16x384xf32>,
    %c0_1 = arith.constant 0 : index
    %c0_2 = arith.constant 0 : index
    %2 = vector.load %arg0[%c0_1, %c0_2] : memref<2x1200xf32, #tpu.memory_space<vmem>>, vector<2x300xf32>
    %c0_3 = arith.constant 0 : index
    %c0_4 = arith.constant 0 : index
    %3 = vector.load %arg17[%c0_3, %c0_4] : memref<16x384xf32, #tpu.memory_space<vmem>>, vector<2x300xf32>
    tpu.vector_store %arg17[%c0_3, %c0_4], %2 {strides = array<i32>} : memref<16x384xf32, #tpu.memory_space<vmem>>, vector<2x300xf32>,
    %c0_5 = arith.constant 0 : index
    %c120 = arith.constant 120 : index
    %4 = vector.load %arg0[%c0_5, %c120] : memref<2x1200xf32, #tpu.memory_space<vmem>>, vector<2x300xf32>
    %c2 = arith.constant 2 : index
    %c0_6 = arith.constant 0 : index
    %5 = vector.load %arg17[%c2, %c0_6] : memref<16x384xf32, #tpu.memory_space<vmem>>, vector<2x300xf32>
    tpu.vector_store %arg17[%c2, %c0_6], %4 {strides = array<i32>} : memref<16x384xf32, #tpu.memory_space<vmem>>, vector<2x300xf32>,
    %c0_7 = arith.constant 0 : index
    %c240 = arith.constant 240 : index
    %6 = vector.load %arg0[%c0_7, %c240] : memref<2x1200xf32, #tpu.memory_space<vmem>>, vector<2x300xf32>
    %c4 = arith.constant 4 : index
    %c0_8 = arith.constant 0 : index
    %7 = vector.load %arg17[%c4, %c0_8] : memref<16x384xf32, #tpu.memory_space<vmem>>, vector<2x300xf32>
    tpu.vector_store %arg17[%c4, %c0_8], %6 {strides = array<i32>} : memref<16x384xf32, #tpu.memory_space<vmem>>, vector<2x300xf32>,
    %c0_9 = arith.constant 0 : index
    %c360 = arith.constant 360 : index
    %8 = vector.load %arg0[%c0_9, %c360] : memref<2x1200xf32, #tpu.memory_space<vmem>>, vector<2x300xf32>
    %c6 = arith.constant 6 : index
    %c0_10 = arith.constant 0 : index
    %9 = vector.load %arg17[%c6, %c0_10] : memref<16x384xf32, #tpu.memory_space<vmem>>, vector<2x300xf32>
    tpu.vector_store %arg17[%c6, %c0_10], %8 {strides = array<i32>} : memref<16x384xf32, #tpu.memory_space<vmem>>, vector<2x300xf32>,
    %c0_11 = arith.constant 0 : index
    %c480 = arith.constant 480 : index
    %10 = vector.load %arg0[%c0_11, %c480] : memref<2x1200xf32, #tpu.memory_space<vmem>>, vector<2x300xf32>
    %c8 = arith.constant 8 : index
    %c0_12 = arith.constant 0 : index
    %11 = vector.load %arg17[%c8, %c0_12] : memref<16x384xf32, #tpu.memory_space<vmem>>, vector<2x300xf32>
    tpu.vector_store %arg17[%c8, %c0_12], %10 {strides = array<i32>} : memref<16x384xf32, #tpu.memory_space<vmem>>, vector<2x300xf32>,
    %c0_13 = arith.constant 0 : index
    %c600 = arith.constant 600 : index
    %12 = vector.load %arg0[%c0_13, %c600] : memref<2x1200xf32, #tpu.memory_space<vmem>>, vector<2x300xf32>
    %c10 = arith.constant 10 : index
    %c0_14 = arith.constant 0 : index
    %13 = vector.load %arg17[%c10, %c0_14] : memref<16x384xf32, #tpu.memory_space<vmem>>, vector<2x300xf32>
    tpu.vector_store %arg17[%c10, %c0_14], %12 {strides = array<i32>} : memref<16x384xf32, #tpu.memory_space<vmem>>, vector<2x300xf32>,
    %c0_15 = arith.constant 0 : index
    %c720 = arith.constant 720 : index
    %14 = vector.load %arg0[%c0_15, %c720] : memref<2x1200xf32, #tpu.memory_space<vmem>>, vector<2x300xf32>
    %c12 = arith.constant 12 : index
    %c0_16 = arith.constant 0 : index
    %15 = vector.load %arg17[%c12, %c0_16] : memref<16x384xf32, #tpu.memory_space<vmem>>, vector<2x300xf32>
    tpu.vector_store %arg17[%c12, %c0_16], %14 {strides = array<i32>} : memref<16x384xf32, #tpu.memory_space<vmem>>, vector<2x300xf32>,
    %c0_17 = arith.constant 0 : index
    %c840 = arith.constant 840 : index
    %16 = vector.load %arg0[%c0_17, %c840] : memref<2x1200xf32, #tpu.memory_space<vmem>>, vector<2x300xf32>
    %c14 = arith.constant 14 : index
    %c0_18 = arith.constant 0 : index
    %17 = vector.load %arg17[%c14, %c0_18] : memref<16x384xf32, #tpu.memory_space<vmem>>, vector<2x300xf32>
    tpu.vector_store %arg17[%c14, %c0_18], %16 {strides = array<i32>} : memref<16x384xf32, #tpu.memory_space<vmem>>, vector<2x300xf32>,
    %c0_19 = arith.constant 0 : index
    %c0_20 = arith.constant 0 : index
    %18 = vector.load %arg17[%c0_19, %c0_20] : memref<16x384xf32, #tpu.memory_space<vmem>>, vector<16x384xf32>
    %c0_21 = arith.constant 0 : index
    %c0_22 = arith.constant 0 : index
    %19 = vector.load %arg1[%c0_21, %c0_22] : memref<384x256xf32, #tpu.memory_space<vmem>>, vector<384x256xf32>
    %cst_23 = arith.constant dense<0.000000e+00> : vector<16x256xf32>
    %20 = tpu.matmul %18, %19, %cst_23 {dimension_numbers = #tpu.dot_dimension_numbers<[1], [0], [0], [1], [0, 0, 1, 1], [], []>} : vector<16x384xf32>, vector<384x256xf32>, vector<16x256xf32> -> vector<16x256xf32>
    %c0_24 = arith.constant 0 : index
    %c0_25 = arith.constant 0 : index
    %21 = vector.load %arg2[%c0_24, %c0_25] : memref<1x256xf32, #tpu.memory_space<vmem>>, vector<1x256xf32>
    %22 = vector.broadcast %21 : vector<1x256xf32> to vector<16x256xf32>
    %23 = arith.addf %20, %22 : vector<16x256xf32>
    %cst_26 = arith.constant 0.000000e+00 : f32
    %24 = vector.broadcast %cst_26 : f32 to vector<16x256xf32>
    %25 = arith.maximumf %23, %24 : vector<16x256xf32>
    %cst_27 = arith.constant 0.000000e+00 : f32
    %26 = vector.broadcast %cst_27 : f32 to vector<2x4608xf32>
    %c0_28 = arith.constant 0 : index
    %c0_29 = arith.constant 0 : index
    %27 = vector.load %arg15[%c0_28, %c0_29] : memref<2x4608xf32, #tpu.memory_space<vmem>>, vector<2x4608xf32>
    tpu.vector_store %arg15[%c0_28, %c0_29], %26 {strides = array<i32>} : memref<2x4608xf32, #tpu.memory_space<vmem>>, vector<2x4608xf32>,
    %28 = vector.extract_strided_slice %25 {offsets = [0, 0], sizes = [2, 256], strides = [1, 1]} : vector<16x256xf32> to vector<2x256xf32>
    %c0_30 = arith.constant 0 : index
    %c832 = arith.constant 832 : index
    %29 = vector.load %arg15[%c0_30, %c832] : memref<2x4608xf32, #tpu.memory_space<vmem>>, vector<2x256xf32>
    tpu.vector_store %arg15[%c0_30, %c832], %28 {strides = array<i32>} : memref<2x4608xf32, #tpu.memory_space<vmem>>, vector<2x256xf32>,
    %30 = vector.extract_strided_slice %25 {offsets = [2, 0], sizes = [2, 256], strides = [1, 1]} : vector<16x256xf32> to vector<2x256xf32>
    %c0_31 = arith.constant 0 : index
    %c1216 = arith.constant 1216 : index
    %31 = vector.load %arg15[%c0_31, %c1216] : memref<2x4608xf32, #tpu.memory_space<vmem>>, vector<2x256xf32>
    tpu.vector_store %arg15[%c0_31, %c1216], %30 {strides = array<i32>} : memref<2x4608xf32, #tpu.memory_space<vmem>>, vector<2x256xf32>,
    %32 = vector.extract_strided_slice %25 {offsets = [4, 0], sizes = [2, 256], strides = [1, 1]} : vector<16x256xf32> to vector<2x256xf32>
    %c0_32 = arith.constant 0 : index
    %c1600 = arith.constant 1600 : index
    %33 = vector.load %arg15[%c0_32, %c1600] : memref<2x4608xf32, #tpu.memory_space<vmem>>, vector<2x256xf32>
    tpu.vector_store %arg15[%c0_32, %c1600], %32 {strides = array<i32>} : memref<2x4608xf32, #tpu.memory_space<vmem>>, vector<2x256xf32>,
    %34 = vector.extract_strided_slice %25 {offsets = [6, 0], sizes = [2, 256], strides = [1, 1]} : vector<16x256xf32> to vector<2x256xf32>
    %c0_33 = arith.constant 0 : index
    %c1984 = arith.constant 1984 : index
    %35 = vector.load %arg15[%c0_33, %c1984] : memref<2x4608xf32, #tpu.memory_space<vmem>>, vector<2x256xf32>
    tpu.vector_store %arg15[%c0_33, %c1984], %34 {strides = array<i32>} : memref<2x4608xf32, #tpu.memory_space<vmem>>, vector<2x256xf32>,
    %36 = vector.extract_strided_slice %25 {offsets = [8, 0], sizes = [2, 256], strides = [1, 1]} : vector<16x256xf32> to vector<2x256xf32>
    %c0_34 = arith.constant 0 : index
    %c2368 = arith.constant 2368 : index
    %37 = vector.load %arg15[%c0_34, %c2368] : memref<2x4608xf32, #tpu.memory_space<vmem>>, vector<2x256xf32>
    tpu.vector_store %arg15[%c0_34, %c2368], %36 {strides = array<i32>} : memref<2x4608xf32, #tpu.memory_space<vmem>>, vector<2x256xf32>,
    %38 = vector.extract_strided_slice %25 {offsets = [10, 0], sizes = [2, 256], strides = [1, 1]} : vector<16x256xf32> to vector<2x256xf32>
    %c0_35 = arith.constant 0 : index
    %c2752 = arith.constant 2752 : index
    %39 = vector.load %arg15[%c0_35, %c2752] : memref<2x4608xf32, #tpu.memory_space<vmem>>, vector<2x256xf32>
    tpu.vector_store %arg15[%c0_35, %c2752], %38 {strides = array<i32>} : memref<2x4608xf32, #tpu.memory_space<vmem>>, vector<2x256xf32>,
    %40 = vector.extract_strided_slice %25 {offsets = [12, 0], sizes = [2, 256], strides = [1, 1]} : vector<16x256xf32> to vector<2x256xf32>
    %c0_36 = arith.constant 0 : index
    %c3136 = arith.constant 3136 : index
    %41 = vector.load %arg15[%c0_36, %c3136] : memref<2x4608xf32, #tpu.memory_space<vmem>>, vector<2x256xf32>
    tpu.vector_store %arg15[%c0_36, %c3136], %40 {strides = array<i32>} : memref<2x4608xf32, #tpu.memory_space<vmem>>, vector<2x256xf32>,
    %42 = vector.extract_strided_slice %25 {offsets = [14, 0], sizes = [2, 256], strides = [1, 1]} : vector<16x256xf32> to vector<2x256xf32>
    %c0_37 = arith.constant 0 : index
    %c3520 = arith.constant 3520 : index
    %43 = vector.load %arg15[%c0_37, %c3520] : memref<2x4608xf32, #tpu.memory_space<vmem>>, vector<2x256xf32>
    tpu.vector_store %arg15[%c0_37, %c3520], %42 {strides = array<i32>} : memref<2x4608xf32, #tpu.memory_space<vmem>>, vector<2x256xf32>,
    %c0_38 = arith.constant 0 : index
    %c0_39 = arith.constant 0 : index
    %44 = vector.load %arg15[%c0_38, %c0_39] : memref<2x4608xf32, #tpu.memory_space<vmem>>, vector<2x1920xf32>
    %c0_40 = arith.constant 0 : index
    %c0_41 = arith.constant 0 : index
    %45 = vector.load %arg18[%c0_40, %c0_41] : memref<8x1920xf32, #tpu.memory_space<vmem>>, vector<2x1920xf32>
    tpu.vector_store %arg18[%c0_40, %c0_41], %44 {strides = array<i32>} : memref<8x1920xf32, #tpu.memory_space<vmem>>, vector<2x1920xf32>,
    %c0_42 = arith.constant 0 : index
    %c768 = arith.constant 768 : index
    %46 = vector.load %arg15[%c0_42, %c768] : memref<2x4608xf32, #tpu.memory_space<vmem>>, vector<2x1920xf32>
    %c2_43 = arith.constant 2 : index
    %c0_44 = arith.constant 0 : index
    %47 = vector.load %arg18[%c2_43, %c0_44] : memref<8x1920xf32, #tpu.memory_space<vmem>>, vector<2x1920xf32>
    tpu.vector_store %arg18[%c2_43, %c0_44], %46 {strides = array<i32>} : memref<8x1920xf32, #tpu.memory_space<vmem>>, vector<2x1920xf32>,
    %c0_45 = arith.constant 0 : index
    %c1536 = arith.constant 1536 : index
    %48 = vector.load %arg15[%c0_45, %c1536] : memref<2x4608xf32, #tpu.memory_space<vmem>>, vector<2x1920xf32>
    %c4_46 = arith.constant 4 : index
    %c0_47 = arith.constant 0 : index
    %49 = vector.load %arg18[%c4_46, %c0_47] : memref<8x1920xf32, #tpu.memory_space<vmem>>, vector<2x1920xf32>
    tpu.vector_store %arg18[%c4_46, %c0_47], %48 {strides = array<i32>} : memref<8x1920xf32, #tpu.memory_space<vmem>>, vector<2x1920xf32>,
    %c0_48 = arith.constant 0 : index
    %c2304 = arith.constant 2304 : index
    %50 = vector.load %arg15[%c0_48, %c2304] : memref<2x4608xf32, #tpu.memory_space<vmem>>, vector<2x1920xf32>
    %c6_49 = arith.constant 6 : index
    %c0_50 = arith.constant 0 : index
    %51 = vector.load %arg18[%c6_49, %c0_50] : memref<8x1920xf32, #tpu.memory_space<vmem>>, vector<2x1920xf32>
    tpu.vector_store %arg18[%c6_49, %c0_50], %50 {strides = array<i32>} : memref<8x1920xf32, #tpu.memory_space<vmem>>, vector<2x1920xf32>,
    %c0_51 = arith.constant 0 : index
    %c0_52 = arith.constant 0 : index
    %52 = vector.load %arg18[%c0_51, %c0_52] : memref<8x1920xf32, #tpu.memory_space<vmem>>, vector<8x1920xf32>
    %c0_53 = arith.constant 0 : index
    %c0_54 = arith.constant 0 : index
    %53 = vector.load %arg3[%c0_53, %c0_54] : memref<1920x256xf32, #tpu.memory_space<vmem>>, vector<1920x256xf32>
    %cst_55 = arith.constant dense<0.000000e+00> : vector<8x256xf32>
    %54 = tpu.matmul %52, %53, %cst_55 {dimension_numbers = #tpu.dot_dimension_numbers<[1], [0], [0], [1], [0, 0, 1, 1], [], []>} : vector<8x1920xf32>, vector<1920x256xf32>, vector<8x256xf32> -> vector<8x256xf32>
    %c0_56 = arith.constant 0 : index
    %c0_57 = arith.constant 0 : index
    %55 = vector.load %arg4[%c0_56, %c0_57] : memref<1x256xf32, #tpu.memory_space<vmem>>, vector<1x256xf32>
    %56 = vector.broadcast %55 : vector<1x256xf32> to vector<8x256xf32>
    %57 = arith.addf %54, %56 : vector<8x256xf32>
    %cst_58 = arith.constant 0.000000e+00 : f32
    %58 = vector.broadcast %cst_58 : f32 to vector<8x256xf32>
    %59 = arith.maximumf %57, %58 : vector<8x256xf32>
    %cst_59 = arith.constant 0.000000e+00 : f32
    %60 = vector.broadcast %cst_59 : f32 to vector<2x4096xf32>
    %c0_60 = arith.constant 0 : index
    %c0_61 = arith.constant 0 : index
    %61 = vector.load %arg16[%c0_60, %c0_61] : memref<2x4096xf32, #tpu.memory_space<vmem>>, vector<2x4096xf32>
    tpu.vector_store %arg16[%c0_60, %c0_61], %60 {strides = array<i32>} : memref<2x4096xf32, #tpu.memory_space<vmem>>, vector<2x4096xf32>,
    %62 = vector.extract_strided_slice %59 {offsets = [0, 0], sizes = [2, 256], strides = [1, 1]} : vector<8x256xf32> to vector<2x256xf32>
    %c0_62 = arith.constant 0 : index
    %c1152 = arith.constant 1152 : index
    %63 = vector.load %arg16[%c0_62, %c1152] : memref<2x4096xf32, #tpu.memory_space<vmem>>, vector<2x256xf32>
    tpu.vector_store %arg16[%c0_62, %c1152], %62 {strides = array<i32>} : memref<2x4096xf32, #tpu.memory_space<vmem>>, vector<2x256xf32>,
    %64 = vector.extract_strided_slice %59 {offsets = [2, 0], sizes = [2, 256], strides = [1, 1]} : vector<8x256xf32> to vector<2x256xf32>
    %c0_63 = arith.constant 0 : index
    %c1664 = arith.constant 1664 : index
    %65 = vector.load %arg16[%c0_63, %c1664] : memref<2x4096xf32, #tpu.memory_space<vmem>>, vector<2x256xf32>
    tpu.vector_store %arg16[%c0_63, %c1664], %64 {strides = array<i32>} : memref<2x4096xf32, #tpu.memory_space<vmem>>, vector<2x256xf32>,
    %66 = vector.extract_strided_slice %59 {offsets = [4, 0], sizes = [2, 256], strides = [1, 1]} : vector<8x256xf32> to vector<2x256xf32>
    %c0_64 = arith.constant 0 : index
    %c2176 = arith.constant 2176 : index
    %67 = vector.load %arg16[%c0_64, %c2176] : memref<2x4096xf32, #tpu.memory_space<vmem>>, vector<2x256xf32>
    tpu.vector_store %arg16[%c0_64, %c2176], %66 {strides = array<i32>} : memref<2x4096xf32, #tpu.memory_space<vmem>>, vector<2x256xf32>,
    %68 = vector.extract_strided_slice %59 {offsets = [6, 0], sizes = [2, 256], strides = [1, 1]} : vector<8x256xf32> to vector<2x256xf32>
    %c0_65 = arith.constant 0 : index
    %c2688 = arith.constant 2688 : index
    %69 = vector.load %arg16[%c0_65, %c2688] : memref<2x4096xf32, #tpu.memory_space<vmem>>, vector<2x256xf32>
    tpu.vector_store %arg16[%c0_65, %c2688], %68 {strides = array<i32>} : memref<2x4096xf32, #tpu.memory_space<vmem>>, vector<2x256xf32>,
    %c0_66 = arith.constant 0 : index
    %c0_67 = arith.constant 0 : index
    %70 = vector.load %arg16[%c0_66, %c0_67] : memref<2x4096xf32, #tpu.memory_space<vmem>>, vector<2x2560xf32>
    %c0_68 = arith.constant 0 : index
    %c0_69 = arith.constant 0 : index
    %71 = vector.load %arg19[%c0_68, %c0_69] : memref<4x2560xf32, #tpu.memory_space<vmem>>, vector<2x2560xf32>
    tpu.vector_store %arg19[%c0_68, %c0_69], %70 {strides = array<i32>} : memref<4x2560xf32, #tpu.memory_space<vmem>>, vector<2x2560xf32>,
    %c0_70 = arith.constant 0 : index
    %c1024 = arith.constant 1024 : index
    %72 = vector.load %arg16[%c0_70, %c1024] : memref<2x4096xf32, #tpu.memory_space<vmem>>, vector<2x2560xf32>
    %c2_71 = arith.constant 2 : index
    %c0_72 = arith.constant 0 : index
    %73 = vector.load %arg19[%c2_71, %c0_72] : memref<4x2560xf32, #tpu.memory_space<vmem>>, vector<2x2560xf32>
    tpu.vector_store %arg19[%c2_71, %c0_72], %72 {strides = array<i32>} : memref<4x2560xf32, #tpu.memory_space<vmem>>, vector<2x2560xf32>,
    %c0_73 = arith.constant 0 : index
    %c0_74 = arith.constant 0 : index
    %74 = vector.load %arg19[%c0_73, %c0_74] : memref<4x2560xf32, #tpu.memory_space<vmem>>, vector<4x2560xf32>
    %c0_75 = arith.constant 0 : index
    %c0_76 = arith.constant 0 : index
    %75 = vector.load %arg5[%c0_75, %c0_76] : memref<2560x256xf32, #tpu.memory_space<vmem>>, vector<2560x256xf32>
    %cst_77 = arith.constant dense<0.000000e+00> : vector<4x256xf32>
    %76 = tpu.matmul %74, %75, %cst_77 {dimension_numbers = #tpu.dot_dimension_numbers<[1], [0], [0], [1], [0, 0, 1, 1], [], []>} : vector<4x2560xf32>, vector<2560x256xf32>, vector<4x256xf32> -> vector<4x256xf32>
    %c0_78 = arith.constant 0 : index
    %c0_79 = arith.constant 0 : index
    %77 = vector.load %arg6[%c0_78, %c0_79] : memref<1x256xf32, #tpu.memory_space<vmem>>, vector<1x256xf32>
    %78 = vector.broadcast %77 : vector<1x256xf32> to vector<4x256xf32>
    %79 = arith.addf %76, %78 : vector<4x256xf32>
    %cst_80 = arith.constant 0.000000e+00 : f32
    %80 = vector.broadcast %cst_80 : f32 to vector<4x256xf32>
    %81 = arith.maximumf %79, %80 : vector<4x256xf32>
    %c0_81 = arith.constant 0 : index
    %c0_82 = arith.constant 0 : index
    %82 = vector.load %arg7[%c0_81, %c0_82] : memref<256x2xf32, #tpu.memory_space<vmem>>, vector<256x2xf32>
    %cst_83 = arith.constant dense<0.000000e+00> : vector<4x2xf32>
    %83 = tpu.matmul %81, %82, %cst_83 {dimension_numbers = #tpu.dot_dimension_numbers<[1], [0], [0], [1], [0, 0, 1, 1], [], []>} : vector<4x256xf32>, vector<256x2xf32>, vector<4x2xf32> -> vector<4x2xf32>
    %c0_84 = arith.constant 0 : index
    %c0_85 = arith.constant 0 : index
    %84 = vector.load %arg8[%c0_84, %c0_85] : memref<1x1xf32, #tpu.memory_space<vmem>>, vector<1x1xf32>
    %85 = vector.broadcast %84 : vector<1x1xf32> to vector<4x2xf32>
    %86 = arith.addf %83, %85 : vector<4x2xf32>
    %87 = vector.extract_strided_slice %86 {offsets = [0, 0], sizes = [2, 1], strides = [1, 1]} : vector<4x2xf32> to vector<2x1xf32>
    %88 = vector.extract_strided_slice %86 {offsets = [0, 1], sizes = [2, 1], strides = [1, 1]} : vector<4x2xf32> to vector<2x1xf32>
    %89 = vector.extract_strided_slice %86 {offsets = [2, 0], sizes = [2, 1], strides = [1, 1]} : vector<4x2xf32> to vector<2x1xf32>
    %90 = vector.extract_strided_slice %86 {offsets = [2, 1], sizes = [2, 1], strides = [1, 1]} : vector<4x2xf32> to vector<2x1xf32>
    %91 = arith.maximumf %87, %88 : vector<2x1xf32>
    %92 = arith.maximumf %91, %89 : vector<2x1xf32>
    %93 = arith.maximumf %92, %90 : vector<2x1xf32>
    %94 = arith.subf %87, %93 : vector<2x1xf32>
    %95 = math.exp %94 : vector<2x1xf32>
    %96 = arith.subf %88, %93 : vector<2x1xf32>
    %97 = math.exp %96 : vector<2x1xf32>
    %98 = arith.subf %89, %93 : vector<2x1xf32>
    %99 = math.exp %98 : vector<2x1xf32>
    %100 = arith.subf %90, %93 : vector<2x1xf32>
    %101 = math.exp %100 : vector<2x1xf32>
    %102 = arith.addf %95, %97 : vector<2x1xf32>
    %103 = arith.addf %102, %99 : vector<2x1xf32>
    %104 = arith.addf %103, %101 : vector<2x1xf32>
    %105 = tpu.reciprocal %104 {approx = true} : vector<2x1xf32> -> vector<2x1xf32>
    %106 = arith.mulf %104, %105 : vector<2x1xf32>
    %cst_86 = arith.constant 2.000000e+00 : f32
    %107 = vector.broadcast %cst_86 : f32 to vector<2x1xf32>
    %108 = arith.subf %107, %106 : vector<2x1xf32>
    %109 = arith.mulf %105, %108 : vector<2x1xf32>
    %cst_87 = arith.constant -1.000000e+00 : f32
    %110 = vector.broadcast %cst_87 : f32 to vector<2x1xf32>
    %111 = arith.mulf %95, %110 : vector<2x1xf32>
    %cst_88 = arith.constant 0.000000e+00 : f32
    %112 = vector.broadcast %cst_88 : f32 to vector<2x1xf32>
    %113 = arith.addf %112, %111 : vector<2x1xf32>
    %cst_89 = arith.constant 1.000000e+00 : f32
    %114 = vector.broadcast %cst_89 : f32 to vector<2x1xf32>
    %115 = arith.mulf %97, %114 : vector<2x1xf32>
    %116 = arith.addf %113, %115 : vector<2x1xf32>
    %cst_90 = arith.constant -1.000000e+00 : f32
    %117 = vector.broadcast %cst_90 : f32 to vector<2x1xf32>
    %118 = arith.mulf %99, %117 : vector<2x1xf32>
    %119 = arith.addf %116, %118 : vector<2x1xf32>
    %cst_91 = arith.constant 1.000000e+00 : f32
    %120 = vector.broadcast %cst_91 : f32 to vector<2x1xf32>
    %121 = arith.mulf %101, %120 : vector<2x1xf32>
    %122 = arith.addf %119, %121 : vector<2x1xf32>
    %123 = arith.mulf %122, %109 : vector<2x1xf32>
    %cst_92 = arith.constant -1.000000e+00 : f32
    %124 = vector.broadcast %cst_92 : f32 to vector<2x1xf32>
    %125 = arith.mulf %95, %124 : vector<2x1xf32>
    %cst_93 = arith.constant 0.000000e+00 : f32
    %126 = vector.broadcast %cst_93 : f32 to vector<2x1xf32>
    %127 = arith.addf %126, %125 : vector<2x1xf32>
    %cst_94 = arith.constant -1.000000e+00 : f32
    %128 = vector.broadcast %cst_94 : f32 to vector<2x1xf32>
    %129 = arith.mulf %97, %128 : vector<2x1xf32>
    %130 = arith.addf %127, %129 : vector<2x1xf32>
    %cst_95 = arith.constant 1.000000e+00 : f32
    %131 = vector.broadcast %cst_95 : f32 to vector<2x1xf32>
    %132 = arith.mulf %99, %131 : vector<2x1xf32>
    %133 = arith.addf %130, %132 : vector<2x1xf32>
    %cst_96 = arith.constant 1.000000e+00 : f32
    %134 = vector.broadcast %cst_96 : f32 to vector<2x1xf32>
    %135 = arith.mulf %101, %134 : vector<2x1xf32>
    %136 = arith.addf %133, %135 : vector<2x1xf32>
    %137 = arith.mulf %136, %109 : vector<2x1xf32>
    %138 = tpu.concatenate %123, %137 in 1 : vector<2x1xf32>, vector<2x1xf32> -> vector<2x2xf32>
    %c0_97 = arith.constant 0 : index
    %c0_98 = arith.constant 0 : index
    %139 = vector.load %arg13[%c0_97, %c0_98] : memref<2x2xf32, #tpu.memory_space<vmem>>, vector<2x2xf32>
    tpu.vector_store %arg13[%c0_97, %c0_98], %138 {strides = array<i32>} : memref<2x2xf32, #tpu.memory_space<vmem>>, vector<2x2xf32>,
    %cst_99 = arith.constant 0.000000e+00 : f32
    %140 = vector.broadcast %cst_99 : f32 to vector<2x2048xf32>
    %c0_100 = arith.constant 0 : index
    %c0_101 = arith.constant 0 : index
    %141 = vector.load %arg20[%c0_100, %c0_101] : memref<2x2048xf32, #tpu.memory_space<vmem>>, vector<2x2048xf32>
    tpu.vector_store %arg20[%c0_100, %c0_101], %140 {strides = array<i32>} : memref<2x2048xf32, #tpu.memory_space<vmem>>, vector<2x2048xf32>,
    %142 = vector.extract_strided_slice %81 {offsets = [0, 0], sizes = [2, 256], strides = [1, 1]} : vector<4x256xf32> to vector<2x256xf32>
    %c0_102 = arith.constant 0 : index
    %c640 = arith.constant 640 : index
    %143 = vector.load %arg20[%c0_102, %c640] : memref<2x2048xf32, #tpu.memory_space<vmem>>, vector<2x256xf32>
    tpu.vector_store %arg20[%c0_102, %c640], %142 {strides = array<i32>} : memref<2x2048xf32, #tpu.memory_space<vmem>>, vector<2x256xf32>,
    %144 = vector.extract_strided_slice %81 {offsets = [2, 0], sizes = [2, 256], strides = [1, 1]} : vector<4x256xf32> to vector<2x256xf32>
    %c0_103 = arith.constant 0 : index
    %c1152_104 = arith.constant 1152 : index
    %145 = vector.load %arg20[%c0_103, %c1152_104] : memref<2x2048xf32, #tpu.memory_space<vmem>>, vector<2x256xf32>
    tpu.vector_store %arg20[%c0_103, %c1152_104], %144 {strides = array<i32>} : memref<2x2048xf32, #tpu.memory_space<vmem>>, vector<2x256xf32>,
    %c0_105 = arith.constant 0 : index
    %c0_106 = arith.constant 0 : index
    %146 = vector.load %arg20[%c0_105, %c0_106] : memref<2x2048xf32, #tpu.memory_space<vmem>>, vector<2x1536xf32>
    %c0_107 = arith.constant 0 : index
    %c0_108 = arith.constant 0 : index
    %147 = vector.load %arg21[%c0_107, %c0_108] : memref<4x1536xf32, #tpu.memory_space<vmem>>, vector<2x1536xf32>
    tpu.vector_store %arg21[%c0_107, %c0_108], %146 {strides = array<i32>} : memref<4x1536xf32, #tpu.memory_space<vmem>>, vector<2x1536xf32>,
    %c0_109 = arith.constant 0 : index
    %c512 = arith.constant 512 : index
    %148 = vector.load %arg20[%c0_109, %c512] : memref<2x2048xf32, #tpu.memory_space<vmem>>, vector<2x1536xf32>
    %c2_110 = arith.constant 2 : index
    %c0_111 = arith.constant 0 : index
    %149 = vector.load %arg21[%c2_110, %c0_111] : memref<4x1536xf32, #tpu.memory_space<vmem>>, vector<2x1536xf32>
    tpu.vector_store %arg21[%c2_110, %c0_111], %148 {strides = array<i32>} : memref<4x1536xf32, #tpu.memory_space<vmem>>, vector<2x1536xf32>,
    %c0_112 = arith.constant 0 : index
    %c0_113 = arith.constant 0 : index
    %150 = vector.load %arg21[%c0_112, %c0_113] : memref<4x1536xf32, #tpu.memory_space<vmem>>, vector<4x1536xf32>
    %c0_114 = arith.constant 0 : index
    %c0_115 = arith.constant 0 : index
    %151 = vector.load %arg9[%c0_114, %c0_115] : memref<1536x32xf32, #tpu.memory_space<vmem>>, vector<1536x32xf32>
    %cst_116 = arith.constant dense<0.000000e+00> : vector<4x32xf32>
    %152 = tpu.matmul %150, %151, %cst_116 {dimension_numbers = #tpu.dot_dimension_numbers<[1], [0], [0], [1], [0, 0, 1, 1], [], []>} : vector<4x1536xf32>, vector<1536x32xf32>, vector<4x32xf32> -> vector<4x32xf32>
    %c0_117 = arith.constant 0 : index
    %c0_118 = arith.constant 0 : index
    %153 = vector.load %arg10[%c0_117, %c0_118] : memref<1x32xf32, #tpu.memory_space<vmem>>, vector<1x32xf32>
    %154 = vector.broadcast %153 : vector<1x32xf32> to vector<4x32xf32>
    %155 = arith.addf %152, %154 : vector<4x32xf32>
    %156 = vector.extract_strided_slice %155 {offsets = [0, 0], sizes = [2, 16], strides = [1, 1]} : vector<4x32xf32> to vector<2x16xf32>
    %157 = vector.extract_strided_slice %155 {offsets = [0, 16], sizes = [2, 16], strides = [1, 1]} : vector<4x32xf32> to vector<2x16xf32>
    %158 = arith.addf %156, %157 : vector<2x16xf32>
    %159 = vector.extract_strided_slice %155 {offsets = [2, 0], sizes = [2, 16], strides = [1, 1]} : vector<4x32xf32> to vector<2x16xf32>
    %160 = arith.addf %158, %159 : vector<2x16xf32>
    %161 = vector.extract_strided_slice %155 {offsets = [2, 16], sizes = [2, 16], strides = [1, 1]} : vector<4x32xf32> to vector<2x16xf32>
    %162 = arith.addf %160, %161 : vector<2x16xf32>
    %cst_119 = arith.constant 2.500000e-01 : f32
    %163 = vector.broadcast %cst_119 : f32 to vector<2x16xf32>
    %164 = arith.mulf %162, %163 : vector<2x16xf32>
    %c0_120 = arith.constant 0 : index
    %c0_121 = arith.constant 0 : index
    %165 = vector.load %arg11[%c0_120, %c0_121] : memref<1x16xf32, #tpu.memory_space<vmem>>, vector<1x16xf32>
    %166 = vector.broadcast %165 : vector<1x16xf32> to vector<2x16xf32>
    %167 = arith.mulf %164, %166 : vector<2x16xf32>
    %cst_122 = arith.constant dense<0.000000e+00> : vector<2xf32>
    %168 = vector.multi_reduction <add>, %167, %cst_122 [1] : vector<2x16xf32> to vector<2xf32>
    %169 = vector.shape_cast %168 : vector<2xf32> to vector<2x1xf32>
    %c0_123 = arith.constant 0 : index
    %c0_124 = arith.constant 0 : index
    %170 = vector.load %arg12[%c0_123, %c0_124] : memref<1x1xf32, #tpu.memory_space<vmem>>, vector<1x1xf32>
    %171 = vector.broadcast %170 : vector<1x1xf32> to vector<2x1xf32>
    %172 = arith.addf %169, %171 : vector<2x1xf32>
    %cst_125 = arith.constant 0.000000e+00 : f32
    %173 = vector.broadcast %cst_125 : f32 to vector<2x1xf32>
    %174 = arith.subf %173, %172 : vector<2x1xf32>
    %175 = math.exp %174 : vector<2x1xf32>
    %cst_126 = arith.constant 1.000000e+00 : f32
    %176 = vector.broadcast %cst_126 : f32 to vector<2x1xf32>
    %177 = arith.addf %176, %175 : vector<2x1xf32>
    %cst_127 = arith.constant 1.000000e+00 : f32
    %178 = vector.broadcast %cst_127 : f32 to vector<2x1xf32>
    %179 = arith.divf %178, %177 : vector<2x1xf32>
    %c0_128 = arith.constant 0 : index
    %c0_129 = arith.constant 0 : index
    %180 = vector.load %arg14[%c0_128, %c0_129] : memref<2x1xf32, #tpu.memory_space<vmem>>, vector<2x1xf32>
    tpu.vector_store %arg14[%c0_128, %c0_129], %179 {strides = array<i32>} : memref<2x1xf32, #tpu.memory_space<vmem>>, vector<2x1xf32>,
    return
  }
}

</mosaic_0001>

<llo_original>
// kernel: planner_forward.1
$region0: #{planner_forward.1}
  #allocation0 [shape = 'u32[]', space=smem, size = 0x4, offset = 0x4, fixed_abs, tag = 'smem constant byte address 0x4 - core index']
  #allocation1 [shape = 'u32[72,128]{1,0:T(1,128)}', space=vmem, size = 0x9000, scoped, tag = 'internal scratch']
  #allocation2 [shape = 'f32[2,4608]{1,0:T(2,128)}', space=vmem, size = 0x9000, scoped, tag = 'scratch operand']
  #allocation3 [shape = 'f32[2,4096]{1,0:T(2,128)}', space=vmem, size = 0x8000, scoped, tag = 'scratch operand']
  #allocation4 [shape = 'f32[16,384]{1,0:T(8,128)}', space=vmem, size = 0x6000, scoped, tag = 'scratch operand']
  #allocation5 [shape = 'f32[8,1920]{1,0:T(8,128)}', space=vmem, size = 0xf000, scoped, tag = 'scratch operand']
  #allocation6 [shape = 'f32[4,2560]{1,0:T(4,128)}', space=vmem, size = 0xa000, scoped, tag = 'scratch operand']
  #allocation7 [shape = 'f32[2,2048]{1,0:T(2,128)}', space=vmem, size = 0x4000, scoped, tag = 'scratch operand']
  #allocation8 [shape = 'f32[4,1536]{1,0:T(4,128)}', space=vmem, size = 0x6000, scoped, tag = 'scratch operand']
  #allocation9 [shape = 'f32[1,1]{1,0:T(1,128)S(1)}', space=vmem, size = 0x200, scoped, tag = 'scoped memory for planner_forward.1']
  #allocation10 [shape = 'f32[1,1]{1,0:T(1,128)S(1)}', space=vmem, size = 0x200, scoped, tag = 'scoped memory for planner_forward.1']
  %s0 = inlined_call_operand.vmem [shape: f32[2,1200], index: 0, kind: input, shape index: {}]
  %s1 = inlined_call_operand.hbm [shape: f32[384,256], index: 1, kind: input, shape index: {}]
  %s2 = inlined_call_operand.vmem [shape: f32[1,256], index: 2, kind: input, shape index: {}]
  %s3 = inlined_call_operand.hbm [shape: f32[1920,256], index: 3, kind: input, shape index: {}]
  %s4 = inlined_call_operand.vmem [shape: f32[1,256], index: 4, kind: input, shape index: {}]
  %s5 = inlined_call_operand.vmem [shape: f32[2560,256], index: 5, kind: input, shape index: {}]
  %s6 = inlined_call_operand.vmem [shape: f32[1,256], index: 6, kind: input, shape index: {}]
  %s7 = inlined_call_operand.vmem [shape: f32[256,2], index: 7, kind: input, shape index: {}]
  %s8 = inlined_call_operand.<no memory space> [shape: f32[1,1], index: 8, kind: input, shape index: {}]
  %s9 = inlined_call_operand.vmem [shape: f32[1536,32], index: 9, kind: input, shape index: {}]
  %s10 = inlined_call_operand.vmem [shape: f32[1,32], index: 10, kind: input, shape index: {}]
  %s11 = inlined_call_operand.vmem [shape: f32[1,16], index: 11, kind: input, shape index: {}]
  %s12 = inlined_call_operand.<no memory space> [shape: f32[1,1], index: 12, kind: input, shape index: {}]
  %s13 = inlined_call_operand.hbm [shape: f32[2,2], index: 13, kind: output, shape index: {0}]
  %s14 = inlined_call_operand.vmem [shape: f32[2,1], index: 14, kind: output, shape index: {1}]
  %15 = xla_tuple %s13, %s14
  %s16 = sld [smem:[#allocation0]]
  $region78: #{planner_forward.1} parent=0
    _
  %s18 = ssub.s32 1, %s16
  %s19 = scalar_select 0, %s18, %s16
  %v20 = vstv %s8
  %21 = vst [vmem:[#allocation9] sm:$0x1] %v20
  %v22 = vstv %s12
  %23 = vst [vmem:[#allocation10] sm:$0x1] %v22
  $region1: #{planner_forward.1} parent=0
    #allocation11 [shape = 'u8[393216]{0}', space=vmem, size = 0x60000, scoped, tag = 'input window, operand 1, single buffered']
    #allocation12 [shape = 's32[1]{0}', space=sflag, size = 0x4, scoped, tag = 'scoped memory for planner_forward.1']
    #allocation13 [shape = 's32[1]{0}', space=sflag, size = 0x4, scoped, tag = 'scoped memory for planner_forward.1']
    #allocation14 [shape = 'u8[1966080]{0}', space=vmem, size = 0x1e0000, scoped, tag = 'input window, operand 3, single buffered']
    #allocation15 [shape = 's32[1]{0}', space=sflag, size = 0x4, scoped, tag = 'scoped memory for planner_forward.1']
    #allocation16 [shape = 'u8[1024]{0}', space=vmem, size = 0x400, scoped, tag = 'output window, operand 0, single buffered']
    %24 = vsyncpa [#allocation12], 0
    %25 = vsyncpa [#allocation15], 0
    %26 = vsyncpa [#allocation13], 0
    // Predicated region
    $region2: #{planner_forward.1} parent=1 // pred_check
      _
    $region3: #{planner_forward.1} parent=1 // pred_check_branch
      %28 = sbr.rel (0) target = $region5
    $region4: #{planner_forward.1} parent=1 // pred_region
      _
    $region5: #{planner_forward.1} parent=1 // pred_fallthru
      _
    // Predicated region
    $region6: #{planner_forward.1} parent=1 // pred_check
      _
    $region7: #{planner_forward.1} parent=1 // pred_check_branch
      %30 = sbr.rel (0) target = $region9
    $region8: #{planner_forward.1} parent=1 // pred_region
      %32 = vsyncadd [#allocation12], 0
      %s33 = sshll.u32 %s1, 4
      %s34 = int_to_ptr.hbm [resolvable:$true] %s33
      %s35 = sshll.u32 [#allocation11], 4
      %s36 = int_to_ptr.vmem [resolvable:$true] %s35
      %41 = dma.hbm_to_vmem [thread:$0]  %s34, 12288, %s36, [#allocation12], 256, 256, 16
    $region9: #{planner_forward.1} parent=1 // pred_fallthru
      _
    // Predicated region
    $region10: #{planner_forward.1} parent=1 // pred_check
      _
    $region11: #{planner_forward.1} parent=1 // pred_check_branch
      %43 = sbr.rel (0) target = $region13
    $region12: #{planner_forward.1} parent=1 // pred_region
      _
    $region13: #{planner_forward.1} parent=1 // pred_fallthru
      _
    // Predicated region
    $region14: #{planner_forward.1} parent=1 // pred_check
      _
    $region15: #{planner_forward.1} parent=1 // pred_check_branch
      %45 = sbr.rel (0) target = $region17
    $region16: #{planner_forward.1} parent=1 // pred_region
      %47 = vsyncadd [#allocation15], 0
      %s48 = sshll.u32 %s3, 4
      %s49 = int_to_ptr.hbm [resolvable:$true] %s48
      %s50 = sshll.u32 [#allocation14], 4
      %s51 = int_to_ptr.vmem [resolvable:$true] %s50
      %56 = dma.hbm_to_vmem [thread:$0]  %s49, 61440, %s51, [#allocation15], 256, 256, 16
    $region17: #{planner_forward.1} parent=1 // pred_fallthru
      _
    // Predicated region
    $region18: #{planner_forward.1} parent=1 // pred_check
      _
    $region19: #{planner_forward.1} parent=1 // pred_check_branch
      %58 = sbr.rel (0) target = $region21
    $region20: #{planner_forward.1} parent=1 // pred_region
      _
    $region21: #{planner_forward.1} parent=1 // pred_fallthru
      _
    // Predicated region
    $region22: #{planner_forward.1} parent=1 // pred_check
      _
    $region23: #{planner_forward.1} parent=1 // pred_check_branch
      %60 = sbr.rel (0) target = $region25
    $region24: #{planner_forward.1} parent=1 // pred_region
      _
    $region25: #{planner_forward.1} parent=1 // pred_fallthru
      _
    // Predicated region
    $region26: #{planner_forward.1} parent=1 // pred_check
      _
    $region27: #{planner_forward.1} parent=1 // pred_check_branch
      %62 = sbr.rel (0) target = $region29
    $region28: #{planner_forward.1} parent=1 // pred_region
      _
    $region29: #{planner_forward.1} parent=1 // pred_fallthru
      _
    // Predicated region
    $region30: #{planner_forward.1} parent=1 // pred_check
      _
    $region31: #{planner_forward.1} parent=1 // pred_check_branch
      %64 = sbr.rel (0) target = $region33
    $region32: #{planner_forward.1} parent=1 // pred_region
      _
    $region33: #{planner_forward.1} parent=1 // pred_fallthru
      _
    // Predicated region
    $region34: #{planner_forward.1} parent=1 // pred_check
      _
    $region35: #{planner_forward.1} parent=1 // pred_check_branch
      %66 = sbr.rel (0) target = $region37
    $region36: #{planner_forward.1} parent=1 // pred_region
      _
    $region37: #{planner_forward.1} parent=1 // pred_fallthru
      _
    // Predicated region
    $region38: #{planner_forward.1} parent=1 // pred_check
      _
    $region39: #{planner_forward.1} parent=1 // pred_check_branch
      %68 = sbr.rel (0) target = $region41
    $region40: #{planner_forward.1} parent=1 // pred_region
      _
    $region41: #{planner_forward.1} parent=1 // pred_fallthru
      _
    // Predicated region
    $region42: #{planner_forward.1} parent=1 // pred_check
      _
    $region43: #{planner_forward.1} parent=1 // pred_check_branch
      %70 = sbr.rel (0) target = $region45
    $region44: #{planner_forward.1} parent=1 // pred_region
      _
    $region45: #{planner_forward.1} parent=1 // pred_fallthru
      _
    // Predicated region
    $region46: #{planner_forward.1} parent=1 // pred_check
      _
    $region47: #{planner_forward.1} parent=1 // pred_check_branch
      %72 = sbr.rel (0) target = $region49
    $region48: #{planner_forward.1} parent=1 // pred_region
      _
    $region49: #{planner_forward.1} parent=1 // pred_fallthru
      _
    // Predicated region
    $region50: #{planner_forward.1} parent=1 // pred_check
      _
    $region51: #{planner_forward.1} parent=1 // pred_check_branch
      %74 = sbr.rel (0) target = $region53
    $region52: #{planner_forward.1} parent=1 // pred_region
      _
    $region53: #{planner_forward.1} parent=1 // pred_fallthru
      _
    // Predicated region
    $region54: #{planner_forward.1} parent=1 // pred_check
      _
    $region55: #{planner_forward.1} parent=1 // pred_check_branch
      %76 = sbr.rel (0) target = $region57
    $region56: #{planner_forward.1} parent=1 // pred_region
      %78 = dma.done [#allocation12], 12288
    $region57: #{planner_forward.1} parent=1 // pred_fallthru
      _
    // Predicated region
    $region58: #{planner_forward.1} parent=1 // pred_check
      _
    $region59: #{planner_forward.1} parent=1 // pred_check_branch
      %80 = sbr.rel (0) target = $region61
    $region60: #{planner_forward.1} parent=1 // pred_region
      %82 = dma.done [#allocation15], 61440
    $region61: #{planner_forward.1} parent=1 // pred_fallthru
      _
    %83 = vst [vmem:[#allocation4] sm:$0xff] 0.0
    %84 = vst [vmem:[#allocation4 + $0x8] sm:$0xff] 0.0
    %85 = vst [vmem:[#allocation4 + $0x10] sm:$0xff] 0.0
    %86 = vst [vmem:[#allocation4 + $0x18] sm:$0xff] 0.0
    %87 = vst [vmem:[#allocation4 + $0x20] sm:$0xff] 0.0
    %88 = vst [vmem:[#allocation4 + $0x28] sm:$0xff] 0.0
    %v89 = vld [vmem:[%s0] sm:$0x3f]
    %91 = vst [vmem:[#allocation1] ss:$4 sm:$0xff] %v89
    %v92 = vld.sshfl [vmem:[#allocation1] sm:$0xff pattern:$0x73625140]
    %v93 = vld.sshfl [vmem:[#allocation1 + $0x8] sm:$0xff pattern:$0x73625140]
    %v94 = vld.sshfl [vmem:[#allocation1 + $0x10] sm:$0xff pattern:$0x73625140]
    %98 = vst [vmem:[#allocation4] sm:$0x3] %v92
    %99 = vst [vmem:[#allocation4 + $0x8] sm:$0x3] %v93
    %vm100 = vcmask 353280
    %101 = vst.msk [vmem:[#allocation4 + $0x10] sm:$0x3] %vm100, %v94
    %v102 = vld [vmem:[%s0] sm:$0xff]
    %s104 = scalar_lea.vmem [#allocation1], 1
    %105 = vst [vmem:[%s104] ss:$4 sm:$0xff] %v102
    %v106 = vld.sshfl [vmem:[#allocation1] sm:$0xff pattern:$0x73625140]
    %v107 = vld.sshfl [vmem:[#allocation1 + $0x8] sm:$0xff pattern:$0x73625140]
    %v108 = vld.sshfl [vmem:[#allocation1 + $0x10] sm:$0xff pattern:$0x73625140]
    %v109 = vld.sshfl [vmem:[#allocation1 + $0x18] sm:$0xff pattern:$0x73625140]
    %110 = vrot.lane.b32.xlu0 %v106, 8
    %v111 = vpop.permute.xlu0 %110
    %112 = vrot.lane.b32.xlu0 %v107, 8
    %v113 = vpop.permute.xlu0 %112
    %114 = vrot.lane.b32.xlu0 %v108, 8
    %v115 = vpop.permute.xlu0 %114
    %116 = vrot.lane.b32.xlu0 %v109, 8
    %v117 = vpop.permute.xlu0 %116
    %vm118 = vcmask 64512
    %v119 = vsel %vm118, %v111, %v113
    %v120 = vsel %vm118, %v113, %v115
    %v121 = vsel %vm118, %v115, %v117
    %125 = vst [vmem:[#allocation4] sm:$0xc] %v119
    %126 = vst [vmem:[#allocation4 + $0x8] sm:$0xc] %v120
    %vm127 = vcmask 355330
    %128 = vst.msk [vmem:[#allocation4 + $0x10] sm:$0xc] %vm127, %v121
    %v129 = vld [vmem:[%s0 + $0x2] sm:$0xff]
    %s131 = scalar_lea.vmem [#allocation1], 2
    %132 = vst [vmem:[%s131] ss:$4 sm:$0xff] %v129
    %v133 = vld.sshfl [vmem:[#allocation1] sm:$0xff pattern:$0x73625140]
    %v134 = vld.sshfl [vmem:[#allocation1 + $0x8] sm:$0xff pattern:$0x73625140]
    %v135 = vld.sshfl [vmem:[#allocation1 + $0x10] sm:$0xff pattern:$0x73625140]
    %v136 = vld.sshfl [vmem:[#allocation1 + $0x18] sm:$0xff pattern:$0x73625140]
    %137 = vrot.lane.b32.xlu0 %v133, 16
    %v138 = vpop.permute.xlu0 %137
    %139 = vrot.lane.b32.xlu0 %v134, 16
    %v140 = vpop.permute.xlu0 %139
    %141 = vrot.lane.b32.xlu0 %v135, 16
    %v142 = vpop.permute.xlu0 %141
    %143 = vrot.lane.b32.xlu0 %v136, 16
    %v144 = vpop.permute.xlu0 %143
    %vm145 = vcmask 130048
    %v146 = vsel %vm145, %v138, %v140
    %v147 = vsel %vm145, %v140, %v142
    %v148 = vsel %vm145, %v142, %v144
    %152 = vst [vmem:[#allocation4] sm:$0x30] %v146
    %153 = vst [vmem:[#allocation4 + $0x8] sm:$0x30] %v147
    %vm154 = vcmask 357380
    %155 = vst.msk [vmem:[#allocation4 + $0x10] sm:$0x30] %vm154, %v148
    %v156 = vld [vmem:[%s0 + $0x4] sm:$0xff]
    %s158 = scalar_lea.vmem [#allocation1], 3
    %159 = vst [vmem:[%s158] ss:$4 sm:$0xff] %v156
    %v160 = vld.sshfl [vmem:[#allocation1] sm:$0xff pattern:$0x73625140]
    %v161 = vld.sshfl [vmem:[#allocation1 + $0x8] sm:$0xff pattern:$0x73625140]
    %v162 = vld.sshfl [vmem:[#allocation1 + $0x10] sm:$0xff pattern:$0x73625140]
    %v163 = vld.sshfl [vmem:[#allocation1 + $0x18] sm:$0xff pattern:$0x73625140]
    %164 = vrot.lane.b32.xlu0 %v160, 24
    %v165 = vpop.permute.xlu0 %164
    %166 = vrot.lane.b32.xlu0 %v161, 24
    %v167 = vpop.permute.xlu0 %166
    %168 = vrot.lane.b32.xlu0 %v162, 24
    %v169 = vpop.permute.xlu0 %168
    %170 = vrot.lane.b32.xlu0 %v163, 24
    %v171 = vpop.permute.xlu0 %170
    %vm172 = vcmask 195584
    %v173 = vsel %vm172, %v165, %v167
    %v174 = vsel %vm172, %v167, %v169
    %v175 = vsel %vm172, %v169, %v171
    %179 = vst [vmem:[#allocation4] sm:$0xc0] %v173
    %180 = vst [vmem:[#allocation4 + $0x8] sm:$0xc0] %v174
    %vm181 = vcmask 359430
    %182 = vst.msk [vmem:[#allocation4 + $0x10] sm:$0xc0] %vm181, %v175
    %v183 = vld [vmem:[%s0 + $0x6] sm:$0xff]
    %185 = vst [vmem:[#allocation1] ss:$4 sm:$0xff] %v183
    %v186 = vld.sshfl [vmem:[#allocation1] sm:$0xff pattern:$0x73625140]
    %v187 = vld.sshfl [vmem:[#allocation1 + $0x8] sm:$0xff pattern:$0x73625140]
    %v188 = vld.sshfl [vmem:[#allocation1 + $0x10] sm:$0xff pattern:$0x73625140]
    %v189 = vld.sshfl [vmem:[#allocation1 + $0x18] sm:$0xff pattern:$0x73625140]
    %190 = vrot.lane.b32.xlu0 %v186, 32
    %v191 = vpop.permute.xlu0 %190
    %192 = vrot.lane.b32.xlu0 %v187, 32
    %v193 = vpop.permute.xlu0 %192
    %194 = vrot.lane.b32.xlu0 %v188, 32
    %v195 = vpop.permute.xlu0 %194
    %196 = vrot.lane.b32.xlu0 %v189, 32
    %v197 = vpop.permute.xlu0 %196
    %vm198 = vcmask 261120
    %v199 = vsel %vm198, %v191, %v193
    %v200 = vsel %vm198, %v193, %v195
    %v201 = vsel %vm198, %v195, %v197
    %205 = vst [vmem:[#allocation4 + $0x18] sm:$0x3] %v199
    %206 = vst [vmem:[#allocation4 + $0x20] sm:$0x3] %v200
    %207 = vst.msk [vmem:[#allocation4 + $0x28] sm:$0x3] %vm100, %v201
    %v208 = vld [vmem:[%s0 + $0x8] sm:$0xff]
    %s210 = scalar_lea.vmem [#allocation1], 1
    %211 = vst [vmem:[%s210] ss:$4 sm:$0xff] %v208
    %v212 = vld.sshfl [vmem:[#allocation1] sm:$0xff pattern:$0x73625140]
    %v213 = vld.sshfl [vmem:[#allocation1 + $0x8] sm:$0xff pattern:$0x73625140]
    %v214 = vld.sshfl [vmem:[#allocation1 + $0x10] sm:$0xff pattern:$0x73625140]
    %v215 = vld.sshfl [vmem:[#allocation1 + $0x18] sm:$0xff pattern:$0x73625140]
    %216 = vrot.lane.b32.xlu0 %v212, 40
    %v217 = vpop.permute.xlu0 %216
    %218 = vrot.lane.b32.xlu0 %v213, 40
    %v219 = vpop.permute.xlu0 %218
    %220 = vrot.lane.b32.xlu0 %v214, 40
    %v221 = vpop.permute.xlu0 %220
    %222 = vrot.lane.b32.xlu0 %v215, 40
    %v223 = vpop.permute.xlu0 %222
    %vm224 = vcmask 326656
    %v225 = vsel %vm224, %v217, %v219
    %v226 = vsel %vm224, %v219, %v221
    %v227 = vsel %vm224, %v221, %v223
    %231 = vst [vmem:[#allocation4 + $0x18] sm:$0xc] %v225
    %232 = vst [vmem:[#allocation4 + $0x20] sm:$0xc] %v226
    %233 = vst.msk [vmem:[#allocation4 + $0x28] sm:$0xc] %vm127, %v227
    %v234 = vld [vmem:[%s0 + $0xa] sm:$0x3f]
    %s236 = scalar_lea.vmem [#allocation1], 2
    %237 = vst [vmem:[%s236] ss:$4 sm:$0xff] %v234
    %v238 = vld.sshfl [vmem:[#allocation1] sm:$0xff pattern:$0x73625140]
    %v239 = vld.sshfl [vmem:[#allocation1 + $0x8] sm:$0xff pattern:$0x73625140]
    %v240 = vld.sshfl [vmem:[#allocation1 + $0x10] sm:$0xff pattern:$0x73625140]
    %241 = vrot.lane.b32.xlu0 %v238, 48
    %v242 = vpop.permute.xlu0 %241
    %243 = vrot.lane.b32.xlu0 %v239, 48
    %v244 = vpop.permute.xlu0 %243
    %245 = vrot.lane.b32.xlu0 %v240, 48
    %v246 = vpop.permute.xlu0 %245
    %vm247 = vcmask 392192
    %v248 = vsel %vm247, %v242, %v244
    %v249 = vsel %vm247, %v244, %v246
    %253 = vst [vmem:[#allocation4 + $0x18] sm:$0x30] %v248
    %254 = vst [vmem:[#allocation4 + $0x20] sm:$0x30] %v249
    %255 = vst.msk [vmem:[#allocation4 + $0x28] sm:$0x30] %vm154, %v246
    %v256 = vld [vmem:[%s0 + $0xc] sm:$0x3f]
    %s258 = scalar_lea.vmem [#allocation1], 3
    %259 = vst [vmem:[%s258] ss:$4 sm:$0xff] %v256
    %v260 = vld.sshfl [vmem:[#allocation1] sm:$0xff pattern:$0x73625140]
    %v261 = vld.sshfl [vmem:[#allocation1 + $0x8] sm:$0xff pattern:$0x73625140]
    %v262 = vld.sshfl [vmem:[#allocation1 + $0x10] sm:$0xff pattern:$0x73625140]
    %263 = vrot.lane.b32.xlu0 %v260, 56
    %v264 = vpop.permute.xlu0 %263
    %265 = vrot.lane.b32.xlu0 %v261, 56
    %v266 = vpop.permute.xlu0 %265
    %267 = vrot.lane.b32.xlu0 %v262, 56
    %v268 = vpop.permute.xlu0 %267
    %vm269 = vcmask 457728
    %v270 = vsel %vm269, %v264, %v266
    %v271 = vsel %vm269, %v266, %v268
    %275 = vst [vmem:[#allocation4 + $0x18] sm:$0xc0] %v270
    %276 = vst [vmem:[#allocation4 + $0x20] sm:$0xc0] %v271
    %277 = vst.msk [vmem:[#allocation4 + $0x28] sm:$0xc0] %vm181, %v268
    %v278 = vld [vmem:[#allocation4] sm:$0xff]
    %v279 = vld [vmem:[#allocation4 + $0x8] sm:$0xff]
    %v280 = vld [vmem:[#allocation4 + $0x10] sm:$0xff]
    %v281 = vld [vmem:[#allocation4 + $0x18] sm:$0xff]
    %v282 = vld [vmem:[#allocation4 + $0x20] sm:$0xff]
    %v283 = vld [vmem:[#allocation4 + $0x28] sm:$0xff]
    %v284 = vld [vmem:[#allocation11] sm:$0xff]
    %v285 = vld [vmem:[#allocation11 + $0x8] sm:$0xff]
    %v286 = vld [vmem:[#allocation11 + $0x10] sm:$0xff]
    %v287 = vld [vmem:[#allocation11 + $0x18] sm:$0xff]
    %v288 = vld [vmem:[#allocation11 + $0x20] sm:$0xff]
    %v289 = vld [vmem:[#allocation11 + $0x28] sm:$0xff]
    %v290 = vld [vmem:[#allocation11 + $0x30] sm:$0xff]
    %v291 = vld [vmem:[#allocation11 + $0x38] sm:$0xff]
    %v292 = vld [vmem:[#allocation11 + $0x40] sm:$0xff]
    %v293 = vld [vmem:[#allocation11 + $0x48] sm:$0xff]
    %v294 = vld [vmem:[#allocation11 + $0x50] sm:$0xff]
    %v295 = vld [vmem:[#allocation11 + $0x58] sm:$0xff]
    %v296 = vld [vmem:[#allocation11 + $0x60] sm:$0xff]
    %v297 = vld [vmem:[#allocation11 + $0x68] sm:$0xff]
    %v298 = vld [vmem:[#allocation11 + $0x70] sm:$0xff]
    %v299 = vld [vmem:[#allocation11 + $0x78] sm:$0xff]
    %v300 = vld [vmem:[#allocation11 + $0x80] sm:$0xff]
    %v301 = vld [vmem:[#allocation11 + $0x88] sm:$0xff]
    %v302 = vld [vmem:[#allocation11 + $0x90] sm:$0xff]
    %v303 = vld [vmem:[#allocation11 + $0x98] sm:$0xff]
    %v304 = vld [vmem:[#allocation11 + $0xa0] sm:$0xff]
    %v305 = vld [vmem:[#allocation11 + $0xa8] sm:$0xff]
    %v306 = vld [vmem:[#allocation11 + $0xb0] sm:$0xff]
    %v307 = vld [vmem:[#allocation11 + $0xb8] sm:$0xff]
    %v308 = vld [vmem:[#allocation11 + $0xc0] sm:$0xff]
    %v309 = vld [vmem:[#allocation11 + $0xc8] sm:$0xff]
    %v310 = vld [vmem:[#allocation11 + $0xd0] sm:$0xff]
    %v311 = vld [vmem:[#allocation11 + $0xd8] sm:$0xff]
    %v312 = vld [vmem:[#allocation11 + $0xe0] sm:$0xff]
    %v313 = vld [vmem:[#allocation11 + $0xe8] sm:$0xff]
    %v314 = vld [vmem:[#allocation11 + $0xf0] sm:$0xff]
    %v315 = vld [vmem:[#allocation11 + $0xf8] sm:$0xff]
    %v316 = vld [vmem:[#allocation11 + $0x100] sm:$0xff]
    %v317 = vld [vmem:[#allocation11 + $0x108] sm:$0xff]
    %v318 = vld [vmem:[#allocation11 + $0x110] sm:$0xff]
    %v319 = vld [vmem:[#allocation11 + $0x118] sm:$0xff]
    %v320 = vld [vmem:[#allocation11 + $0x120] sm:$0xff]
    %v321 = vld [vmem:[#allocation11 + $0x128] sm:$0xff]
    %v322 = vld [vmem:[#allocation11 + $0x130] sm:$0xff]
    %v323 = vld [vmem:[#allocation11 + $0x138] sm:$0xff]
    %v324 = vld [vmem:[#allocation11 + $0x140] sm:$0xff]
    %v325 = vld [vmem:[#allocation11 + $0x148] sm:$0xff]
    %v326 = vld [vmem:[#allocation11 + $0x150] sm:$0xff]
    %v327 = vld [vmem:[#allocation11 + $0x158] sm:$0xff]
    %v328 = vld [vmem:[#allocation11 + $0x160] sm:$0xff]
    %v329 = vld [vmem:[#allocation11 + $0x168] sm:$0xff]
    %v330 = vld [vmem:[#allocation11 + $0x170] sm:$0xff]
    %v331 = vld [vmem:[#allocation11 + $0x178] sm:$0xff]
    %v332 = vld [vmem:[#allocation11 + $0x180] sm:$0xff]
    %v333 = vld [vmem:[#allocation11 + $0x188] sm:$0xff]
    %v334 = vld [vmem:[#allocation11 + $0x190] sm:$0xff]
    %v335 = vld [vmem:[#allocation11 + $0x198] sm:$0xff]
    %v336 = vld [vmem:[#allocation11 + $0x1a0] sm:$0xff]
    %v337 = vld [vmem:[#allocation11 + $0x1a8] sm:$0xff]
    %v338 = vld [vmem:[#allocation11 + $0x1b0] sm:$0xff]
    %v339 = vld [vmem:[#allocation11 + $0x1b8] sm:$0xff]
    %v340 = vld [vmem:[#allocation11 + $0x1c0] sm:$0xff]
    %v341 = vld [vmem:[#allocation11 + $0x1c8] sm:$0xff]
    %v342 = vld [vmem:[#allocation11 + $0x1d0] sm:$0xff]
    %v343 = vld [vmem:[#allocation11 + $0x1d8] sm:$0xff]
    %v344 = vld [vmem:[#allocation11 + $0x1e0] sm:$0xff]
    %v345 = vld [vmem:[#allocation11 + $0x1e8] sm:$0xff]
    %v346 = vld [vmem:[#allocation11 + $0x1f0] sm:$0xff]
    %v347 = vld [vmem:[#allocation11 + $0x1f8] sm:$0xff]
    %v348 = vld [vmem:[#allocation11 + $0x200] sm:$0xff]
    %v349 = vld [vmem:[#allocation11 + $0x208] sm:$0xff]
    %v350 = vld [vmem:[#allocation11 + $0x210] sm:$0xff]
    %v351 = vld [vmem:[#allocation11 + $0x218] sm:$0xff]
    %v352 = vld [vmem:[#allocation11 + $0x220] sm:$0xff]
    %v353 = vld [vmem:[#allocation11 + $0x228] sm:$0xff]
    %v354 = vld [vmem:[#allocation11 + $0x230] sm:$0xff]
    %v355 = vld [vmem:[#allocation11 + $0x238] sm:$0xff]
    %v356 = vld [vmem:[#allocation11 + $0x240] sm:$0xff]
    %v357 = vld [vmem:[#allocation11 + $0x248] sm:$0xff]
    %v358 = vld [vmem:[#allocation11 + $0x250] sm:$0xff]
    %v359 = vld [vmem:[#allocation11 + $0x258] sm:$0xff]
    %v360 = vld [vmem:[#allocation11 + $0x260] sm:$0xff]
    %v361 = vld [vmem:[#allocation11 + $0x268] sm:$0xff]
    %v362 = vld [vmem:[#allocation11 + $0x270] sm:$0xff]
    %v363 = vld [vmem:[#allocation11 + $0x278] sm:$0xff]
    %v364 = vld [vmem:[#allocation11 + $0x280] sm:$0xff]
    %v365 = vld [vmem:[#allocation11 + $0x288] sm:$0xff]
    %v366 = vld [vmem:[#allocation11 + $0x290] sm:$0xff]
    %v367 = vld [vmem:[#allocation11 + $0x298] sm:$0xff]
    %v368 = vld [vmem:[#allocation11 + $0x2a0] sm:$0xff]
    %v369 = vld [vmem:[#allocation11 + $0x2a8] sm:$0xff]
    %v370 = vld [vmem:[#allocation11 + $0x2b0] sm:$0xff]
    %v371 = vld [vmem:[#allocation11 + $0x2b8] sm:$0xff]
    %v372 = vld [vmem:[#allocation11 + $0x2c0] sm:$0xff]
    %v373 = vld [vmem:[#allocation11 + $0x2c8] sm:$0xff]
    %v374 = vld [vmem:[#allocation11 + $0x2d0] sm:$0xff]
    %v375 = vld [vmem:[#allocation11 + $0x2d8] sm:$0xff]
    %v376 = vld [vmem:[#allocation11 + $0x2e0] sm:$0xff]
    %v377 = vld [vmem:[#allocation11 + $0x2e8] sm:$0xff]
    %v378 = vld [vmem:[#allocation11 + $0x2f0] sm:$0xff]
    %v379 = vld [vmem:[#allocation11 + $0x2f8] sm:$0xff]
    %v380 = vld [vmem:[%s2] sm:$0x3]
    %v382 = vperm.slane %v380, 0
    %v383 = vperm.slane %v380, 1
    %386 = vmatpush.msra.mxu0 %v314
    %387 = vmatpush.msra.mxu0 %v312
    %388 = vmatpush.msra.mxu0 %v310
    %389 = vmatpush.msra.mxu0 %v308
    %390 = vmatpush.msra.mxu0 %v306
    %391 = vmatpush.msra.mxu0 %v304
    %392 = vmatpush.msra.mxu0 %v302
    %393 = vmatpush.msra.mxu0 %v300
    %394 = vmatpush.msra.mxu0 %v298
    %395 = vmatpush.msra.mxu0 %v296
    %396 = vmatpush.msra.mxu0 %v294
    %397 = vmatpush.msra.mxu0 %v292
    %398 = vmatpush.msra.mxu0 %v290
    %399 = vmatpush.msra.mxu0 %v288
    %400 = vmatpush.msra.mxu0 %v286
    %401 = vmatpush.msra.mxu0 %v284
    %402 = vmatmul.f32.gmra.mxu0 %v278
    %v403 = vpop.f32.mrf.mxu0
    %v404 = vadd.f32 %v382, %v403
    %405 = vmatmul.f32.gmra.mxu0 %v281
    %v406 = vpop.f32.mrf.mxu0
    %v407 = vadd.f32 %v382, %v406
    %408 = vdwg.mxu0
    %409 = vmatpush.msra.mxu0 %v346
    %410 = vmatpush.msra.mxu0 %v344
    %411 = vmatpush.msra.mxu0 %v342
    %412 = vmatpush.msra.mxu0 %v340
    %413 = vmatpush.msra.mxu0 %v338
    %414 = vmatpush.msra.mxu0 %v336
    %415 = vmatpush.msra.mxu0 %v334
    %416 = vmatpush.msra.mxu0 %v332
    %417 = vmatpush.msra.mxu0 %v330
    %418 = vmatpush.msra.mxu0 %v328
    %419 = vmatpush.msra.mxu0 %v326
    %420 = vmatpush.msra.mxu0 %v324
    %421 = vmatpush.msra.mxu0 %v322
    %422 = vmatpush.msra.mxu0 %v320
    %423 = vmatpush.msra.mxu0 %v318
    %424 = vmatpush.msra.mxu0 %v316
    %425 = vmatmul.f32.gmra.mxu0 %v279
    %v426 = vpop.f32.mrf.mxu0
    %v427 = vadd.f32 %v404, %v426
    %428 = vmatmul.f32.gmra.mxu0 %v282
    %v429 = vpop.f32.mrf.mxu0
    %v430 = vadd.f32 %v407, %v429
    %431 = vdwg.mxu0
    %432 = vmatpush.msra.mxu0 %v378
    %433 = vmatpush.msra.mxu0 %v376
    %434 = vmatpush.msra.mxu0 %v374
    %435 = vmatpush.msra.mxu0 %v372
    %436 = vmatpush.msra.mxu0 %v370
    %437 = vmatpush.msra.mxu0 %v368
    %438 = vmatpush.msra.mxu0 %v366
    %439 = vmatpush.msra.mxu0 %v364
    %440 = vmatpush.msra.mxu0 %v362
    %441 = vmatpush.msra.mxu0 %v360
    %442 = vmatpush.msra.mxu0 %v358
    %443 = vmatpush.msra.mxu0 %v356
    %444 = vmatpush.msra.mxu0 %v354
    %445 = vmatpush.msra.mxu0 %v352
    %446 = vmatpush.msra.mxu0 %v350
    %447 = vmatpush.msra.mxu0 %v348
    %448 = vmatmul.f32.gmra.mxu0 %v280
    %v449 = vpop.f32.mrf.mxu0
    %v450 = vadd.f32 %v427, %v449
    %451 = vmatmul.f32.gmra.mxu0 %v283
    %v452 = vpop.f32.mrf.mxu0
    %v453 = vadd.f32 %v430, %v452
    %454 = vdwg.mxu0
    %455 = vmatpush.msra.mxu0 %v315
    %456 = vmatpush.msra.mxu0 %v313
    %457 = vmatpush.msra.mxu0 %v311
    %458 = vmatpush.msra.mxu0 %v309
    %459 = vmatpush.msra.mxu0 %v307
    %460 = vmatpush.msra.mxu0 %v305
    %461 = vmatpush.msra.mxu0 %v303
    %462 = vmatpush.msra.mxu0 %v301
    %463 = vmatpush.msra.mxu0 %v299
    %464 = vmatpush.msra.mxu0 %v297
    %465 = vmatpush.msra.mxu0 %v295
    %466 = vmatpush.msra.mxu0 %v293
    %467 = vmatpush.msra.mxu0 %v291
    %468 = vmatpush.msra.mxu0 %v289
    %469 = vmatpush.msra.mxu0 %v287
    %470 = vmatpush.msra.mxu0 %v285
    %471 = vmatmul.f32.gmra.mxu0 %v278
    %v472 = vpop.f32.mrf.mxu0
    %v473 = vadd.f32 %v383, %v472
    %474 = vmatmul.f32.gmra.mxu0 %v281
    %v475 = vpop.f32.mrf.mxu0
    %v476 = vadd.f32 %v383, %v475
    %477 = vdwg.mxu0
    %478 = vmatpush.msra.mxu0 %v347
    %479 = vmatpush.msra.mxu0 %v345
    %480 = vmatpush.msra.mxu0 %v343
    %481 = vmatpush.msra.mxu0 %v341
    %482 = vmatpush.msra.mxu0 %v339
    %483 = vmatpush.msra.mxu0 %v337
    %484 = vmatpush.msra.mxu0 %v335
    %485 = vmatpush.msra.mxu0 %v333
    %486 = vmatpush.msra.mxu0 %v331
    %487 = vmatpush.msra.mxu0 %v329
    %488 = vmatpush.msra.mxu0 %v327
    %489 = vmatpush.msra.mxu0 %v325
    %490 = vmatpush.msra.mxu0 %v323
    %491 = vmatpush.msra.mxu0 %v321
    %492 = vmatpush.msra.mxu0 %v319
    %493 = vmatpush.msra.mxu0 %v317
    %494 = vmatmul.f32.gmra.mxu0 %v279
    %v495 = vpop.f32.mrf.mxu0
    %v496 = vadd.f32 %v473, %v495
    %497 = vmatmul.f32.gmra.mxu0 %v282
    %v498 = vpop.f32.mrf.mxu0
    %v499 = vadd.f32 %v476, %v498
    %500 = vdwg.mxu0
    %501 = vmatpush.msra.mxu0 %v379
    %502 = vmatpush.msra.mxu0 %v377
    %503 = vmatpush.msra.mxu0 %v375
    %504 = vmatpush.msra.mxu0 %v373
    %505 = vmatpush.msra.mxu0 %v371
    %506 = vmatpush.msra.mxu0 %v369
    %507 = vmatpush.msra.mxu0 %v367
    %508 = vmatpush.msra.mxu0 %v365
    %509 = vmatpush.msra.mxu0 %v363
    %510 = vmatpush.msra.mxu0 %v361
    %511 = vmatpush.msra.mxu0 %v359
    %512 = vmatpush.msra.mxu0 %v357
    %513 = vmatpush.msra.mxu0 %v355
    %514 = vmatpush.msra.mxu0 %v353
    %515 = vmatpush.msra.mxu0 %v351
    %516 = vmatpush.msra.mxu0 %v349
    %517 = vmatmul.f32.gmra.mxu0 %v280
    %v518 = vpop.f32.mrf.mxu0
    %v519 = vadd.f32 %v496, %v518
    %520 = vmatmul.f32.gmra.mxu0 %v283
    %v521 = vpop.f32.mrf.mxu0
    %v522 = vadd.f32 %v499, %v521
    %523 = vdwg.mxu0
    %v524 = vmax.f32 %v450, 0.0
    %v525 = vmax.f32 %v519, 0.0
    %v526 = vmax.f32 %v453, 0.0
    %v527 = vmax.f32 %v522, 0.0
    %528 = vst [vmem:[#allocation2] sm:$0xff] 0.0
    %529 = vst [vmem:[#allocation2 + $0x8] sm:$0xff] 0.0
    %530 = vst [vmem:[#allocation2 + $0x10] sm:$0xff] 0.0
    %531 = vst [vmem:[#allocation2 + $0x18] sm:$0xff] 0.0
    %532 = vst [vmem:[#allocation2 + $0x20] sm:$0xff] 0.0
    %533 = vst [vmem:[#allocation2 + $0x28] sm:$0xff] 0.0
    %534 = vst [vmem:[#allocation2 + $0x30] sm:$0xff] 0.0
    %535 = vst [vmem:[#allocation2 + $0x38] sm:$0xff] 0.0
    %536 = vst [vmem:[#allocation2 + $0x40] sm:$0xff] 0.0
    %v539 = vrot.slane %v525, 6
    %vm540 = vcmask 1041408
    %v541 = vsel %vm540, %v524, %v539
    %542 = vrot.lane.b32.xlu0 %v541, 64
    %v543 = vpop.permute.xlu0 %542
    %v544 = vrot.slane %v543, 6
    %vm545 = vcmask 523264
    %v546 = vsel %vm545, %v544, %v543
    %vm548 = vcmask 1041920
    %vm549 = vcmask 1043458
    %vm550 = vmor %vm549, %vm548
    %vm551 = vcmask 521220
    %vm552 = vmor %vm551, %vm550
    %553 = vst.msk [vmem:[#allocation2 + $0xc] sm:$0x3f] %vm552, %v546
    %554 = vst.sshfl [vmem:[#allocation1] sm:$0xff pattern:$0x73625140] %v524
    %555 = vst.sshfl [vmem:[#allocation1 + $0x8] sm:$0xff pattern:$0x73625140] %v525
    %s556 = scalar_lea.vmem [#allocation1], 1
    %v557 = vld [vmem:[%s556] ss:$4 sm:$0xff]
    %558 = vrot.lane.b32.xlu0 %v557, 64
    %v559 = vpop.permute.xlu0 %558
    %v560 = vrot.slane %v559, 6
    %v561 = vsel %vm545, %v560, %v559
    %563 = vst.msk [vmem:[#allocation2 + $0x12] sm:$0x3f] %vm552, %v561
    %564 = vst.sshfl [vmem:[#allocation1] sm:$0xff pattern:$0x73625140] %v524
    %565 = vst.sshfl [vmem:[#allocation1 + $0x8] sm:$0xff pattern:$0x73625140] %v525
    %s566 = scalar_lea.vmem [#allocation1], 2
    %v567 = vld [vmem:[%s566] ss:$4 sm:$0xff]
    %568 = vrot.lane.b32.xlu0 %v567, 64
    %v569 = vpop.permute.xlu0 %568
    %v570 = vrot.slane %v569, 6
    %v571 = vsel %vm545, %v570, %v569
    %573 = vst.msk [vmem:[#allocation2 + $0x18] sm:$0x3f] %vm552, %v571
    %574 = vst.sshfl [vmem:[#allocation1] sm:$0xff pattern:$0x73625140] %v524
    %575 = vst.sshfl [vmem:[#allocation1 + $0x8] sm:$0xff pattern:$0x73625140] %v525
    %s576 = scalar_lea.vmem [#allocation1], 3
    %v577 = vld [vmem:[%s576] ss:$4 sm:$0xff]
    %578 = vrot.lane.b32.xlu0 %v577, 64
    %v579 = vpop.permute.xlu0 %578
    %v580 = vrot.slane %v579, 6
    %v581 = vsel %vm545, %v580, %v579
    %583 = vst.msk [vmem:[#allocation2 + $0x1e] sm:$0x3f] %vm552, %v581
    %v586 = vrot.slane %v527, 6
    %v587 = vsel %vm540, %v526, %v586
    %588 = vrot.lane.b32.xlu0 %v587, 64
    %v589 = vpop.permute.xlu0 %588
    %v590 = vrot.slane %v589, 6
    %v591 = vsel %vm545, %v590, %v589
    %593 = vst.msk [vmem:[#allocation2 + $0x24] sm:$0x3f] %vm552, %v591
    %594 = vst.sshfl [vmem:[#allocation1] sm:$0xff pattern:$0x73625140] %v526
    %595 = vst.sshfl [vmem:[#allocation1 + $0x8] sm:$0xff pattern:$0x73625140] %v527
    %s596 = scalar_lea.vmem [#allocation1], 1
    %v597 = vld [vmem:[%s596] ss:$4 sm:$0xff]
    %598 = vrot.lane.b32.xlu0 %v597, 64
    %v599 = vpop.permute.xlu0 %598
    %v600 = vrot.slane %v599, 6
    %v601 = vsel %vm545, %v600, %v599
    %603 = vst.msk [vmem:[#allocation2 + $0x2a] sm:$0x3f] %vm552, %v601
    %604 = vst.sshfl [vmem:[#allocation1] sm:$0xff pattern:$0x73625140] %v526
    %605 = vst.sshfl [vmem:[#allocation1 + $0x8] sm:$0xff pattern:$0x73625140] %v527
    %s606 = scalar_lea.vmem [#allocation1], 2
    %v607 = vld [vmem:[%s606] ss:$4 sm:$0xff]
    %608 = vrot.lane.b32.xlu0 %v607, 64
    %v609 = vpop.permute.xlu0 %608
    %v610 = vrot.slane %v609, 6
    %v611 = vsel %vm545, %v610, %v609
    %613 = vst.msk [vmem:[#allocation2 + $0x30] sm:$0x3f] %vm552, %v611
    %614 = vst.sshfl [vmem:[#allocation1] sm:$0xff pattern:$0x73625140] %v526
    %615 = vst.sshfl [vmem:[#allocation1 + $0x8] sm:$0xff pattern:$0x73625140] %v527
    %s616 = scalar_lea.vmem [#allocation1], 3
    %v617 = vld [vmem:[%s616] ss:$4 sm:$0xff]
    %618 = vrot.lane.b32.xlu0 %v617, 64
    %v619 = vpop.permute.xlu0 %618
    %v620 = vrot.slane %v619, 6
    %v621 = vsel %vm545, %v620, %v619
    %623 = vst.msk [vmem:[#allocation2 + $0x36] sm:$0x3f] %vm552, %v621
    %v624 = vld [vmem:[#allocation2] sm:$0xff]
    %v625 = vld [vmem:[#allocation2 + $0x8] sm:$0xff]
    %v626 = vld [vmem:[#allocation2 + $0x10] sm:$0xff]
    %v627 = vld [vmem:[#allocation2 + $0x18] sm:$0x3f]
    %632 = vst [vmem:[#allocation1] ss:$4 sm:$0xff] %v624
    %s633 = scalar_lea.vmem [#allocation1], 32
    %634 = vst [vmem:[%s633] ss:$4 sm:$0xff] %v625
    %v635 = vld.sshfl [vmem:[#allocation1] sm:$0xff pattern:$0x73625140]
    %v636 = vld.sshfl [vmem:[#allocation1 + $0x8] sm:$0xff pattern:$0x73625140]
    %v637 = vld.sshfl [vmem:[#allocation1 + $0x10] sm:$0xff pattern:$0x73625140]
    %v638 = vld.sshfl [vmem:[#allocation1 + $0x18] sm:$0xff pattern:$0x73625140]
    %v639 = vld.sshfl [vmem:[#allocation1 + $0x20] sm:$0xff pattern:$0x73625140]
    %v640 = vld.sshfl [vmem:[#allocation1 + $0x28] sm:$0xff pattern:$0x73625140]
    %v641 = vld.sshfl [vmem:[#allocation1 + $0x30] sm:$0xff pattern:$0x73625140]
    %v642 = vld.sshfl [vmem:[#allocation1 + $0x38] sm:$0xff pattern:$0x73625140]
    %643 = vst [vmem:[#allocation1] ss:$4 sm:$0xff] %v626
    %644 = vst [vmem:[%s633] ss:$4 sm:$0xff] %v627
    %v645 = vld.sshfl [vmem:[#allocation1] sm:$0xff pattern:$0x73625140]
    %v646 = vld.sshfl [vmem:[#allocation1 + $0x8] sm:$0xff pattern:$0x73625140]
    %v647 = vld.sshfl [vmem:[#allocation1 + $0x10] sm:$0xff pattern:$0x73625140]
    %v648 = vld.sshfl [vmem:[#allocation1 + $0x18] sm:$0xff pattern:$0x73625140]
    %v649 = vld.sshfl [vmem:[#allocation1 + $0x20] sm:$0xff pattern:$0x73625140]
    %v650 = vld.sshfl [vmem:[#allocation1 + $0x28] sm:$0xff pattern:$0x73625140]
    %v651 = vld.sshfl [vmem:[#allocation1 + $0x30] sm:$0xff pattern:$0x73625140]
    %667 = vst [vmem:[#allocation5] sm:$0x3] %v635
    %668 = vst [vmem:[#allocation5 + $0x8] sm:$0x3] %v636
    %669 = vst [vmem:[#allocation5 + $0x10] sm:$0x3] %v637
    %670 = vst [vmem:[#allocation5 + $0x18] sm:$0x3] %v638
    %671 = vst [vmem:[#allocation5 + $0x20] sm:$0x3] %v639
    %672 = vst [vmem:[#allocation5 + $0x28] sm:$0x3] %v640
    %673 = vst [vmem:[#allocation5 + $0x30] sm:$0x3] %v641
    %674 = vst [vmem:[#allocation5 + $0x38] sm:$0x3] %v642
    %675 = vst [vmem:[#allocation5 + $0x40] sm:$0x3] %v645
    %676 = vst [vmem:[#allocation5 + $0x48] sm:$0x3] %v646
    %677 = vst [vmem:[#allocation5 + $0x50] sm:$0x3] %v647
    %678 = vst [vmem:[#allocation5 + $0x58] sm:$0x3] %v648
    %679 = vst [vmem:[#allocation5 + $0x60] sm:$0x3] %v649
    %680 = vst [vmem:[#allocation5 + $0x68] sm:$0x3] %v650
    %681 = vst [vmem:[#allocation5 + $0x70] sm:$0x3] %v651
    %v682 = vld [vmem:[#allocation2 + $0xc] sm:$0xff]
    %v683 = vld [vmem:[#allocation2 + $0x14] sm:$0xff]
    %v684 = vld [vmem:[#allocation2 + $0x1c] sm:$0xff]
    %v685 = vld [vmem:[#allocation2 + $0x24] sm:$0x3f]
    %s690 = scalar_lea.vmem [#allocation1], 1
    %691 = vst [vmem:[%s690] ss:$4 sm:$0xff] %v682
    %s692 = scalar_lea.vmem [#allocation1], 33
    %693 = vst [vmem:[%s692] ss:$4 sm:$0xff] %v683
    %v694 = vld.sshfl [vmem:[#allocation1] sm:$0xff pattern:$0x73625140]
    %v695 = vld.sshfl [vmem:[#allocation1 + $0x8] sm:$0xff pattern:$0x73625140]
    %v696 = vld.sshfl [vmem:[#allocation1 + $0x10] sm:$0xff pattern:$0x73625140]
    %v697 = vld.sshfl [vmem:[#allocation1 + $0x18] sm:$0xff pattern:$0x73625140]
    %v698 = vld.sshfl [vmem:[#allocation1 + $0x20] sm:$0xff pattern:$0x73625140]
    %v699 = vld.sshfl [vmem:[#allocation1 + $0x28] sm:$0xff pattern:$0x73625140]
    %v700 = vld.sshfl [vmem:[#allocation1 + $0x30] sm:$0xff pattern:$0x73625140]
    %v701 = vld.sshfl [vmem:[#allocation1 + $0x38] sm:$0xff pattern:$0x73625140]
    %702 = vst [vmem:[%s690] ss:$4 sm:$0xff] %v684
    %703 = vst [vmem:[%s692] ss:$4 sm:$0xff] %v685
    %v704 = vld.sshfl [vmem:[#allocation1] sm:$0xff pattern:$0x73625140]
    %v705 = vld.sshfl [vmem:[#allocation1 + $0x8] sm:$0xff pattern:$0x73625140]
    %v706 = vld.sshfl [vmem:[#allocation1 + $0x10] sm:$0xff pattern:$0x73625140]
    %v707 = vld.sshfl [vmem:[#allocation1 + $0x18] sm:$0xff pattern:$0x73625140]
    %v708 = vld.sshfl [vmem:[#allocation1 + $0x20] sm:$0xff pattern:$0x73625140]
    %v709 = vld.sshfl [vmem:[#allocation1 + $0x28] sm:$0xff pattern:$0x73625140]
    %v710 = vld.sshfl [vmem:[#allocation1 + $0x30] sm:$0xff pattern:$0x73625140]
    %726 = vst [vmem:[#allocation5] sm:$0xc] %v694
    %727 = vst [vmem:[#allocation5 + $0x8] sm:$0xc] %v695
    %728 = vst [vmem:[#allocation5 + $0x10] sm:$0xc] %v696
    %729 = vst [vmem:[#allocation5 + $0x18] sm:$0xc] %v697
    %730 = vst [vmem:[#allocation5 + $0x20] sm:$0xc] %v698
    %731 = vst [vmem:[#allocation5 + $0x28] sm:$0xc] %v699
    %732 = vst [vmem:[#allocation5 + $0x30] sm:$0xc] %v700
    %733 = vst [vmem:[#allocation5 + $0x38] sm:$0xc] %v701
    %734 = vst [vmem:[#allocation5 + $0x40] sm:$0xc] %v704
    %735 = vst [vmem:[#allocation5 + $0x48] sm:$0xc] %v705
    %736 = vst [vmem:[#allocation5 + $0x50] sm:$0xc] %v706
    %737 = vst [vmem:[#allocation5 + $0x58] sm:$0xc] %v707
    %738 = vst [vmem:[#allocation5 + $0x60] sm:$0xc] %v708
    %739 = vst [vmem:[#allocation5 + $0x68] sm:$0xc] %v709
    %740 = vst [vmem:[#allocation5 + $0x70] sm:$0xc] %v710
    %v741 = vld [vmem:[#allocation2 + $0x18] sm:$0xff]
    %v742 = vld [vmem:[#allocation2 + $0x20] sm:$0xff]
    %v743 = vld [vmem:[#allocation2 + $0x28] sm:$0xff]
    %v744 = vld [vmem:[#allocation2 + $0x30] sm:$0x3f]
    %s749 = scalar_lea.vmem [#allocation1], 2
    %750 = vst [vmem:[%s749] ss:$4 sm:$0xff] %v741
    %s751 = scalar_lea.vmem [#allocation1], 34
    %752 = vst [vmem:[%s751] ss:$4 sm:$0xff] %v742
    %v753 = vld.sshfl [vmem:[#allocation1] sm:$0xff pattern:$0x73625140]
    %v754 = vld.sshfl [vmem:[#allocation1 + $0x8] sm:$0xff pattern:$0x73625140]
    %v755 = vld.sshfl [vmem:[#allocation1 + $0x10] sm:$0xff pattern:$0x73625140]
    %v756 = vld.sshfl [vmem:[#allocation1 + $0x18] sm:$0xff pattern:$0x73625140]
    %v757 = vld.sshfl [vmem:[#allocation1 + $0x20] sm:$0xff pattern:$0x73625140]
    %v758 = vld.sshfl [vmem:[#allocation1 + $0x28] sm:$0xff pattern:$0x73625140]
    %v759 = vld.sshfl [vmem:[#allocation1 + $0x30] sm:$0xff pattern:$0x73625140]
    %v760 = vld.sshfl [vmem:[#allocation1 + $0x38] sm:$0xff pattern:$0x73625140]
    %761 = vst [vmem:[%s749] ss:$4 sm:$0xff] %v743
    %762 = vst [vmem:[%s751] ss:$4 sm:$0xff] %v744
    %v763 = vld.sshfl [vmem:[#allocation1] sm:$0xff pattern:$0x73625140]
    %v764 = vld.sshfl [vmem:[#allocation1 + $0x8] sm:$0xff pattern:$0x73625140]
    %v765 = vld.sshfl [vmem:[#allocation1 + $0x10] sm:$0xff pattern:$0x73625140]
    %v766 = vld.sshfl [vmem:[#allocation1 + $0x18] sm:$0xff pattern:$0x73625140]
    %v767 = vld.sshfl [vmem:[#allocation1 + $0x20] sm:$0xff pattern:$0x73625140]
    %v768 = vld.sshfl [vmem:[#allocation1 + $0x28] sm:$0xff pattern:$0x73625140]
    %v769 = vld.sshfl [vmem:[#allocation1 + $0x30] sm:$0xff pattern:$0x73625140]
    %785 = vst [vmem:[#allocation5] sm:$0x30] %v753
    %786 = vst [vmem:[#allocation5 + $0x8] sm:$0x30] %v754
    %787 = vst [vmem:[#allocation5 + $0x10] sm:$0x30] %v755
    %788 = vst [vmem:[#allocation5 + $0x18] sm:$0x30] %v756
    %789 = vst [vmem:[#allocation5 + $0x20] sm:$0x30] %v757
    %790 = vst [vmem:[#allocation5 + $0x28] sm:$0x30] %v758
    %791 = vst [vmem:[#allocation5 + $0x30] sm:$0x30] %v759
    %792 = vst [vmem:[#allocation5 + $0x38] sm:$0x30] %v760
    %793 = vst [vmem:[#allocation5 + $0x40] sm:$0x30] %v763
    %794 = vst [vmem:[#allocation5 + $0x48] sm:$0x30] %v764
    %795 = vst [vmem:[#allocation5 + $0x50] sm:$0x30] %v765
    %796 = vst [vmem:[#allocation5 + $0x58] sm:$0x30] %v766
    %797 = vst [vmem:[#allocation5 + $0x60] sm:$0x30] %v767
    %798 = vst [vmem:[#allocation5 + $0x68] sm:$0x30] %v768
    %799 = vst [vmem:[#allocation5 + $0x70] sm:$0x30] %v769
    %v800 = vld [vmem:[#allocation2 + $0x24] sm:$0xff]
    %v801 = vld [vmem:[#allocation2 + $0x2c] sm:$0xff]
    %v802 = vld [vmem:[#allocation2 + $0x34] sm:$0xff]
    %v803 = vld [vmem:[#allocation2 + $0x3c] sm:$0x3f]
    %s808 = scalar_lea.vmem [#allocation1], 3
    %809 = vst [vmem:[%s808] ss:$4 sm:$0xff] %v800
    %s810 = scalar_lea.vmem [#allocation1], 35
    %811 = vst [vmem:[%s810] ss:$4 sm:$0xff] %v801
    %v812 = vld.sshfl [vmem:[#allocation1] sm:$0xff pattern:$0x73625140]
    %v813 = vld.sshfl [vmem:[#allocation1 + $0x8] sm:$0xff pattern:$0x73625140]
    %v814 = vld.sshfl [vmem:[#allocation1 + $0x10] sm:$0xff pattern:$0x73625140]
    %v815 = vld.sshfl [vmem:[#allocation1 + $0x18] sm:$0xff pattern:$0x73625140]
    %v816 = vld.sshfl [vmem:[#allocation1 + $0x20] sm:$0xff pattern:$0x73625140]
    %v817 = vld.sshfl [vmem:[#allocation1 + $0x28] sm:$0xff pattern:$0x73625140]
    %v818 = vld.sshfl [vmem:[#allocation1 + $0x30] sm:$0xff pattern:$0x73625140]
    %v819 = vld.sshfl [vmem:[#allocation1 + $0x38] sm:$0xff pattern:$0x73625140]
    %820 = vst [vmem:[%s808] ss:$4 sm:$0xff] %v802
    %821 = vst [vmem:[%s810] ss:$4 sm:$0xff] %v803
    %v822 = vld.sshfl [vmem:[#allocation1] sm:$0xff pattern:$0x73625140]
    %v823 = vld.sshfl [vmem:[#allocation1 + $0x8] sm:$0xff pattern:$0x73625140]
    %v824 = vld.sshfl [vmem:[#allocation1 + $0x10] sm:$0xff pattern:$0x73625140]
    %v825 = vld.sshfl [vmem:[#allocation1 + $0x18] sm:$0xff pattern:$0x73625140]
    %v826 = vld.sshfl [vmem:[#allocation1 + $0x20] sm:$0xff pattern:$0x73625140]
    %v827 = vld.sshfl [vmem:[#allocation1 + $0x28] sm:$0xff pattern:$0x73625140]
    %v828 = vld.sshfl [vmem:[#allocation1 + $0x30] sm:$0xff pattern:$0x73625140]
    %844 = vst [vmem:[#allocation5] sm:$0xc0] %v812
    %845 = vst [vmem:[#allocation5 + $0x8] sm:$0xc0] %v813
    %846 = vst [vmem:[#allocation5 + $0x10] sm:$0xc0] %v814
    %847 = vst [vmem:[#allocation5 + $0x18] sm:$0xc0] %v815
    %848 = vst [vmem:[#allocation5 + $0x20] sm:$0xc0] %v816
    %849 = vst [vmem:[#allocation5 + $0x28] sm:$0xc0] %v817
    %850 = vst [vmem:[#allocation5 + $0x30] sm:$0xc0] %v818
    %851 = vst [vmem:[#allocation5 + $0x38] sm:$0xc0] %v819
    %852 = vst [vmem:[#allocation5 + $0x40] sm:$0xc0] %v822
    %853 = vst [vmem:[#allocation5 + $0x48] sm:$0xc0] %v823
    %854 = vst [vmem:[#allocation5 + $0x50] sm:$0xc0] %v824
    %855 = vst [vmem:[#allocation5 + $0x58] sm:$0xc0] %v825
    %856 = vst [vmem:[#allocation5 + $0x60] sm:$0xc0] %v826
    %857 = vst [vmem:[#allocation5 + $0x68] sm:$0xc0] %v827
    %858 = vst [vmem:[#allocation5 + $0x70] sm:$0xc0] %v828
    %v859 = vld [vmem:[#allocation5] sm:$0xff]
    %v860 = vld [vmem:[#allocation5 + $0x8] sm:$0xff]
    %v861 = vld [vmem:[#allocation5 + $0x10] sm:$0xff]
    %v862 = vld [vmem:[#allocation5 + $0x18] sm:$0xff]
    %v863 = vld [vmem:[#allocation5 + $0x20] sm:$0xff]
    %v864 = vld [vmem:[#allocation5 + $0x28] sm:$0xff]
    %v865 = vld [vmem:[#allocation5 + $0x30] sm:$0xff]
    %v866 = vld [vmem:[#allocation5 + $0x38] sm:$0xff]
    %v867 = vld [vmem:[#allocation5 + $0x40] sm:$0xff]
    %v868 = vld [vmem:[#allocation5 + $0x48] sm:$0xff]
    %v869 = vld [vmem:[#allocation5 + $0x50] sm:$0xff]
    %v870 = vld [vmem:[#allocation5 + $0x58] sm:$0xff]
    %v871 = vld [vmem:[#allocation5 + $0x60] sm:$0xff]
    %v872 = vld [vmem:[#allocation5 + $0x68] sm:$0xff]
    %v873 = vld [vmem:[#allocation5 + $0x70] sm:$0xff]
    %v874 = vld [vmem:[#allocation14] sm:$0xff]
    %v875 = vld [vmem:[#allocation14 + $0x8] sm:$0xff]
    %v876 = vld [vmem:[#allocation14 + $0x10] sm:$0xff]
    %v877 = vld [vmem:[#allocation14 + $0x18] sm:$0xff]
    %v878 = vld [vmem:[#allocation14 + $0x20] sm:$0xff]
    %v879 = vld [vmem:[#allocation14 + $0x28] sm:$0xff]
    %v880 = vld [vmem:[#allocation14 + $0x30] sm:$0xff]
    %v881 = vld [vmem:[#allocation14 + $0x38] sm:$0xff]
    %v882 = vld [vmem:[#allocation14 + $0x40] sm:$0xff]
    %v883 = vld [vmem:[#allocation14 + $0x48] sm:$0xff]
    %v884 = vld [vmem:[#allocation14 + $0x50] sm:$0xff]
    %v885 = vld [vmem:[#allocation14 + $0x58] sm:$0xff]
    %v886 = vld [vmem:[#allocation14 + $0x60] sm:$0xff]
    %v887 = vld [vmem:[#allocation14 + $0x68] sm:$0xff]
    %v888 = vld [vmem:[#allocation14 + $0x70] sm:$0xff]
    %v889 = vld [vmem:[#allocation14 + $0x78] sm:$0xff]
    %v890 = vld [vmem:[#allocation14 + $0x80] sm:$0xff]
    %v891 = vld [vmem:[#allocation14 + $0x88] sm:$0xff]
    %v892 = vld [vmem:[#allocation14 + $0x90] sm:$0xff]
    %v893 = vld [vmem:[#allocation14 + $0x98] sm:$0xff]
    %v894 = vld [vmem:[#allocation14 + $0xa0] sm:$0xff]
    %v895 = vld [vmem:[#allocation14 + $0xa8] sm:$0xff]
    %v896 = vld [vmem:[#allocation14 + $0xb0] sm:$0xff]
    %v897 = vld [vmem:[#allocation14 + $0xb8] sm:$0xff]
    %v898 = vld [vmem:[#allocation14 + $0xc0] sm:$0xff]
    %v899 = vld [vmem:[#allocation14 + $0xc8] sm:$0xff]
    %v900 = vld [vmem:[#allocation14 + $0xd0] sm:$0xff]
    %v901 = vld [vmem:[#allocation14 + $0xd8] sm:$0xff]
    %v902 = vld [vmem:[#allocation14 + $0xe0] sm:$0xff]
    %v903 = vld [vmem:[#allocation14 + $0xe8] sm:$0xff]
    %v904 = vld [vmem:[#allocation14 + $0xf0] sm:$0xff]
    %v905 = vld [vmem:[#allocation14 + $0xf8] sm:$0xff]
    %v906 = vld [vmem:[#allocation14 + $0x100] sm:$0xff]
    %v907 = vld [vmem:[#allocation14 + $0x108] sm:$0xff]
    %v908 = vld [vmem:[#allocation14 + $0x110] sm:$0xff]
    %v909 = vld [vmem:[#allocation14 + $0x118] sm:$0xff]
    %v910 = vld [vmem:[#allocation14 + $0x120] sm:$0xff]
    %v911 = vld [vmem:[#allocation14 + $0x128] sm:$0xff]
    %v912 = vld [vmem:[#allocation14 + $0x130] sm:$0xff]
    %v913 = vld [vmem:[#allocation14 + $0x138] sm:$0xff]
    %v914 = vld [vmem:[#allocation14 + $0x140] sm:$0xff]
    %v915 = vld [vmem:[#allocation14 + $0x148] sm:$0xff]
    %v916 = vld [vmem:[#allocation14 + $0x150] sm:$0xff]
    %v917 = vld [vmem:[#allocation14 + $0x158] sm:$0xff]
    %v918 = vld [vmem:[#allocation14 + $0x160] sm:$0xff]
    %v919 = vld [vmem:[#allocation14 + $0x168] sm:$0xff]
    %v920 = vld [vmem:[#allocation14 + $0x170] sm:$0xff]
    %v921 = vld [vmem:[#allocation14 + $0x178] sm:$0xff]
    %v922 = vld [vmem:[#allocation14 + $0x180] sm:$0xff]
    %v923 = vld [vmem:[#allocation14 + $0x188] sm:$0xff]
    %v924 = vld [vmem:[#allocation14 + $0x190] sm:$0xff]
    %v925 = vld [vmem:[#allocation14 + $0x198] sm:$0xff]
    %v926 = vld [vmem:[#allocation14 + $0x1a0] sm:$0xff]
    %v927 = vld [vmem:[#allocation14 + $0x1a8] sm:$0xff]
    %v928 = vld [vmem:[#allocation14 + $0x1b0] sm:$0xff]
    %v929 = vld [vmem:[#allocation14 + $0x1b8] sm:$0xff]
    %v930 = vld [vmem:[#allocation14 + $0x1c0] sm:$0xff]
    %v931 = vld [vmem:[#allocation14 + $0x1c8] sm:$0xff]
    %v932 = vld [vmem:[#allocation14 + $0x1d0] sm:$0xff]
    %v933 = vld [vmem:[#allocation14 + $0x1d8] sm:$0xff]
    %v934 = vld [vmem:[#allocation14 + $0x1e0] sm:$0xff]
    %v935 = vld [vmem:[#allocation14 + $0x1e8] sm:$0xff]
    %v936 = vld [vmem:[#allocation14 + $0x1f0] sm:$0xff]
    %v937 = vld [vmem:[#allocation14 + $0x1f8] sm:$0xff]
    %v938 = vld [vmem:[#allocation14 + $0x200] sm:$0xff]
    %v939 = vld [vmem:[#allocation14 + $0x208] sm:$0xff]
    %v940 = vld [vmem:[#allocation14 + $0x210] sm:$0xff]
    %v941 = vld [vmem:[#allocation14 + $0x218] sm:$0xff]
    %v942 = vld [vmem:[#allocation14 + $0x220] sm:$0xff]
    %v943 = vld [vmem:[#allocation14 + $0x228] sm:$0xff]
    %v944 = vld [vmem:[#allocation14 + $0x230] sm:$0xff]
    %v945 = vld [vmem:[#allocation14 + $0x238] sm:$0xff]
    %v946 = vld [vmem:[#allocation14 + $0x240] sm:$0xff]
    %v947 = vld [vmem:[#allocation14 + $0x248] sm:$0xff]
    %v948 = vld [vmem:[#allocation14 + $0x250] sm:$0xff]
    %v949 = vld [vmem:[#allocation14 + $0x258] sm:$0xff]
    %v950 = vld [vmem:[#allocation14 + $0x260] sm:$0xff]
    %v951 = vld [vmem:[#allocation14 + $0x268] sm:$0xff]
    %v952 = vld [vmem:[#allocation14 + $0x270] sm:$0xff]
    %v953 = vld [vmem:[#allocation14 + $0x278] sm:$0xff]
    %v954 = vld [vmem:[#allocation14 + $0x280] sm:$0xff]
    %v955 = vld [vmem:[#allocation14 + $0x288] sm:$0xff]
    %v956 = vld [vmem:[#allocation14 + $0x290] sm:$0xff]
    %v957 = vld [vmem:[#allocation14 + $0x298] sm:$0xff]
    %v958 = vld [vmem:[#allocation14 + $0x2a0] sm:$0xff]
    %v959 = vld [vmem:[#allocation14 + $0x2a8] sm:$0xff]
    %v960 = vld [vmem:[#allocation14 + $0x2b0] sm:$0xff]
    %v961 = vld [vmem:[#allocation14 + $0x2b8] sm:$0xff]
    %v962 = vld [vmem:[#allocation14 + $0x2c0] sm:$0xff]
    %v963 = vld [vmem:[#allocation14 + $0x2c8] sm:$0xff]
    %v964 = vld [vmem:[#allocation14 + $0x2d0] sm:$0xff]
    %v965 = vld [vmem:[#allocation14 + $0x2d8] sm:$0xff]
    %v966 = vld [vmem:[#allocation14 + $0x2e0] sm:$0xff]
    %v967 = vld [vmem:[#allocation14 + $0x2e8] sm:$0xff]
    %v968 = vld [vmem:[#allocation14 + $0x2f0] sm:$0xff]
    %v969 = vld [vmem:[#allocation14 + $0x2f8] sm:$0xff]
    %v970 = vld [vmem:[#allocation14 + $0x300] sm:$0xff]
    %v971 = vld [vmem:[#allocation14 + $0x308] sm:$0xff]
    %v972 = vld [vmem:[#allocation14 + $0x310] sm:$0xff]
    %v973 = vld [vmem:[#allocation14 + $0x318] sm:$0xff]
    %v974 = vld [vmem:[#allocation14 + $0x320] sm:$0xff]
    %v975 = vld [vmem:[#allocation14 + $0x328] sm:$0xff]
    %v976 = vld [vmem:[#allocation14 + $0x330] sm:$0xff]
    %v977 = vld [vmem:[#allocation14 + $0x338] sm:$0xff]
    %v978 = vld [vmem:[#allocation14 + $0x340] sm:$0xff]
    %v979 = vld [vmem:[#allocation14 + $0x348] sm:$0xff]
    %v980 = vld [vmem:[#allocation14 + $0x350] sm:$0xff]
    %v981 = vld [vmem:[#allocation14 + $0x358] sm:$0xff]
    %v982 = vld [vmem:[#allocation14 + $0x360] sm:$0xff]
    %v983 = vld [vmem:[#allocation14 + $0x368] sm:$0xff]
    %v984 = vld [vmem:[#allocation14 + $0x370] sm:$0xff]
    %v985 = vld [vmem:[#allocation14 + $0x378] sm:$0xff]
    %v986 = vld [vmem:[#allocation14 + $0x380] sm:$0xff]
    %v987 = vld [vmem:[#allocation14 + $0x388] sm:$0xff]
    %v988 = vld [vmem:[#allocation14 + $0x390] sm:$0xff]
    %v989 = vld [vmem:[#allocation14 + $0x398] sm:$0xff]
    %v990 = vld [vmem:[#allocation14 + $0x3a0] sm:$0xff]
    %v991 = vld [vmem:[#allocation14 + $0x3a8] sm:$0xff]
    %v992 = vld [vmem:[#allocation14 + $0x3b0] sm:$0xff]
    %v993 = vld [vmem:[#allocation14 + $0x3b8] sm:$0xff]
    %v994 = vld [vmem:[#allocation14 + $0x3c0] sm:$0xff]
    %v995 = vld [vmem:[#allocation14 + $0x3c8] sm:$0xff]
    %v996 = vld [vmem:[#allocation14 + $0x3d0] sm:$0xff]
    %v997 = vld [vmem:[#allocation14 + $0x3d8] sm:$0xff]
    %v998 = vld [vmem:[#allocation14 + $0x3e0] sm:$0xff]
    %v999 = vld [vmem:[#allocation14 + $0x3e8] sm:$0xff]
    %v1000 = vld [vmem:[#allocation14 + $0x3f0] sm:$0xff]
    %v1001 = vld [vmem:[#allocation14 + $0x3f8] sm:$0xff]
    %v1002 = vld [vmem:[#allocation14 + $0x400] sm:$0xff]
    %v1003 = vld [vmem:[#allocation14 + $0x408] sm:$0xff]
    %v1004 = vld [vmem:[#allocation14 + $0x410] sm:$0xff]
    %v1005 = vld [vmem:[#allocation14 + $0x418] sm:$0xff]
    %v1006 = vld [vmem:[#allocation14 + $0x420] sm:$0xff]
    %v1007 = vld [vmem:[#allocation14 + $0x428] sm:$0xff]
    %v1008 = vld [vmem:[#allocation14 + $0x430] sm:$0xff]
    %v1009 = vld [vmem:[#allocation14 + $0x438] sm:$0xff]
    %v1010 = vld [vmem:[#allocation14 + $0x440] sm:$0xff]
    %v1011 = vld [vmem:[#allocation14 + $0x448] sm:$0xff]
    %v1012 = vld [vmem:[#allocation14 + $0x450] sm:$0xff]
    %v1013 = vld [vmem:[#allocation14 + $0x458] sm:$0xff]
    %v1014 = vld [vmem:[#allocation14 + $0x460] sm:$0xff]
    %v1015 = vld [vmem:[#allocation14 + $0x468] sm:$0xff]
    %v1016 = vld [vmem:[#allocation14 + $0x470] sm:$0xff]
    %v1017 = vld [vmem:[#allocation14 + $0x478] sm:$0xff]
    %v1018 = vld [vmem:[#allocation14 + $0x480] sm:$0xff]
    %v1019 = vld [vmem:[#allocation14 + $0x488] sm:$0xff]
    %v1020 = vld [vmem:[#allocation14 + $0x490] sm:$0xff]
    %v1021 = vld [vmem:[#allocation14 + $0x498] sm:$0xff]
    %v1022 = vld [vmem:[#allocation14 + $0x4a0] sm:$0xff]
    %v1023 = vld [vmem:[#allocation14 + $0x4a8] sm:$0xff]
    %v1024 = vld [vmem:[#allocation14 + $0x4b0] sm:$0xff]
    %v1025 = vld [vmem:[#allocation14 + $0x4b8] sm:$0xff]
    %v1026 = vld [vmem:[#allocation14 + $0x4c0] sm:$0xff]
    %v1027 = vld [vmem:[#allocation14 + $0x4c8] sm:$0xff]
    %v1028 = vld [vmem:[#allocation14 + $0x4d0] sm:$0xff]
    %v1029 = vld [vmem:[#allocation14 + $0x4d8] sm:$0xff]
    %v1030 = vld [vmem:[#allocation14 + $0x4e0] sm:$0xff]
    %v1031 = vld [vmem:[#allocation14 + $0x4e8] sm:$0xff]
    %v1032 = vld [vmem:[#allocation14 + $0x4f0] sm:$0xff]
    %v1033 = vld [vmem:[#allocation14 + $0x4f8] sm:$0xff]
    %v1034 = vld [vmem:[#allocation14 + $0x500] sm:$0xff]
    %v1035 = vld [vmem:[#allocation14 + $0x508] sm:$0xff]
    %v1036 = vld [vmem:[#allocation14 + $0x510] sm:$0xff]
    %v1037 = vld [vmem:[#allocation14 + $0x518] sm:$0xff]
    %v1038 = vld [vmem:[#allocation14 + $0x520] sm:$0xff]
    %v1039 = vld [vmem:[#allocation14 + $0x528] sm:$0xff]
    %v1040 = vld [vmem:[#allocation14 + $0x530] sm:$0xff]
    %v1041 = vld [vmem:[#allocation14 + $0x538] sm:$0xff]
    %v1042 = vld [vmem:[#allocation14 + $0x540] sm:$0xff]
    %v1043 = vld [vmem:[#allocation14 + $0x548] sm:$0xff]
    %v1044 = vld [vmem:[#allocation14 + $0x550] sm:$0xff]
    %v1045 = vld [vmem:[#allocation14 + $0x558] sm:$0xff]
    %v1046 = vld [vmem:[#allocation14 + $0x560] sm:$0xff]
    %v1047 = vld [vmem:[#allocation14 + $0x568] sm:$0xff]
    %v1048 = vld [vmem:[#allocation14 + $0x570] sm:$0xff]
    %v1049 = vld [vmem:[#allocation14 + $0x578] sm:$0xff]
    %v1050 = vld [vmem:[#allocation14 + $0x580] sm:$0xff]
    %v1051 = vld [vmem:[#allocation14 + $0x588] sm:$0xff]
    %v1052 = vld [vmem:[#allocation14 + $0x590] sm:$0xff]
    %v1053 = vld [vmem:[#allocation14 + $0x598] sm:$0xff]
    %v1054 = vld [vmem:[#allocation14 + $0x5a0] sm:$0xff]
    %v1055 = vld [vmem:[#allocation14 + $0x5a8] sm:$0xff]
    %v1056 = vld [vmem:[#allocation14 + $0x5b0] sm:$0xff]
    %v1057 = vld [vmem:[#allocation14 + $0x5b8] sm:$0xff]
    %v1058 = vld [vmem:[#allocation14 + $0x5c0] sm:$0xff]
    %v1059 = vld [vmem:[#allocation14 + $0x5c8] sm:$0xff]
    %v1060 = vld [vmem:[#allocation14 + $0x5d0] sm:$0xff]
    %v1061 = vld [vmem:[#allocation14 + $0x5d8] sm:$0xff]
    %v1062 = vld [vmem:[#allocation14 + $0x5e0] sm:$0xff]
    %v1063 = vld [vmem:[#allocation14 + $0x5e8] sm:$0xff]
    %v1064 = vld [vmem:[#allocation14 + $0x5f0] sm:$0xff]
    %v1065 = vld [vmem:[#allocation14 + $0x5f8] sm:$0xff]
    %v1066 = vld [vmem:[#allocation14 + $0x600] sm:$0xff]
    %v1067 = vld [vmem:[#allocation14 + $0x608] sm:$0xff]
    %v1068 = vld [vmem:[#allocation14 + $0x610] sm:$0xff]
    %v1069 = vld [vmem:[#allocation14 + $0x618] sm:$0xff]
    %v1070 = vld [vmem:[#allocation14 + $0x620] sm:$0xff]
    %v1071 = vld [vmem:[#allocation14 + $0x628] sm:$0xff]
    %v1072 = vld [vmem:[#allocation14 + $0x630] sm:$0xff]
    %v1073 = vld [vmem:[#allocation14 + $0x638] sm:$0xff]
    %v1074 = vld [vmem:[#allocation14 + $0x640] sm:$0xff]
    %v1075 = vld [vmem:[#allocation14 + $0x648] sm:$0xff]
    %v1076 = vld [vmem:[#allocation14 + $0x650] sm:$0xff]
    %v1077 = vld [vmem:[#allocation14 + $0x658] sm:$0xff]
    %v1078 = vld [vmem:[#allocation14 + $0x660] sm:$0xff]
    %v1079 = vld [vmem:[#allocation14 + $0x668] sm:$0xff]
    %v1080 = vld [vmem:[#allocation14 + $0x670] sm:$0xff]
    %v1081 = vld [vmem:[#allocation14 + $0x678] sm:$0xff]
    %v1082 = vld [vmem:[#allocation14 + $0x680] sm:$0xff]
    %v1083 = vld [vmem:[#allocation14 + $0x688] sm:$0xff]
    %v1084 = vld [vmem:[#allocation14 + $0x690] sm:$0xff]
    %v1085 = vld [vmem:[#allocation14 + $0x698] sm:$0xff]
    %v1086 = vld [vmem:[#allocation14 + $0x6a0] sm:$0xff]
    %v1087 = vld [vmem:[#allocation14 + $0x6a8] sm:$0xff]
    %v1088 = vld [vmem:[#allocation14 + $0x6b0] sm:$0xff]
    %v1089 = vld [vmem:[#allocation14 + $0x6b8] sm:$0xff]
    %v1090 = vld [vmem:[#allocation14 + $0x6c0] sm:$0xff]
    %v1091 = vld [vmem:[#allocation14 + $0x6c8] sm:$0xff]
    %v1092 = vld [vmem:[#allocation14 + $0x6d0] sm:$0xff]
    %v1093 = vld [vmem:[#allocation14 + $0x6d8] sm:$0xff]
    %v1094 = vld [vmem:[#allocation14 + $0x6e0] sm:$0xff]
    %v1095 = vld [vmem:[#allocation14 + $0x6e8] sm:$0xff]
    %v1096 = vld [vmem:[#allocation14 + $0x6f0] sm:$0xff]
    %v1097 = vld [vmem:[#allocation14 + $0x6f8] sm:$0xff]
    %v1098 = vld [vmem:[#allocation14 + $0x700] sm:$0xff]
    %v1099 = vld [vmem:[#allocation14 + $0x708] sm:$0xff]
    %v1100 = vld [vmem:[#allocation14 + $0x710] sm:$0xff]
    %v1101 = vld [vmem:[#allocation14 + $0x718] sm:$0xff]
    %v1102 = vld [vmem:[#allocation14 + $0x720] sm:$0xff]
    %v1103 = vld [vmem:[#allocation14 + $0x728] sm:$0xff]
    %v1104 = vld [vmem:[#allocation14 + $0x730] sm:$0xff]
    %v1105 = vld [vmem:[#allocation14 + $0x738] sm:$0xff]
    %v1106 = vld [vmem:[#allocation14 + $0x740] sm:$0xff]
    %v1107 = vld [vmem:[#allocation14 + $0x748] sm:$0xff]
    %v1108 = vld [vmem:[#allocation14 + $0x750] sm:$0xff]
    %v1109 = vld [vmem:[#allocation14 + $0x758] sm:$0xff]
    %v1110 = vld [vmem:[#allocation14 + $0x760] sm:$0xff]
    %v1111 = vld [vmem:[#allocation14 + $0x768] sm:$0xff]
    %v1112 = vld [vmem:[#allocation14 + $0x770] sm:$0xff]
    %v1113 = vld [vmem:[#allocation14 + $0x778] sm:$0xff]
    %v1114 = vld [vmem:[#allocation14 + $0x780] sm:$0xff]
    %v1115 = vld [vmem:[#allocation14 + $0x788] sm:$0xff]
    %v1116 = vld [vmem:[#allocation14 + $0x790] sm:$0xff]
    %v1117 = vld [vmem:[#allocation14 + $0x798] sm:$0xff]
    %v1118 = vld [vmem:[#allocation14 + $0x7a0] sm:$0xff]
    %v1119 = vld [vmem:[#allocation14 + $0x7a8] sm:$0xff]
    %v1120 = vld [vmem:[#allocation14 + $0x7b0] sm:$0xff]
    %v1121 = vld [vmem:[#allocation14 + $0x7b8] sm:$0xff]
    %v1122 = vld [vmem:[#allocation14 + $0x7c0] sm:$0xff]
    %v1123 = vld [vmem:[#allocation14 + $0x7c8] sm:$0xff]
    %v1124 = vld [vmem:[#allocation14 + $0x7d0] sm:$0xff]
    %v1125 = vld [vmem:[#allocation14 + $0x7d8] sm:$0xff]
    %v1126 = vld [vmem:[#allocation14 + $0x7e0] sm:$0xff]
    %v1127 = vld [vmem:[#allocation14 + $0x7e8] sm:$0xff]
    %v1128 = vld [vmem:[#allocation14 + $0x7f0] sm:$0xff]
    %v1129 = vld [vmem:[#allocation14 + $0x7f8] sm:$0xff]
    %v1130 = vld [vmem:[#allocation14 + $0x800] sm:$0xff]
    %v1131 = vld [vmem:[#allocation14 + $0x808] sm:$0xff]
    %v1132 = vld [vmem:[#allocation14 + $0x810] sm:$0xff]
    %v1133 = vld [vmem:[#allocation14 + $0x818] sm:$0xff]
    %v1134 = vld [vmem:[#allocation14 + $0x820] sm:$0xff]
    %v1135 = vld [vmem:[#allocation14 + $0x828] sm:$0xff]
    %v1136 = vld [vmem:[#allocation14 + $0x830] sm:$0xff]
    %v1137 = vld [vmem:[#allocation14 + $0x838] sm:$0xff]
    %v1138 = vld [vmem:[#allocation14 + $0x840] sm:$0xff]
    %v1139 = vld [vmem:[#allocation14 + $0x848] sm:$0xff]
    %v1140 = vld [vmem:[#allocation14 + $0x850] sm:$0xff]
    %v1141 = vld [vmem:[#allocation14 + $0x858] sm:$0xff]
    %v1142 = vld [vmem:[#allocation14 + $0x860] sm:$0xff]
    %v1143 = vld [vmem:[#allocation14 + $0x868] sm:$0xff]
    %v1144 = vld [vmem:[#allocation14 + $0x870] sm:$0xff]
    %v1145 = vld [vmem:[#allocation14 + $0x878] sm:$0xff]
    %v1146 = vld [vmem:[#allocation14 + $0x880] sm:$0xff]
    %v1147 = vld [vmem:[#allocation14 + $0x888] sm:$0xff]
    %v1148 = vld [vmem:[#allocation14 + $0x890] sm:$0xff]
    %v1149 = vld [vmem:[#allocation14 + $0x898] sm:$0xff]
    %v1150 = vld [vmem:[#allocation14 + $0x8a0] sm:$0xff]
    %v1151 = vld [vmem:[#allocation14 + $0x8a8] sm:$0xff]
    %v1152 = vld [vmem:[#allocation14 + $0x8b0] sm:$0xff]
    %v1153 = vld [vmem:[#allocation14 + $0x8b8] sm:$0xff]
    %v1154 = vld [vmem:[#allocation14 + $0x8c0] sm:$0xff]
    %v1155 = vld [vmem:[#allocation14 + $0x8c8] sm:$0xff]
    %v1156 = vld [vmem:[#allocation14 + $0x8d0] sm:$0xff]
    %v1157 = vld [vmem:[#allocation14 + $0x8d8] sm:$0xff]
    %v1158 = vld [vmem:[#allocation14 + $0x8e0] sm:$0xff]
    %v1159 = vld [vmem:[#allocation14 + $0x8e8] sm:$0xff]
    %v1160 = vld [vmem:[#allocation14 + $0x8f0] sm:$0xff]
    %v1161 = vld [vmem:[#allocation14 + $0x8f8] sm:$0xff]
    %v1162 = vld [vmem:[#allocation14 + $0x900] sm:$0xff]
    %v1163 = vld [vmem:[#allocation14 + $0x908] sm:$0xff]
    %v1164 = vld [vmem:[#allocation14 + $0x910] sm:$0xff]
    %v1165 = vld [vmem:[#allocation14 + $0x918] sm:$0xff]
    %v1166 = vld [vmem:[#allocation14 + $0x920] sm:$0xff]
    %v1167 = vld [vmem:[#allocation14 + $0x928] sm:$0xff]
    %v1168 = vld [vmem:[#allocation14 + $0x930] sm:$0xff]
    %v1169 = vld [vmem:[#allocation14 + $0x938] sm:$0xff]
    %v1170 = vld [vmem:[#allocation14 + $0x940] sm:$0xff]
    %v1171 = vld [vmem:[#allocation14 + $0x948] sm:$0xff]
    %v1172 = vld [vmem:[#allocation14 + $0x950] sm:$0xff]
    %v1173 = vld [vmem:[#allocation14 + $0x958] sm:$0xff]
    %v1174 = vld [vmem:[#allocation14 + $0x960] sm:$0xff]
    %v1175 = vld [vmem:[#allocation14 + $0x968] sm:$0xff]
    %v1176 = vld [vmem:[#allocation14 + $0x970] sm:$0xff]
    %v1177 = vld [vmem:[#allocation14 + $0x978] sm:$0xff]
    %v1178 = vld [vmem:[#allocation14 + $0x980] sm:$0xff]
    %v1179 = vld [vmem:[#allocation14 + $0x988] sm:$0xff]
    %v1180 = vld [vmem:[#allocation14 + $0x990] sm:$0xff]
    %v1181 = vld [vmem:[#allocation14 + $0x998] sm:$0xff]
    %v1182 = vld [vmem:[#allocation14 + $0x9a0] sm:$0xff]
    %v1183 = vld [vmem:[#allocation14 + $0x9a8] sm:$0xff]
    %v1184 = vld [vmem:[#allocation14 + $0x9b0] sm:$0xff]
    %v1185 = vld [vmem:[#allocation14 + $0x9b8] sm:$0xff]
    %v1186 = vld [vmem:[#allocation14 + $0x9c0] sm:$0xff]
    %v1187 = vld [vmem:[#allocation14 + $0x9c8] sm:$0xff]
    %v1188 = vld [vmem:[#allocation14 + $0x9d0] sm:$0xff]
    %v1189 = vld [vmem:[#allocation14 + $0x9d8] sm:$0xff]
    %v1190 = vld [vmem:[#allocation14 + $0x9e0] sm:$0xff]
    %v1191 = vld [vmem:[#allocation14 + $0x9e8] sm:$0xff]
    %v1192 = vld [vmem:[#allocation14 + $0x9f0] sm:$0xff]
    %v1193 = vld [vmem:[#allocation14 + $0x9f8] sm:$0xff]
    %v1194 = vld [vmem:[#allocation14 + $0xa00] sm:$0xff]
    %v1195 = vld [vmem:[#allocation14 + $0xa08] sm:$0xff]
    %v1196 = vld [vmem:[#allocation14 + $0xa10] sm:$0xff]
    %v1197 = vld [vmem:[#allocation14 + $0xa18] sm:$0xff]
    %v1198 = vld [vmem:[#allocation14 + $0xa20] sm:$0xff]
    %v1199 = vld [vmem:[#allocation14 + $0xa28] sm:$0xff]
    %v1200 = vld [vmem:[#allocation14 + $0xa30] sm:$0xff]
    %v1201 = vld [vmem:[#allocation14 + $0xa38] sm:$0xff]
    %v1202 = vld [vmem:[#allocation14 + $0xa40] sm:$0xff]
    %v1203 = vld [vmem:[#allocation14 + $0xa48] sm:$0xff]
    %v1204 = vld [vmem:[#allocation14 + $0xa50] sm:$0xff]
    %v1205 = vld [vmem:[#allocation14 + $0xa58] sm:$0xff]
    %v1206 = vld [vmem:[#allocation14 + $0xa60] sm:$0xff]
    %v1207 = vld [vmem:[#allocation14 + $0xa68] sm:$0xff]
    %v1208 = vld [vmem:[#allocation14 + $0xa70] sm:$0xff]
    %v1209 = vld [vmem:[#allocation14 + $0xa78] sm:$0xff]
    %v1210 = vld [vmem:[#allocation14 + $0xa80] sm:$0xff]
    %v1211 = vld [vmem:[#allocation14 + $0xa88] sm:$0xff]
    %v1212 = vld [vmem:[#allocation14 + $0xa90] sm:$0xff]
    %v1213 = vld [vmem:[#allocation14 + $0xa98] sm:$0xff]
    %v1214 = vld [vmem:[#allocation14 + $0xaa0] sm:$0xff]
    %v1215 = vld [vmem:[#allocation14 + $0xaa8] sm:$0xff]
    %v1216 = vld [vmem:[#allocation14 + $0xab0] sm:$0xff]
    %v1217 = vld [vmem:[#allocation14 + $0xab8] sm:$0xff]
    %v1218 = vld [vmem:[#allocation14 + $0xac0] sm:$0xff]
    %v1219 = vld [vmem:[#allocation14 + $0xac8] sm:$0xff]
    %v1220 = vld [vmem:[#allocation14 + $0xad0] sm:$0xff]
    %v1221 = vld [vmem:[#allocation14 + $0xad8] sm:$0xff]
    %v1222 = vld [vmem:[#allocation14 + $0xae0] sm:$0xff]
    %v1223 = vld [vmem:[#allocation14 + $0xae8] sm:$0xff]
    %v1224 = vld [vmem:[#allocation14 + $0xaf0] sm:$0xff]
    %v1225 = vld [vmem:[#allocation14 + $0xaf8] sm:$0xff]
    %v1226 = vld [vmem:[#allocation14 + $0xb00] sm:$0xff]
    %v1227 = vld [vmem:[#allocation14 + $0xb08] sm:$0xff]
    %v1228 = vld [vmem:[#allocation14 + $0xb10] sm:$0xff]
    %v1229 = vld [vmem:[#allocation14 + $0xb18] sm:$0xff]
    %v1230 = vld [vmem:[#allocation14 + $0xb20] sm:$0xff]
    %v1231 = vld [vmem:[#allocation14 + $0xb28] sm:$0xff]
    %v1232 = vld [vmem:[#allocation14 + $0xb30] sm:$0xff]
    %v1233 = vld [vmem:[#allocation14 + $0xb38] sm:$0xff]
    %v1234 = vld [vmem:[#allocation14 + $0xb40] sm:$0xff]
    %v1235 = vld [vmem:[#allocation14 + $0xb48] sm:$0xff]
    %v1236 = vld [vmem:[#allocation14 + $0xb50] sm:$0xff]
    %v1237 = vld [vmem:[#allocation14 + $0xb58] sm:$0xff]
    %v1238 = vld [vmem:[#allocation14 + $0xb60] sm:$0xff]
    %v1239 = vld [vmem:[#allocation14 + $0xb68] sm:$0xff]
    %v1240 = vld [vmem:[#allocation14 + $0xb70] sm:$0xff]
    %v1241 = vld [vmem:[#allocation14 + $0xb78] sm:$0xff]
    %v1242 = vld [vmem:[#allocation14 + $0xb80] sm:$0xff]
    %v1243 = vld [vmem:[#allocation14 + $0xb88] sm:$0xff]
    %v1244 = vld [vmem:[#allocation14 + $0xb90] sm:$0xff]
    %v1245 = vld [vmem:[#allocation14 + $0xb98] sm:$0xff]
    %v1246 = vld [vmem:[#allocation14 + $0xba0] sm:$0xff]
    %v1247 = vld [vmem:[#allocation14 + $0xba8] sm:$0xff]
    %v1248 = vld [vmem:[#allocation14 + $0xbb0] sm:$0xff]
    %v1249 = vld [vmem:[#allocation14 + $0xbb8] sm:$0xff]
    %v1250 = vld [vmem:[#allocation14 + $0xbc0] sm:$0xff]
    %v1251 = vld [vmem:[#allocation14 + $0xbc8] sm:$0xff]
    %v1252 = vld [vmem:[#allocation14 + $0xbd0] sm:$0xff]
    %v1253 = vld [vmem:[#allocation14 + $0xbd8] sm:$0xff]
    %v1254 = vld [vmem:[#allocation14 + $0xbe0] sm:$0xff]
    %v1255 = vld [vmem:[#allocation14 + $0xbe8] sm:$0xff]
    %v1256 = vld [vmem:[#allocation14 + $0xbf0] sm:$0xff]
    %v1257 = vld [vmem:[#allocation14 + $0xbf8] sm:$0xff]
    %v1258 = vld [vmem:[#allocation14 + $0xc00] sm:$0xff]
    %v1259 = vld [vmem:[#allocation14 + $0xc08] sm:$0xff]
    %v1260 = vld [vmem:[#allocation14 + $0xc10] sm:$0xff]
    %v1261 = vld [vmem:[#allocation14 + $0xc18] sm:$0xff]
    %v1262 = vld [vmem:[#allocation14 + $0xc20] sm:$0xff]
    %v1263 = vld [vmem:[#allocation14 + $0xc28] sm:$0xff]
    %v1264 = vld [vmem:[#allocation14 + $0xc30] sm:$0xff]
    %v1265 = vld [vmem:[#allocation14 + $0xc38] sm:$0xff]
    %v1266 = vld [vmem:[#allocation14 + $0xc40] sm:$0xff]
    %v1267 = vld [vmem:[#allocation14 + $0xc48] sm:$0xff]
    %v1268 = vld [vmem:[#allocation14 + $0xc50] sm:$0xff]
    %v1269 = vld [vmem:[#allocation14 + $0xc58] sm:$0xff]
    %v1270 = vld [vmem:[#allocation14 + $0xc60] sm:$0xff]
    %v1271 = vld [vmem:[#allocation14 + $0xc68] sm:$0xff]
    %v1272 = vld [vmem:[#allocation14 + $0xc70] sm:$0xff]
    %v1273 = vld [vmem:[#allocation14 + $0xc78] sm:$0xff]
    %v1274 = vld [vmem:[#allocation14 + $0xc80] sm:$0xff]
    %v1275 = vld [vmem:[#allocation14 + $0xc88] sm:$0xff]
    %v1276 = vld [vmem:[#allocation14 + $0xc90] sm:$0xff]
    %v1277 = vld [vmem:[#allocation14 + $0xc98] sm:$0xff]
    %v1278 = vld [vmem:[#allocation14 + $0xca0] sm:$0xff]
    %v1279 = vld [vmem:[#allocation14 + $0xca8] sm:$0xff]
    %v1280 = vld [vmem:[#allocation14 + $0xcb0] sm:$0xff]
    %v1281 = vld [vmem:[#allocation14 + $0xcb8] sm:$0xff]
    %v1282 = vld [vmem:[#allocation14 + $0xcc0] sm:$0xff]
    %v1283 = vld [vmem:[#allocation14 + $0xcc8] sm:$0xff]
    %v1284 = vld [vmem:[#allocation14 + $0xcd0] sm:$0xff]
    %v1285 = vld [vmem:[#allocation14 + $0xcd8] sm:$0xff]
    %v1286 = vld [vmem:[#allocation14 + $0xce0] sm:$0xff]
    %v1287 = vld [vmem:[#allocation14 + $0xce8] sm:$0xff]
    %v1288 = vld [vmem:[#allocation14 + $0xcf0] sm:$0xff]
    %v1289 = vld [vmem:[#allocation14 + $0xcf8] sm:$0xff]
    %v1290 = vld [vmem:[#allocation14 + $0xd00] sm:$0xff]
    %v1291 = vld [vmem:[#allocation14 + $0xd08] sm:$0xff]
    %v1292 = vld [vmem:[#allocation14 + $0xd10] sm:$0xff]
    %v1293 = vld [vmem:[#allocation14 + $0xd18] sm:$0xff]
    %v1294 = vld [vmem:[#allocation14 + $0xd20] sm:$0xff]
    %v1295 = vld [vmem:[#allocation14 + $0xd28] sm:$0xff]
    %v1296 = vld [vmem:[#allocation14 + $0xd30] sm:$0xff]
    %v1297 = vld [vmem:[#allocation14 + $0xd38] sm:$0xff]
    %v1298 = vld [vmem:[#allocation14 + $0xd40] sm:$0xff]
    %v1299 = vld [vmem:[#allocation14 + $0xd48] sm:$0xff]
    %v1300 = vld [vmem:[#allocation14 + $0xd50] sm:$0xff]
    %v1301 = vld [vmem:[#allocation14 + $0xd58] sm:$0xff]
    %v1302 = vld [vmem:[#allocation14 + $0xd60] sm:$0xff]
    %v1303 = vld [vmem:[#allocation14 + $0xd68] sm:$0xff]
    %v1304 = vld [vmem:[#allocation14 + $0xd70] sm:$0xff]
    %v1305 = vld [vmem:[#allocation14 + $0xd78] sm:$0xff]
    %v1306 = vld [vmem:[#allocation14 + $0xd80] sm:$0xff]
    %v1307 = vld [vmem:[#allocation14 + $0xd88] sm:$0xff]
    %v1308 = vld [vmem:[#allocation14 + $0xd90] sm:$0xff]
    %v1309 = vld [vmem:[#allocation14 + $0xd98] sm:$0xff]
    %v1310 = vld [vmem:[#allocation14 + $0xda0] sm:$0xff]
    %v1311 = vld [vmem:[#allocation14 + $0xda8] sm:$0xff]
    %v1312 = vld [vmem:[#allocation14 + $0xdb0] sm:$0xff]
    %v1313 = vld [vmem:[#allocation14 + $0xdb8] sm:$0xff]
    %v1314 = vld [vmem:[#allocation14 + $0xdc0] sm:$0xff]
    %v1315 = vld [vmem:[#allocation14 + $0xdc8] sm:$0xff]
    %v1316 = vld [vmem:[#allocation14 + $0xdd0] sm:$0xff]
    %v1317 = vld [vmem:[#allocation14 + $0xdd8] sm:$0xff]
    %v1318 = vld [vmem:[#allocation14 + $0xde0] sm:$0xff]
    %v1319 = vld [vmem:[#allocation14 + $0xde8] sm:$0xff]
    %v1320 = vld [vmem:[#allocation14 + $0xdf0] sm:$0xff]
    %v1321 = vld [vmem:[#allocation14 + $0xdf8] sm:$0xff]
    %v1322 = vld [vmem:[#allocation14 + $0xe00] sm:$0xff]
    %v1323 = vld [vmem:[#allocation14 + $0xe08] sm:$0xff]
    %v1324 = vld [vmem:[#allocation14 + $0xe10] sm:$0xff]
    %v1325 = vld [vmem:[#allocation14 + $0xe18] sm:$0xff]
    %v1326 = vld [vmem:[#allocation14 + $0xe20] sm:$0xff]
    %v1327 = vld [vmem:[#allocation14 + $0xe28] sm:$0xff]
    %v1328 = vld [vmem:[#allocation14 + $0xe30] sm:$0xff]
    %v1329 = vld [vmem:[#allocation14 + $0xe38] sm:$0xff]
    %v1330 = vld [vmem:[#allocation14 + $0xe40] sm:$0xff]
    %v1331 = vld [vmem:[#allocation14 + $0xe48] sm:$0xff]
    %v1332 = vld [vmem:[#allocation14 + $0xe50] sm:$0xff]
    %v1333 = vld [vmem:[#allocation14 + $0xe58] sm:$0xff]
    %v1334 = vld [vmem:[#allocation14 + $0xe60] sm:$0xff]
    %v1335 = vld [vmem:[#allocation14 + $0xe68] sm:$0xff]
    %v1336 = vld [vmem:[#allocation14 + $0xe70] sm:$0xff]
    %v1337 = vld [vmem:[#allocation14 + $0xe78] sm:$0xff]
    %v1338 = vld [vmem:[#allocation14 + $0xe80] sm:$0xff]
    %v1339 = vld [vmem:[#allocation14 + $0xe88] sm:$0xff]
    %v1340 = vld [vmem:[#allocation14 + $0xe90] sm:$0xff]
    %v1341 = vld [vmem:[#allocation14 + $0xe98] sm:$0xff]
    %v1342 = vld [vmem:[#allocation14 + $0xea0] sm:$0xff]
    %v1343 = vld [vmem:[#allocation14 + $0xea8] sm:$0xff]
    %v1344 = vld [vmem:[#allocation14 + $0xeb0] sm:$0xff]
    %v1345 = vld [vmem:[#allocation14 + $0xeb8] sm:$0xff]
    %v1346 = vld [vmem:[#allocation14 + $0xec0] sm:$0xff]
    %v1347 = vld [vmem:[#allocation14 + $0xec8] sm:$0xff]
    %v1348 = vld [vmem:[#allocation14 + $0xed0] sm:$0xff]
    %v1349 = vld [vmem:[#allocation14 + $0xed8] sm:$0xff]
    %v1350 = vld [vmem:[#allocation14 + $0xee0] sm:$0xff]
    %v1351 = vld [vmem:[#allocation14 + $0xee8] sm:$0xff]
    %v1352 = vld [vmem:[#allocation14 + $0xef0] sm:$0xff]
    %v1353 = vld [vmem:[#allocation14 + $0xef8] sm:$0xff]
    %v1354 = vld [vmem:[%s4] sm:$0x3]
    %v1356 = vperm.slane %v1354, 0
    %v1357 = vperm.slane %v1354, 1
    %1360 = vmatpush.msra.mxu0 %v904
    %1361 = vmatpush.msra.mxu0 %v902
    %1362 = vmatpush.msra.mxu0 %v900
    %1363 = vmatpush.msra.mxu0 %v898
    %1364 = vmatpush.msra.mxu0 %v896
    %1365 = vmatpush.msra.mxu0 %v894
    %1366 = vmatpush.msra.mxu0 %v892
    %1367 = vmatpush.msra.mxu0 %v890
    %1368 = vmatpush.msra.mxu0 %v888
    %1369 = vmatpush.msra.mxu0 %v886
    %1370 = vmatpush.msra.mxu0 %v884
    %1371 = vmatpush.msra.mxu0 %v882
    %1372 = vmatpush.msra.mxu0 %v880
    %1373 = vmatpush.msra.mxu0 %v878
    %1374 = vmatpush.msra.mxu0 %v876
    %1375 = vmatpush.msra.mxu0 %v874
    %1376 = vmatmul.f32.gmra.mxu0 %v859
    %v1377 = vpop.f32.mrf.mxu0
    %v1378 = vadd.f32 %v1356, %v1377
    %1379 = vdwg.mxu0
    %1380 = vmatpush.msra.mxu0 %v936
    %1381 = vmatpush.msra.mxu0 %v934
    %1382 = vmatpush.msra.mxu0 %v932
    %1383 = vmatpush.msra.mxu0 %v930
    %1384 = vmatpush.msra.mxu0 %v928
    %1385 = vmatpush.msra.mxu0 %v926
    %1386 = vmatpush.msra.mxu0 %v924
    %1387 = vmatpush.msra.mxu0 %v922
    %1388 = vmatpush.msra.mxu0 %v920
    %1389 = vmatpush.msra.mxu0 %v918
    %1390 = vmatpush.msra.mxu0 %v916
    %1391 = vmatpush.msra.mxu0 %v914
    %1392 = vmatpush.msra.mxu0 %v912
    %1393 = vmatpush.msra.mxu0 %v910
    %1394 = vmatpush.msra.mxu0 %v908
    %1395 = vmatpush.msra.mxu0 %v906
    %1396 = vmatmul.f32.gmra.mxu0 %v860
    %v1397 = vpop.f32.mrf.mxu0
    %v1398 = vadd.f32 %v1378, %v1397
    %1399 = vdwg.mxu0
    %1400 = vmatpush.msra.mxu0 %v968
    %1401 = vmatpush.msra.mxu0 %v966
    %1402 = vmatpush.msra.mxu0 %v964
    %1403 = vmatpush.msra.mxu0 %v962
    %1404 = vmatpush.msra.mxu0 %v960
    %1405 = vmatpush.msra.mxu0 %v958
    %1406 = vmatpush.msra.mxu0 %v956
    %1407 = vmatpush.msra.mxu0 %v954
    %1408 = vmatpush.msra.mxu0 %v952
    %1409 = vmatpush.msra.mxu0 %v950
    %1410 = vmatpush.msra.mxu0 %v948
    %1411 = vmatpush.msra.mxu0 %v946
    %1412 = vmatpush.msra.mxu0 %v944
    %1413 = vmatpush.msra.mxu0 %v942
    %1414 = vmatpush.msra.mxu0 %v940
    %1415 = vmatpush.msra.mxu0 %v938
    %1416 = vmatmul.f32.gmra.mxu0 %v861
    %v1417 = vpop.f32.mrf.mxu0
    %v1418 = vadd.f32 %v1398, %v1417
    %1419 = vdwg.mxu0
    %1420 = vmatpush.msra.mxu0 %v1000
    %1421 = vmatpush.msra.mxu0 %v998
    %1422 = vmatpush.msra.mxu0 %v996
    %1423 = vmatpush.msra.mxu0 %v994
    %1424 = vmatpush.msra.mxu0 %v992
    %1425 = vmatpush.msra.mxu0 %v990
    %1426 = vmatpush.msra.mxu0 %v988
    %1427 = vmatpush.msra.mxu0 %v986
    %1428 = vmatpush.msra.mxu0 %v984
    %1429 = vmatpush.msra.mxu0 %v982
    %1430 = vmatpush.msra.mxu0 %v980
    %1431 = vmatpush.msra.mxu0 %v978
    %1432 = vmatpush.msra.mxu0 %v976
    %1433 = vmatpush.msra.mxu0 %v974
    %1434 = vmatpush.msra.mxu0 %v972
    %1435 = vmatpush.msra.mxu0 %v970
    %1436 = vmatmul.f32.gmra.mxu0 %v862
    %v1437 = vpop.f32.mrf.mxu0
    %v1438 = vadd.f32 %v1418, %v1437
    %1439 = vdwg.mxu0
    %1440 = vmatpush.msra.mxu0 %v1032
    %1441 = vmatpush.msra.mxu0 %v1030
    %1442 = vmatpush.msra.mxu0 %v1028
    %1443 = vmatpush.msra.mxu0 %v1026
    %1444 = vmatpush.msra.mxu0 %v1024
    %1445 = vmatpush.msra.mxu0 %v1022
    %1446 = vmatpush.msra.mxu0 %v1020
    %1447 = vmatpush.msra.mxu0 %v1018
    %1448 = vmatpush.msra.mxu0 %v1016
    %1449 = vmatpush.msra.mxu0 %v1014
    %1450 = vmatpush.msra.mxu0 %v1012
    %1451 = vmatpush.msra.mxu0 %v1010
    %1452 = vmatpush.msra.mxu0 %v1008
    %1453 = vmatpush.msra.mxu0 %v1006
    %1454 = vmatpush.msra.mxu0 %v1004
    %1455 = vmatpush.msra.mxu0 %v1002
    %1456 = vmatmul.f32.gmra.mxu0 %v863
    %v1457 = vpop.f32.mrf.mxu0
    %v1458 = vadd.f32 %v1438, %v1457
    %1459 = vdwg.mxu0
    %1460 = vmatpush.msra.mxu0 %v1064
    %1461 = vmatpush.msra.mxu0 %v1062
    %1462 = vmatpush.msra.mxu0 %v1060
    %1463 = vmatpush.msra.mxu0 %v1058
    %1464 = vmatpush.msra.mxu0 %v1056
    %1465 = vmatpush.msra.mxu0 %v1054
    %1466 = vmatpush.msra.mxu0 %v1052
    %1467 = vmatpush.msra.mxu0 %v1050
    %1468 = vmatpush.msra.mxu0 %v1048
    %1469 = vmatpush.msra.mxu0 %v1046
    %1470 = vmatpush.msra.mxu0 %v1044
    %1471 = vmatpush.msra.mxu0 %v1042
    %1472 = vmatpush.msra.mxu0 %v1040
    %1473 = vmatpush.msra.mxu0 %v1038
    %1474 = vmatpush.msra.mxu0 %v1036
    %1475 = vmatpush.msra.mxu0 %v1034
    %1476 = vmatmul.f32.gmra.mxu0 %v864
    %v1477 = vpop.f32.mrf.mxu0
    %v1478 = vadd.f32 %v1458, %v1477
    %1479 = vdwg.mxu0
    %1480 = vmatpush.msra.mxu0 %v1096
    %1481 = vmatpush.msra.mxu0 %v1094
    %1482 = vmatpush.msra.mxu0 %v1092
    %1483 = vmatpush.msra.mxu0 %v1090
    %1484 = vmatpush.msra.mxu0 %v1088
    %1485 = vmatpush.msra.mxu0 %v1086
    %1486 = vmatpush.msra.mxu0 %v1084
    %1487 = vmatpush.msra.mxu0 %v1082
    %1488 = vmatpush.msra.mxu0 %v1080
    %1489 = vmatpush.msra.mxu0 %v1078
    %1490 = vmatpush.msra.mxu0 %v1076
    %1491 = vmatpush.msra.mxu0 %v1074
    %1492 = vmatpush.msra.mxu0 %v1072
    %1493 = vmatpush.msra.mxu0 %v1070
    %1494 = vmatpush.msra.mxu0 %v1068
    %1495 = vmatpush.msra.mxu0 %v1066
    %1496 = vmatmul.f32.gmra.mxu0 %v865
    %v1497 = vpop.f32.mrf.mxu0
    %v1498 = vadd.f32 %v1478, %v1497
    %1499 = vdwg.mxu0
    %1500 = vmatpush.msra.mxu0 %v1128
    %1501 = vmatpush.msra.mxu0 %v1126
    %1502 = vmatpush.msra.mxu0 %v1124
    %1503 = vmatpush.msra.mxu0 %v1122
    %1504 = vmatpush.msra.mxu0 %v1120
    %1505 = vmatpush.msra.mxu0 %v1118
    %1506 = vmatpush.msra.mxu0 %v1116
    %1507 = vmatpush.msra.mxu0 %v1114
    %1508 = vmatpush.msra.mxu0 %v1112
    %1509 = vmatpush.msra.mxu0 %v1110
    %1510 = vmatpush.msra.mxu0 %v1108
    %1511 = vmatpush.msra.mxu0 %v1106
    %1512 = vmatpush.msra.mxu0 %v1104
    %1513 = vmatpush.msra.mxu0 %v1102
    %1514 = vmatpush.msra.mxu0 %v1100
    %1515 = vmatpush.msra.mxu0 %v1098
    %1516 = vmatmul.f32.gmra.mxu0 %v866
    %v1517 = vpop.f32.mrf.mxu0
    %v1518 = vadd.f32 %v1498, %v1517
    %1519 = vdwg.mxu0
    %1520 = vmatpush.msra.mxu0 %v1160
    %1521 = vmatpush.msra.mxu0 %v1158
    %1522 = vmatpush.msra.mxu0 %v1156
    %1523 = vmatpush.msra.mxu0 %v1154
    %1524 = vmatpush.msra.mxu0 %v1152
    %1525 = vmatpush.msra.mxu0 %v1150
    %1526 = vmatpush.msra.mxu0 %v1148
    %1527 = vmatpush.msra.mxu0 %v1146
    %1528 = vmatpush.msra.mxu0 %v1144
    %1529 = vmatpush.msra.mxu0 %v1142
    %1530 = vmatpush.msra.mxu0 %v1140
    %1531 = vmatpush.msra.mxu0 %v1138
    %1532 = vmatpush.msra.mxu0 %v1136
    %1533 = vmatpush.msra.mxu0 %v1134
    %1534 = vmatpush.msra.mxu0 %v1132
    %1535 = vmatpush.msra.mxu0 %v1130
    %1536 = vmatmul.f32.gmra.mxu0 %v867
    %v1537 = vpop.f32.mrf.mxu0
    %v1538 = vadd.f32 %v1518, %v1537
    %1539 = vdwg.mxu0
    %1540 = vmatpush.msra.mxu0 %v1192
    %1541 = vmatpush.msra.mxu0 %v1190
    %1542 = vmatpush.msra.mxu0 %v1188
    %1543 = vmatpush.msra.mxu0 %v1186
    %1544 = vmatpush.msra.mxu0 %v1184
    %1545 = vmatpush.msra.mxu0 %v1182
    %1546 = vmatpush.msra.mxu0 %v1180
    %1547 = vmatpush.msra.mxu0 %v1178
    %1548 = vmatpush.msra.mxu0 %v1176
    %1549 = vmatpush.msra.mxu0 %v1174
    %1550 = vmatpush.msra.mxu0 %v1172
    %1551 = vmatpush.msra.mxu0 %v1170
    %1552 = vmatpush.msra.mxu0 %v1168
    %1553 = vmatpush.msra.mxu0 %v1166
    %1554 = vmatpush.msra.mxu0 %v1164
    %1555 = vmatpush.msra.mxu0 %v1162
    %1556 = vmatmul.f32.gmra.mxu0 %v868
    %v1557 = vpop.f32.mrf.mxu0
    %v1558 = vadd.f32 %v1538, %v1557
    %1559 = vdwg.mxu0
    %1560 = vmatpush.msra.mxu0 %v1224
    %1561 = vmatpush.msra.mxu0 %v1222
    %1562 = vmatpush.msra.mxu0 %v1220
    %1563 = vmatpush.msra.mxu0 %v1218
    %1564 = vmatpush.msra.mxu0 %v1216
    %1565 = vmatpush.msra.mxu0 %v1214
    %1566 = vmatpush.msra.mxu0 %v1212
    %1567 = vmatpush.msra.mxu0 %v1210
    %1568 = vmatpush.msra.mxu0 %v1208
    %1569 = vmatpush.msra.mxu0 %v1206
    %1570 = vmatpush.msra.mxu0 %v1204
    %1571 = vmatpush.msra.mxu0 %v1202
    %1572 = vmatpush.msra.mxu0 %v1200
    %1573 = vmatpush.msra.mxu0 %v1198
    %1574 = vmatpush.msra.mxu0 %v1196
    %1575 = vmatpush.msra.mxu0 %v1194
    %1576 = vmatmul.f32.gmra.mxu0 %v869
    %v1577 = vpop.f32.mrf.mxu0
    %v1578 = vadd.f32 %v1558, %v1577
    %1579 = vdwg.mxu0
    %1580 = vmatpush.msra.mxu0 %v1256
    %1581 = vmatpush.msra.mxu0 %v1254
    %1582 = vmatpush.msra.mxu0 %v1252
    %1583 = vmatpush.msra.mxu0 %v1250
    %1584 = vmatpush.msra.mxu0 %v1248
    %1585 = vmatpush.msra.mxu0 %v1246
    %1586 = vmatpush.msra.mxu0 %v1244
    %1587 = vmatpush.msra.mxu0 %v1242
    %1588 = vmatpush.msra.mxu0 %v1240
    %1589 = vmatpush.msra.mxu0 %v1238
    %1590 = vmatpush.msra.mxu0 %v1236
    %1591 = vmatpush.msra.mxu0 %v1234
    %1592 = vmatpush.msra.mxu0 %v1232
    %1593 = vmatpush.msra.mxu0 %v1230
    %1594 = vmatpush.msra.mxu0 %v1228
    %1595 = vmatpush.msra.mxu0 %v1226
    %1596 = vmatmul.f32.gmra.mxu0 %v870
    %v1597 = vpop.f32.mrf.mxu0
    %v1598 = vadd.f32 %v1578, %v1597
    %1599 = vdwg.mxu0
    %1600 = vmatpush.msra.mxu0 %v1288
    %1601 = vmatpush.msra.mxu0 %v1286
    %1602 = vmatpush.msra.mxu0 %v1284
    %1603 = vmatpush.msra.mxu0 %v1282
    %1604 = vmatpush.msra.mxu0 %v1280
    %1605 = vmatpush.msra.mxu0 %v1278
    %1606 = vmatpush.msra.mxu0 %v1276
    %1607 = vmatpush.msra.mxu0 %v1274
    %1608 = vmatpush.msra.mxu0 %v1272
    %1609 = vmatpush.msra.mxu0 %v1270
    %1610 = vmatpush.msra.mxu0 %v1268
    %1611 = vmatpush.msra.mxu0 %v1266
    %1612 = vmatpush.msra.mxu0 %v1264
    %1613 = vmatpush.msra.mxu0 %v1262
    %1614 = vmatpush.msra.mxu0 %v1260
    %1615 = vmatpush.msra.mxu0 %v1258
    %1616 = vmatmul.f32.gmra.mxu0 %v871
    %v1617 = vpop.f32.mrf.mxu0
    %v1618 = vadd.f32 %v1598, %v1617
    %1619 = vdwg.mxu0
    %1620 = vmatpush.msra.mxu0 %v1320
    %1621 = vmatpush.msra.mxu0 %v1318
    %1622 = vmatpush.msra.mxu0 %v1316
    %1623 = vmatpush.msra.mxu0 %v1314
    %1624 = vmatpush.msra.mxu0 %v1312
    %1625 = vmatpush.msra.mxu0 %v1310
    %1626 = vmatpush.msra.mxu0 %v1308
    %1627 = vmatpush.msra.mxu0 %v1306
    %1628 = vmatpush.msra.mxu0 %v1304
    %1629 = vmatpush.msra.mxu0 %v1302
    %1630 = vmatpush.msra.mxu0 %v1300
    %1631 = vmatpush.msra.mxu0 %v1298
    %1632 = vmatpush.msra.mxu0 %v1296
    %1633 = vmatpush.msra.mxu0 %v1294
    %1634 = vmatpush.msra.mxu0 %v1292
    %1635 = vmatpush.msra.mxu0 %v1290
    %1636 = vmatmul.f32.gmra.mxu0 %v872
    %v1637 = vpop.f32.mrf.mxu0
    %v1638 = vadd.f32 %v1618, %v1637
    %1639 = vdwg.mxu0
    %1640 = vmatpush.msra.mxu0 %v1352
    %1641 = vmatpush.msra.mxu0 %v1350
    %1642 = vmatpush.msra.mxu0 %v1348
    %1643 = vmatpush.msra.mxu0 %v1346
    %1644 = vmatpush.msra.mxu0 %v1344
    %1645 = vmatpush.msra.mxu0 %v1342
    %1646 = vmatpush.msra.mxu0 %v1340
    %1647 = vmatpush.msra.mxu0 %v1338
    %1648 = vmatpush.msra.mxu0 %v1336
    %1649 = vmatpush.msra.mxu0 %v1334
    %1650 = vmatpush.msra.mxu0 %v1332
    %1651 = vmatpush.msra.mxu0 %v1330
    %1652 = vmatpush.msra.mxu0 %v1328
    %1653 = vmatpush.msra.mxu0 %v1326
    %1654 = vmatpush.msra.mxu0 %v1324
    %1655 = vmatpush.msra.mxu0 %v1322
    %1656 = vmatmul.f32.gmra.mxu0 %v873
    %v1657 = vpop.f32.mrf.mxu0
    %v1658 = vadd.f32 %v1638, %v1657
    %1659 = vdwg.mxu0
    %1660 = vmatpush.msra.mxu0 %v905
    %1661 = vmatpush.msra.mxu0 %v903
    %1662 = vmatpush.msra.mxu0 %v901
    %1663 = vmatpush.msra.mxu0 %v899
    %1664 = vmatpush.msra.mxu0 %v897
    %1665 = vmatpush.msra.mxu0 %v895
    %1666 = vmatpush.msra.mxu0 %v893
    %1667 = vmatpush.msra.mxu0 %v891
    %1668 = vmatpush.msra.mxu0 %v889
    %1669 = vmatpush.msra.mxu0 %v887
    %1670 = vmatpush.msra.mxu0 %v885
    %1671 = vmatpush.msra.mxu0 %v883
    %1672 = vmatpush.msra.mxu0 %v881
    %1673 = vmatpush.msra.mxu0 %v879
    %1674 = vmatpush.msra.mxu0 %v877
    %1675 = vmatpush.msra.mxu0 %v875
    %1676 = vmatmul.f32.gmra.mxu0 %v859
    %v1677 = vpop.f32.mrf.mxu0
    %v1678 = vadd.f32 %v1357, %v1677
    %1679 = vdwg.mxu0
    %1680 = vmatpush.msra.mxu0 %v937
    %1681 = vmatpush.msra.mxu0 %v935
    %1682 = vmatpush.msra.mxu0 %v933
    %1683 = vmatpush.msra.mxu0 %v931
    %1684 = vmatpush.msra.mxu0 %v929
    %1685 = vmatpush.msra.mxu0 %v927
    %1686 = vmatpush.msra.mxu0 %v925
    %1687 = vmatpush.msra.mxu0 %v923
    %1688 = vmatpush.msra.mxu0 %v921
    %1689 = vmatpush.msra.mxu0 %v919
    %1690 = vmatpush.msra.mxu0 %v917
    %1691 = vmatpush.msra.mxu0 %v915
    %1692 = vmatpush.msra.mxu0 %v913
    %1693 = vmatpush.msra.mxu0 %v911
    %1694 = vmatpush.msra.mxu0 %v909
    %1695 = vmatpush.msra.mxu0 %v907
    %1696 = vmatmul.f32.gmra.mxu0 %v860
    %v1697 = vpop.f32.mrf.mxu0
    %v1698 = vadd.f32 %v1678, %v1697
    %1699 = vdwg.mxu0
    %1700 = vmatpush.msra.mxu0 %v969
    %1701 = vmatpush.msra.mxu0 %v967
    %1702 = vmatpush.msra.mxu0 %v965
    %1703 = vmatpush.msra.mxu0 %v963
    %1704 = vmatpush.msra.mxu0 %v961
    %1705 = vmatpush.msra.mxu0 %v959
    %1706 = vmatpush.msra.mxu0 %v957
    %1707 = vmatpush.msra.mxu0 %v955
    %1708 = vmatpush.msra.mxu0 %v953
    %1709 = vmatpush.msra.mxu0 %v951
    %1710 = vmatpush.msra.mxu0 %v949
    %1711 = vmatpush.msra.mxu0 %v947
    %1712 = vmatpush.msra.mxu0 %v945
    %1713 = vmatpush.msra.mxu0 %v943
    %1714 = vmatpush.msra.mxu0 %v941
    %1715 = vmatpush.msra.mxu0 %v939
    %1716 = vmatmul.f32.gmra.mxu0 %v861
    %v1717 = vpop.f32.mrf.mxu0
    %v1718 = vadd.f32 %v1698, %v1717
    %1719 = vdwg.mxu0
    %1720 = vmatpush.msra.mxu0 %v1001
    %1721 = vmatpush.msra.mxu0 %v999
    %1722 = vmatpush.msra.mxu0 %v997
    %1723 = vmatpush.msra.mxu0 %v995
    %1724 = vmatpush.msra.mxu0 %v993
    %1725 = vmatpush.msra.mxu0 %v991
    %1726 = vmatpush.msra.mxu0 %v989
    %1727 = vmatpush.msra.mxu0 %v987
    %1728 = vmatpush.msra.mxu0 %v985
    %1729 = vmatpush.msra.mxu0 %v983
    %1730 = vmatpush.msra.mxu0 %v981
    %1731 = vmatpush.msra.mxu0 %v979
    %1732 = vmatpush.msra.mxu0 %v977
    %1733 = vmatpush.msra.mxu0 %v975
    %1734 = vmatpush.msra.mxu0 %v973
    %1735 = vmatpush.msra.mxu0 %v971
    %1736 = vmatmul.f32.gmra.mxu0 %v862
    %v1737 = vpop.f32.mrf.mxu0
    %v1738 = vadd.f32 %v1718, %v1737
    %1739 = vdwg.mxu0
    %1740 = vmatpush.msra.mxu0 %v1033
    %1741 = vmatpush.msra.mxu0 %v1031
    %1742 = vmatpush.msra.mxu0 %v1029
    %1743 = vmatpush.msra.mxu0 %v1027
    %1744 = vmatpush.msra.mxu0 %v1025
    %1745 = vmatpush.msra.mxu0 %v1023
    %1746 = vmatpush.msra.mxu0 %v1021
    %1747 = vmatpush.msra.mxu0 %v1019
    %1748 = vmatpush.msra.mxu0 %v1017
    %1749 = vmatpush.msra.mxu0 %v1015
    %1750 = vmatpush.msra.mxu0 %v1013
    %1751 = vmatpush.msra.mxu0 %v1011
    %1752 = vmatpush.msra.mxu0 %v1009
    %1753 = vmatpush.msra.mxu0 %v1007
    %1754 = vmatpush.msra.mxu0 %v1005
    %1755 = vmatpush.msra.mxu0 %v1003
    %1756 = vmatmul.f32.gmra.mxu0 %v863
    %v1757 = vpop.f32.mrf.mxu0
    %v1758 = vadd.f32 %v1738, %v1757
    %1759 = vdwg.mxu0
    %1760 = vmatpush.msra.mxu0 %v1065
    %1761 = vmatpush.msra.mxu0 %v1063
    %1762 = vmatpush.msra.mxu0 %v1061
    %1763 = vmatpush.msra.mxu0 %v1059
    %1764 = vmatpush.msra.mxu0 %v1057
    %1765 = vmatpush.msra.mxu0 %v1055
    %1766 = vmatpush.msra.mxu0 %v1053
    %1767 = vmatpush.msra.mxu0 %v1051
    %1768 = vmatpush.msra.mxu0 %v1049
    %1769 = vmatpush.msra.mxu0 %v1047
    %1770 = vmatpush.msra.mxu0 %v1045
    %1771 = vmatpush.msra.mxu0 %v1043
    %1772 = vmatpush.msra.mxu0 %v1041
    %1773 = vmatpush.msra.mxu0 %v1039
    %1774 = vmatpush.msra.mxu0 %v1037
    %1775 = vmatpush.msra.mxu0 %v1035
    %1776 = vmatmul.f32.gmra.mxu0 %v864
    %v1777 = vpop.f32.mrf.mxu0
    %v1778 = vadd.f32 %v1758, %v1777
    %1779 = vdwg.mxu0
    %1780 = vmatpush.msra.mxu0 %v1097
    %1781 = vmatpush.msra.mxu0 %v1095
    %1782 = vmatpush.msra.mxu0 %v1093
    %1783 = vmatpush.msra.mxu0 %v1091
    %1784 = vmatpush.msra.mxu0 %v1089
    %1785 = vmatpush.msra.mxu0 %v1087
    %1786 = vmatpush.msra.mxu0 %v1085
    %1787 = vmatpush.msra.mxu0 %v1083
    %1788 = vmatpush.msra.mxu0 %v1081
    %1789 = vmatpush.msra.mxu0 %v1079
    %1790 = vmatpush.msra.mxu0 %v1077
    %1791 = vmatpush.msra.mxu0 %v1075
    %1792 = vmatpush.msra.mxu0 %v1073
    %1793 = vmatpush.msra.mxu0 %v1071
    %1794 = vmatpush.msra.mxu0 %v1069
    %1795 = vmatpush.msra.mxu0 %v1067
    %1796 = vmatmul.f32.gmra.mxu0 %v865
    %v1797 = vpop.f32.mrf.mxu0
    %v1798 = vadd.f32 %v1778, %v1797
    %1799 = vdwg.mxu0
    %1800 = vmatpush.msra.mxu0 %v1129
    %1801 = vmatpush.msra.mxu0 %v1127
    %1802 = vmatpush.msra.mxu0 %v1125
    %1803 = vmatpush.msra.mxu0 %v1123
    %1804 = vmatpush.msra.mxu0 %v1121
    %1805 = vmatpush.msra.mxu0 %v1119
    %1806 = vmatpush.msra.mxu0 %v1117
    %1807 = vmatpush.msra.mxu0 %v1115
    %1808 = vmatpush.msra.mxu0 %v1113
    %1809 = vmatpush.msra.mxu0 %v1111
    %1810 = vmatpush.msra.mxu0 %v1109
    %1811 = vmatpush.msra.mxu0 %v1107
    %1812 = vmatpush.msra.mxu0 %v1105
    %1813 = vmatpush.msra.mxu0 %v1103
    %1814 = vmatpush.msra.mxu0 %v1101
    %1815 = vmatpush.msra.mxu0 %v1099
    %1816 = vmatmul.f32.gmra.mxu0 %v866
    %v1817 = vpop.f32.mrf.mxu0
    %v1818 = vadd.f32 %v1798, %v1817
    %1819 = vdwg.mxu0
    %1820 = vmatpush.msra.mxu0 %v1161
    %1821 = vmatpush.msra.mxu0 %v1159
    %1822 = vmatpush.msra.mxu0 %v1157
    %1823 = vmatpush.msra.mxu0 %v1155
    %1824 = vmatpush.msra.mxu0 %v1153
    %1825 = vmatpush.msra.mxu0 %v1151
    %1826 = vmatpush.msra.mxu0 %v1149
    %1827 = vmatpush.msra.mxu0 %v1147
    %1828 = vmatpush.msra.mxu0 %v1145
    %1829 = vmatpush.msra.mxu0 %v1143
    %1830 = vmatpush.msra.mxu0 %v1141
    %1831 = vmatpush.msra.mxu0 %v1139
    %1832 = vmatpush.msra.mxu0 %v1137
    %1833 = vmatpush.msra.mxu0 %v1135
    %1834 = vmatpush.msra.mxu0 %v1133
    %1835 = vmatpush.msra.mxu0 %v1131
    %1836 = vmatmul.f32.gmra.mxu0 %v867
    %v1837 = vpop.f32.mrf.mxu0
    %v1838 = vadd.f32 %v1818, %v1837
    %1839 = vdwg.mxu0
    %1840 = vmatpush.msra.mxu0 %v1193
    %1841 = vmatpush.msra.mxu0 %v1191
    %1842 = vmatpush.msra.mxu0 %v1189
    %1843 = vmatpush.msra.mxu0 %v1187
    %1844 = vmatpush.msra.mxu0 %v1185
    %1845 = vmatpush.msra.mxu0 %v1183
    %1846 = vmatpush.msra.mxu0 %v1181
    %1847 = vmatpush.msra.mxu0 %v1179
    %1848 = vmatpush.msra.mxu0 %v1177
    %1849 = vmatpush.msra.mxu0 %v1175
    %1850 = vmatpush.msra.mxu0 %v1173
    %1851 = vmatpush.msra.mxu0 %v1171
    %1852 = vmatpush.msra.mxu0 %v1169
    %1853 = vmatpush.msra.mxu0 %v1167
    %1854 = vmatpush.msra.mxu0 %v1165
    %1855 = vmatpush.msra.mxu0 %v1163
    %1856 = vmatmul.f32.gmra.mxu0 %v868
    %v1857 = vpop.f32.mrf.mxu0
    %v1858 = vadd.f32 %v1838, %v1857
    %1859 = vdwg.mxu0
    %1860 = vmatpush.msra.mxu0 %v1225
    %1861 = vmatpush.msra.mxu0 %v1223
    %1862 = vmatpush.msra.mxu0 %v1221
    %1863 = vmatpush.msra.mxu0 %v1219
    %1864 = vmatpush.msra.mxu0 %v1217
    %1865 = vmatpush.msra.mxu0 %v1215
    %1866 = vmatpush.msra.mxu0 %v1213
    %1867 = vmatpush.msra.mxu0 %v1211
    %1868 = vmatpush.msra.mxu0 %v1209
    %1869 = vmatpush.msra.mxu0 %v1207
    %1870 = vmatpush.msra.mxu0 %v1205
    %1871 = vmatpush.msra.mxu0 %v1203
    %1872 = vmatpush.msra.mxu0 %v1201
    %1873 = vmatpush.msra.mxu0 %v1199
    %1874 = vmatpush.msra.mxu0 %v1197
    %1875 = vmatpush.msra.mxu0 %v1195
    %1876 = vmatmul.f32.gmra.mxu0 %v869
    %v1877 = vpop.f32.mrf.mxu0
    %v1878 = vadd.f32 %v1858, %v1877
    %1879 = vdwg.mxu0
    %1880 = vmatpush.msra.mxu0 %v1257
    %1881 = vmatpush.msra.mxu0 %v1255
    %1882 = vmatpush.msra.mxu0 %v1253
    %1883 = vmatpush.msra.mxu0 %v1251
    %1884 = vmatpush.msra.mxu0 %v1249
    %1885 = vmatpush.msra.mxu0 %v1247
    %1886 = vmatpush.msra.mxu0 %v1245
    %1887 = vmatpush.msra.mxu0 %v1243
    %1888 = vmatpush.msra.mxu0 %v1241
    %1889 = vmatpush.msra.mxu0 %v1239
    %1890 = vmatpush.msra.mxu0 %v1237
    %1891 = vmatpush.msra.mxu0 %v1235
    %1892 = vmatpush.msra.mxu0 %v1233
    %1893 = vmatpush.msra.mxu0 %v1231
    %1894 = vmatpush.msra.mxu0 %v1229
    %1895 = vmatpush.msra.mxu0 %v1227
    %1896 = vmatmul.f32.gmra.mxu0 %v870
    %v1897 = vpop.f32.mrf.mxu0
    %v1898 = vadd.f32 %v1878, %v1897
    %1899 = vdwg.mxu0
    %1900 = vmatpush.msra.mxu0 %v1289
    %1901 = vmatpush.msra.mxu0 %v1287
    %1902 = vmatpush.msra.mxu0 %v1285
    %1903 = vmatpush.msra.mxu0 %v1283
    %1904 = vmatpush.msra.mxu0 %v1281
    %1905 = vmatpush.msra.mxu0 %v1279
    %1906 = vmatpush.msra.mxu0 %v1277
    %1907 = vmatpush.msra.mxu0 %v1275
    %1908 = vmatpush.msra.mxu0 %v1273
    %1909 = vmatpush.msra.mxu0 %v1271
    %1910 = vmatpush.msra.mxu0 %v1269
    %1911 = vmatpush.msra.mxu0 %v1267
    %1912 = vmatpush.msra.mxu0 %v1265
    %1913 = vmatpush.msra.mxu0 %v1263
    %1914 = vmatpush.msra.mxu0 %v1261
    %1915 = vmatpush.msra.mxu0 %v1259
    %1916 = vmatmul.f32.gmra.mxu0 %v871
    %v1917 = vpop.f32.mrf.mxu0
    %v1918 = vadd.f32 %v1898, %v1917
    %1919 = vdwg.mxu0
    %1920 = vmatpush.msra.mxu0 %v1321
    %1921 = vmatpush.msra.mxu0 %v1319
    %1922 = vmatpush.msra.mxu0 %v1317
    %1923 = vmatpush.msra.mxu0 %v1315
    %1924 = vmatpush.msra.mxu0 %v1313
    %1925 = vmatpush.msra.mxu0 %v1311
    %1926 = vmatpush.msra.mxu0 %v1309
    %1927 = vmatpush.msra.mxu0 %v1307
    %1928 = vmatpush.msra.mxu0 %v1305
    %1929 = vmatpush.msra.mxu0 %v1303
    %1930 = vmatpush.msra.mxu0 %v1301
    %1931 = vmatpush.msra.mxu0 %v1299
    %1932 = vmatpush.msra.mxu0 %v1297
    %1933 = vmatpush.msra.mxu0 %v1295
    %1934 = vmatpush.msra.mxu0 %v1293
    %1935 = vmatpush.msra.mxu0 %v1291
    %1936 = vmatmul.f32.gmra.mxu0 %v872
    %v1937 = vpop.f32.mrf.mxu0
    %v1938 = vadd.f32 %v1918, %v1937
    %1939 = vdwg.mxu0
    %1940 = vmatpush.msra.mxu0 %v1353
    %1941 = vmatpush.msra.mxu0 %v1351
    %1942 = vmatpush.msra.mxu0 %v1349
    %1943 = vmatpush.msra.mxu0 %v1347
    %1944 = vmatpush.msra.mxu0 %v1345
    %1945 = vmatpush.msra.mxu0 %v1343
    %1946 = vmatpush.msra.mxu0 %v1341
    %1947 = vmatpush.msra.mxu0 %v1339
    %1948 = vmatpush.msra.mxu0 %v1337
    %1949 = vmatpush.msra.mxu0 %v1335
    %1950 = vmatpush.msra.mxu0 %v1333
    %1951 = vmatpush.msra.mxu0 %v1331
    %1952 = vmatpush.msra.mxu0 %v1329
    %1953 = vmatpush.msra.mxu0 %v1327
    %1954 = vmatpush.msra.mxu0 %v1325
    %1955 = vmatpush.msra.mxu0 %v1323
    %1956 = vmatmul.f32.gmra.mxu0 %v873
    %v1957 = vpop.f32.mrf.mxu0
    %v1958 = vadd.f32 %v1938, %v1957
    %1959 = vdwg.mxu0
    %v1960 = vmax.f32 %v1658, 0.0
    %v1961 = vmax.f32 %v1958, 0.0
    %1962 = vst [vmem:[#allocation3] sm:$0xff] 0.0
    %1963 = vst [vmem:[#allocation3 + $0x8] sm:$0xff] 0.0
    %1964 = vst [vmem:[#allocation3 + $0x10] sm:$0xff] 0.0
    %1965 = vst [vmem:[#allocation3 + $0x18] sm:$0xff] 0.0
    %1966 = vst [vmem:[#allocation3 + $0x20] sm:$0xff] 0.0
    %1967 = vst [vmem:[#allocation3 + $0x28] sm:$0xff] 0.0
    %1968 = vst [vmem:[#allocation3 + $0x30] sm:$0xff] 0.0
    %1969 = vst [vmem:[#allocation3 + $0x38] sm:$0xff] 0.0
    %v1972 = vrot.slane %v1961, 6
    %v1973 = vsel %vm540, %v1960, %v1972
    %1975 = vst [vmem:[#allocation3 + $0x12] sm:$0xf] %v1973
    %1976 = vst.sshfl [vmem:[#allocation1] sm:$0xff pattern:$0x73625140] %v1960
    %1977 = vst.sshfl [vmem:[#allocation1 + $0x8] sm:$0xff pattern:$0x73625140] %v1961
    %s1978 = scalar_lea.vmem [#allocation1], 1
    %v1979 = vld [vmem:[%s1978] ss:$4 sm:$0xff]
    %1981 = vst [vmem:[#allocation3 + $0x1a] sm:$0xf] %v1979
    %1982 = vst.sshfl [vmem:[#allocation1] sm:$0xff pattern:$0x73625140] %v1960
    %1983 = vst.sshfl [vmem:[#allocation1 + $0x8] sm:$0xff pattern:$0x73625140] %v1961
    %s1984 = scalar_lea.vmem [#allocation1], 2
    %v1985 = vld [vmem:[%s1984] ss:$4 sm:$0xff]
    %1987 = vst [vmem:[#allocation3 + $0x22] sm:$0xf] %v1985
    %1988 = vst.sshfl [vmem:[#allocation1] sm:$0xff pattern:$0x73625140] %v1960
    %1989 = vst.sshfl [vmem:[#allocation1 + $0x8] sm:$0xff pattern:$0x73625140] %v1961
    %s1990 = scalar_lea.vmem [#allocation1], 3
    %v1991 = vld [vmem:[%s1990] ss:$4 sm:$0xff]
    %1993 = vst [vmem:[#allocation3 + $0x2a] sm:$0xf] %v1991
    %v1994 = vld [vmem:[#allocation3] sm:$0xff]
    %v1995 = vld [vmem:[#allocation3 + $0x8] sm:$0xff]
    %v1996 = vld [vmem:[#allocation3 + $0x10] sm:$0xff]
    %v1997 = vld [vmem:[#allocation3 + $0x18] sm:$0xff]
    %v1998 = vld [vmem:[#allocation3 + $0x20] sm:$0xff]
    %2004 = vst [vmem:[#allocation1] ss:$2 sm:$0xff] %v1994
    %s2005 = scalar_lea.vmem [#allocation1], 16
    %2006 = vst [vmem:[%s2005] ss:$2 sm:$0xff] %v1995
    %s2007 = scalar_lea.vmem [#allocation1], 32
    %2008 = vst [vmem:[%s2007] ss:$2 sm:$0xff] %v1996
    %s2009 = scalar_lea.vmem [#allocation1], 48
    %2010 = vst [vmem:[%s2009] ss:$2 sm:$0xff] %v1997
    %v2011 = vld.sshfl [vmem:[#allocation1] sm:$0xff pattern:$0x75643120]
    %v2012 = vld.sshfl [vmem:[#allocation1 + $0x8] sm:$0xff pattern:$0x75643120]
    %v2013 = vld.sshfl [vmem:[#allocation1 + $0x10] sm:$0xff pattern:$0x75643120]
    %v2014 = vld.sshfl [vmem:[#allocation1 + $0x18] sm:$0xff pattern:$0x75643120]
    %v2015 = vld.sshfl [vmem:[#allocation1 + $0x20] sm:$0xff pattern:$0x75643120]
    %v2016 = vld.sshfl [vmem:[#allocation1 + $0x28] sm:$0xff pattern:$0x75643120]
    %v2017 = vld.sshfl [vmem:[#allocation1 + $0x30] sm:$0xff pattern:$0x75643120]
    %v2018 = vld.sshfl [vmem:[#allocation1 + $0x38] sm:$0xff pattern:$0x75643120]
    %2019 = vst [vmem:[#allocation1] ss:$2 sm:$0xff] %v1998
    %v2020 = vld.sshfl [vmem:[#allocation1] sm:$0xff pattern:$0x75643120]
    %v2021 = vld.sshfl [vmem:[#allocation1 + $0x8] sm:$0xff pattern:$0x75643120]
    %2032 = vst [vmem:[#allocation6] sm:$0x33] %v2011
    %2033 = vst [vmem:[#allocation6 + $0x8] sm:$0x33] %v2012
    %2034 = vst [vmem:[#allocation6 + $0x10] sm:$0x33] %v2013
    %2035 = vst [vmem:[#allocation6 + $0x18] sm:$0x33] %v2014
    %2036 = vst [vmem:[#allocation6 + $0x20] sm:$0x33] %v2015
    %2037 = vst [vmem:[#allocation6 + $0x28] sm:$0x33] %v2016
    %2038 = vst [vmem:[#allocation6 + $0x30] sm:$0x33] %v2017
    %2039 = vst [vmem:[#allocation6 + $0x38] sm:$0x33] %v2018
    %2040 = vst [vmem:[#allocation6 + $0x40] sm:$0x33] %v2020
    %2041 = vst [vmem:[#allocation6 + $0x48] sm:$0x33] %v2021
    %v2042 = vld [vmem:[#allocation3 + $0x10] sm:$0xff]
    %v2043 = vld [vmem:[#allocation3 + $0x18] sm:$0xff]
    %v2044 = vld [vmem:[#allocation3 + $0x20] sm:$0xff]
    %v2045 = vld [vmem:[#allocation3 + $0x28] sm:$0xff]
    %v2046 = vld [vmem:[#allocation3 + $0x30] sm:$0xff]
    %s2052 = scalar_lea.vmem [#allocation1], 1
    %2053 = vst [vmem:[%s2052] ss:$2 sm:$0xff] %v2042
    %s2054 = scalar_lea.vmem [#allocation1], 17
    %2055 = vst [vmem:[%s2054] ss:$2 sm:$0xff] %v2043
    %s2056 = scalar_lea.vmem [#allocation1], 33
    %2057 = vst [vmem:[%s2056] ss:$2 sm:$0xff] %v2044
    %s2058 = scalar_lea.vmem [#allocation1], 49
    %2059 = vst [vmem:[%s2058] ss:$2 sm:$0xff] %v2045
    %v2060 = vld.sshfl [vmem:[#allocation1] sm:$0xff pattern:$0x75643120]
    %v2061 = vld.sshfl [vmem:[#allocation1 + $0x8] sm:$0xff pattern:$0x75643120]
    %v2062 = vld.sshfl [vmem:[#allocation1 + $0x10] sm:$0xff pattern:$0x75643120]
    %v2063 = vld.sshfl [vmem:[#allocation1 + $0x18] sm:$0xff pattern:$0x75643120]
    %v2064 = vld.sshfl [vmem:[#allocation1 + $0x20] sm:$0xff pattern:$0x75643120]
    %v2065 = vld.sshfl [vmem:[#allocation1 + $0x28] sm:$0xff pattern:$0x75643120]
    %v2066 = vld.sshfl [vmem:[#allocation1 + $0x30] sm:$0xff pattern:$0x75643120]
    %v2067 = vld.sshfl [vmem:[#allocation1 + $0x38] sm:$0xff pattern:$0x75643120]
    %2068 = vst [vmem:[%s2052] ss:$2 sm:$0xff] %v2046
    %v2069 = vld.sshfl [vmem:[#allocation1] sm:$0xff pattern:$0x75643120]
    %v2070 = vld.sshfl [vmem:[#allocation1 + $0x8] sm:$0xff pattern:$0x75643120]
    %2081 = vst [vmem:[#allocation6] sm:$0xcc] %v2060
    %2082 = vst [vmem:[#allocation6 + $0x8] sm:$0xcc] %v2061
    %2083 = vst [vmem:[#allocation6 + $0x10] sm:$0xcc] %v2062
    %2084 = vst [vmem:[#allocation6 + $0x18] sm:$0xcc] %v2063
    %2085 = vst [vmem:[#allocation6 + $0x20] sm:$0xcc] %v2064
    %2086 = vst [vmem:[#allocation6 + $0x28] sm:$0xcc] %v2065
    %2087 = vst [vmem:[#allocation6 + $0x30] sm:$0xcc] %v2066
    %2088 = vst [vmem:[#allocation6 + $0x38] sm:$0xcc] %v2067
    %2089 = vst [vmem:[#allocation6 + $0x40] sm:$0xcc] %v2069
    %2090 = vst [vmem:[#allocation6 + $0x48] sm:$0xcc] %v2070
    %v2091 = vld [vmem:[#allocation6] sm:$0xff]
    %v2092 = vld [vmem:[#allocation6 + $0x8] sm:$0xff]
    %v2093 = vld [vmem:[#allocation6 + $0x10] sm:$0xff]
    %v2094 = vld [vmem:[#allocation6 + $0x18] sm:$0xff]
    %v2095 = vld [vmem:[#allocation6 + $0x20] sm:$0xff]
    %v2096 = vld [vmem:[#allocation6 + $0x28] sm:$0xff]
    %v2097 = vld [vmem:[#allocation6 + $0x30] sm:$0xff]
    %v2098 = vld [vmem:[#allocation6 + $0x38] sm:$0xff]
    %v2099 = vld [vmem:[#allocation6 + $0x40] sm:$0xff]
    %v2100 = vld [vmem:[#allocation6 + $0x48] sm:$0xff]
    %v2101 = vld [vmem:[%s5] sm:$0xff]
    %v2102 = vld [vmem:[%s5 + $0x8] sm:$0xff]
    %v2103 = vld [vmem:[%s5 + $0x10] sm:$0xff]
    %v2104 = vld [vmem:[%s5 + $0x18] sm:$0xff]
    %v2105 = vld [vmem:[%s5 + $0x20] sm:$0xff]
    %v2106 = vld [vmem:[%s5 + $0x28] sm:$0xff]
    %v2107 = vld [vmem:[%s5 + $0x30] sm:$0xff]
    %v2108 = vld [vmem:[%s5 + $0x38] sm:$0xff]
    %v2109 = vld [vmem:[%s5 + $0x40] sm:$0xff]
    %v2110 = vld [vmem:[%s5 + $0x48] sm:$0xff]
    %v2111 = vld [vmem:[%s5 + $0x50] sm:$0xff]
    %v2112 = vld [vmem:[%s5 + $0x58] sm:$0xff]
    %v2113 = vld [vmem:[%s5 + $0x60] sm:$0xff]
    %v2114 = vld [vmem:[%s5 + $0x68] sm:$0xff]
    %v2115 = vld [vmem:[%s5 + $0x70] sm:$0xff]
    %v2116 = vld [vmem:[%s5 + $0x78] sm:$0xff]
    %v2117 = vld [vmem:[%s5 + $0x80] sm:$0xff]
    %v2118 = vld [vmem:[%s5 + $0x88] sm:$0xff]
    %v2119 = vld [vmem:[%s5 + $0x90] sm:$0xff]
    %v2120 = vld [vmem:[%s5 + $0x98] sm:$0xff]
    %v2121 = vld [vmem:[%s5 + $0xa0] sm:$0xff]
    %v2122 = vld [vmem:[%s5 + $0xa8] sm:$0xff]
    %v2123 = vld [vmem:[%s5 + $0xb0] sm:$0xff]
    %v2124 = vld [vmem:[%s5 + $0xb8] sm:$0xff]
    %v2125 = vld [vmem:[%s5 + $0xc0] sm:$0xff]
    %v2126 = vld [vmem:[%s5 + $0xc8] sm:$0xff]
    %v2127 = vld [vmem:[%s5 + $0xd0] sm:$0xff]
    %v2128 = vld [vmem:[%s5 + $0xd8] sm:$0xff]
    %v2129 = vld [vmem:[%s5 + $0xe0] sm:$0xff]
    %v2130 = vld [vmem:[%s5 + $0xe8] sm:$0xff]
    %v2131 = vld [vmem:[%s5 + $0xf0] sm:$0xff]
    %v2132 = vld [vmem:[%s5 + $0xf8] sm:$0xff]
    %v2133 = vld [vmem:[%s5 + $0x100] sm:$0xff]
    %v2134 = vld [vmem:[%s5 + $0x108] sm:$0xff]
    %v2135 = vld [vmem:[%s5 + $0x110] sm:$0xff]
    %v2136 = vld [vmem:[%s5 + $0x118] sm:$0xff]
    %v2137 = vld [vmem:[%s5 + $0x120] sm:$0xff]
    %v2138 = vld [vmem:[%s5 + $0x128] sm:$0xff]
    %v2139 = vld [vmem:[%s5 + $0x130] sm:$0xff]
    %v2140 = vld [vmem:[%s5 + $0x138] sm:$0xff]
    %v2141 = vld [vmem:[%s5 + $0x140] sm:$0xff]
    %v2142 = vld [vmem:[%s5 + $0x148] sm:$0xff]
    %v2143 = vld [vmem:[%s5 + $0x150] sm:$0xff]
    %v2144 = vld [vmem:[%s5 + $0x158] sm:$0xff]
    %v2145 = vld [vmem:[%s5 + $0x160] sm:$0xff]
    %v2146 = vld [vmem:[%s5 + $0x168] sm:$0xff]
    %v2147 = vld [vmem:[%s5 + $0x170] sm:$0xff]
    %v2148 = vld [vmem:[%s5 + $0x178] sm:$0xff]
    %v2149 = vld [vmem:[%s5 + $0x180] sm:$0xff]
    %v2150 = vld [vmem:[%s5 + $0x188] sm:$0xff]
    %v2151 = vld [vmem:[%s5 + $0x190] sm:$0xff]
    %v2152 = vld [vmem:[%s5 + $0x198] sm:$0xff]
    %v2153 = vld [vmem:[%s5 + $0x1a0] sm:$0xff]
    %v2154 = vld [vmem:[%s5 + $0x1a8] sm:$0xff]
    %v2155 = vld [vmem:[%s5 + $0x1b0] sm:$0xff]
    %v2156 = vld [vmem:[%s5 + $0x1b8] sm:$0xff]
    %v2157 = vld [vmem:[%s5 + $0x1c0] sm:$0xff]
    %v2158 = vld [vmem:[%s5 + $0x1c8] sm:$0xff]
    %v2159 = vld [vmem:[%s5 + $0x1d0] sm:$0xff]
    %v2160 = vld [vmem:[%s5 + $0x1d8] sm:$0xff]
    %v2161 = vld [vmem:[%s5 + $0x1e0] sm:$0xff]
    %v2162 = vld [vmem:[%s5 + $0x1e8] sm:$0xff]
    %v2163 = vld [vmem:[%s5 + $0x1f0] sm:$0xff]
    %v2164 = vld [vmem:[%s5 + $0x1f8] sm:$0xff]
    %v2165 = vld [vmem:[%s5 + $0x200] sm:$0xff]
    %v2166 = vld [vmem:[%s5 + $0x208] sm:$0xff]
    %v2167 = vld [vmem:[%s5 + $0x210] sm:$0xff]
    %v2168 = vld [vmem:[%s5 + $0x218] sm:$0xff]
    %v2169 = vld [vmem:[%s5 + $0x220] sm:$0xff]
    %v2170 = vld [vmem:[%s5 + $0x228] sm:$0xff]
    %v2171 = vld [vmem:[%s5 + $0x230] sm:$0xff]
    %v2172 = vld [vmem:[%s5 + $0x238] sm:$0xff]
    %v2173 = vld [vmem:[%s5 + $0x240] sm:$0xff]
    %v2174 = vld [vmem:[%s5 + $0x248] sm:$0xff]
    %v2175 = vld [vmem:[%s5 + $0x250] sm:$0xff]
    %v2176 = vld [vmem:[%s5 + $0x258] sm:$0xff]
    %v2177 = vld [vmem:[%s5 + $0x260] sm:$0xff]
    %v2178 = vld [vmem:[%s5 + $0x268] sm:$0xff]
    %v2179 = vld [vmem:[%s5 + $0x270] sm:$0xff]
    %v2180 = vld [vmem:[%s5 + $0x278] sm:$0xff]
    %v2181 = vld [vmem:[%s5 + $0x280] sm:$0xff]
    %v2182 = vld [vmem:[%s5 + $0x288] sm:$0xff]
    %v2183 = vld [vmem:[%s5 + $0x290] sm:$0xff]
    %v2184 = vld [vmem:[%s5 + $0x298] sm:$0xff]
    %v2185 = vld [vmem:[%s5 + $0x2a0] sm:$0xff]
    %v2186 = vld [vmem:[%s5 + $0x2a8] sm:$0xff]
    %v2187 = vld [vmem:[%s5 + $0x2b0] sm:$0xff]
    %v2188 = vld [vmem:[%s5 + $0x2b8] sm:$0xff]
    %v2189 = vld [vmem:[%s5 + $0x2c0] sm:$0xff]
    %v2190 = vld [vmem:[%s5 + $0x2c8] sm:$0xff]
    %v2191 = vld [vmem:[%s5 + $0x2d0] sm:$0xff]
    %v2192 = vld [vmem:[%s5 + $0x2d8] sm:$0xff]
    %v2193 = vld [vmem:[%s5 + $0x2e0] sm:$0xff]
    %v2194 = vld [vmem:[%s5 + $0x2e8] sm:$0xff]
    %v2195 = vld [vmem:[%s5 + $0x2f0] sm:$0xff]
    %v2196 = vld [vmem:[%s5 + $0x2f8] sm:$0xff]
    %v2197 = vld [vmem:[%s5 + $0x300] sm:$0xff]
    %v2198 = vld [vmem:[%s5 + $0x308] sm:$0xff]
    %v2199 = vld [vmem:[%s5 + $0x310] sm:$0xff]
    %v2200 = vld [vmem:[%s5 + $0x318] sm:$0xff]
    %v2201 = vld [vmem:[%s5 + $0x320] sm:$0xff]
    %v2202 = vld [vmem:[%s5 + $0x328] sm:$0xff]
    %v2203 = vld [vmem:[%s5 + $0x330] sm:$0xff]
    %v2204 = vld [vmem:[%s5 + $0x338] sm:$0xff]
    %v2205 = vld [vmem:[%s5 + $0x340] sm:$0xff]
    %v2206 = vld [vmem:[%s5 + $0x348] sm:$0xff]
    %v2207 = vld [vmem:[%s5 + $0x350] sm:$0xff]
    %v2208 = vld [vmem:[%s5 + $0x358] sm:$0xff]
    %v2209 = vld [vmem:[%s5 + $0x360] sm:$0xff]
    %v2210 = vld [vmem:[%s5 + $0x368] sm:$0xff]
    %v2211 = vld [vmem:[%s5 + $0x370] sm:$0xff]
    %v2212 = vld [vmem:[%s5 + $0x378] sm:$0xff]
    %v2213 = vld [vmem:[%s5 + $0x380] sm:$0xff]
    %v2214 = vld [vmem:[%s5 + $0x388] sm:$0xff]
    %v2215 = vld [vmem:[%s5 + $0x390] sm:$0xff]
    %v2216 = vld [vmem:[%s5 + $0x398] sm:$0xff]
    %v2217 = vld [vmem:[%s5 + $0x3a0] sm:$0xff]
    %v2218 = vld [vmem:[%s5 + $0x3a8] sm:$0xff]
    %v2219 = vld [vmem:[%s5 + $0x3b0] sm:$0xff]
    %v2220 = vld [vmem:[%s5 + $0x3b8] sm:$0xff]
    %v2221 = vld [vmem:[%s5 + $0x3c0] sm:$0xff]
    %v2222 = vld [vmem:[%s5 + $0x3c8] sm:$0xff]
    %v2223 = vld [vmem:[%s5 + $0x3d0] sm:$0xff]
    %v2224 = vld [vmem:[%s5 + $0x3d8] sm:$0xff]
    %v2225 = vld [vmem:[%s5 + $0x3e0] sm:$0xff]
    %v2226 = vld [vmem:[%s5 + $0x3e8] sm:$0xff]
    %v2227 = vld [vmem:[%s5 + $0x3f0] sm:$0xff]
    %v2228 = vld [vmem:[%s5 + $0x3f8] sm:$0xff]
    %v2229 = vld [vmem:[%s5 + $0x400] sm:$0xff]
    %v2230 = vld [vmem:[%s5 + $0x408] sm:$0xff]
    %v2231 = vld [vmem:[%s5 + $0x410] sm:$0xff]
    %v2232 = vld [vmem:[%s5 + $0x418] sm:$0xff]
    %v2233 = vld [vmem:[%s5 + $0x420] sm:$0xff]
    %v2234 = vld [vmem:[%s5 + $0x428] sm:$0xff]
    %v2235 = vld [vmem:[%s5 + $0x430] sm:$0xff]
    %v2236 = vld [vmem:[%s5 + $0x438] sm:$0xff]
    %v2237 = vld [vmem:[%s5 + $0x440] sm:$0xff]
    %v2238 = vld [vmem:[%s5 + $0x448] sm:$0xff]
    %v2239 = vld [vmem:[%s5 + $0x450] sm:$0xff]
    %v2240 = vld [vmem:[%s5 + $0x458] sm:$0xff]
    %v2241 = vld [vmem:[%s5 + $0x460] sm:$0xff]
    %v2242 = vld [vmem:[%s5 + $0x468] sm:$0xff]
    %v2243 = vld [vmem:[%s5 + $0x470] sm:$0xff]
    %v2244 = vld [vmem:[%s5 + $0x478] sm:$0xff]
    %v2245 = vld [vmem:[%s5 + $0x480] sm:$0xff]
    %v2246 = vld [vmem:[%s5 + $0x488] sm:$0xff]
    %v2247 = vld [vmem:[%s5 + $0x490] sm:$0xff]
    %v2248 = vld [vmem:[%s5 + $0x498] sm:$0xff]
    %v2249 = vld [vmem:[%s5 + $0x4a0] sm:$0xff]
    %v2250 = vld [vmem:[%s5 + $0x4a8] sm:$0xff]
    %v2251 = vld [vmem:[%s5 + $0x4b0] sm:$0xff]
    %v2252 = vld [vmem:[%s5 + $0x4b8] sm:$0xff]
    %v2253 = vld [vmem:[%s5 + $0x4c0] sm:$0xff]
    %v2254 = vld [vmem:[%s5 + $0x4c8] sm:$0xff]
    %v2255 = vld [vmem:[%s5 + $0x4d0] sm:$0xff]
    %v2256 = vld [vmem:[%s5 + $0x4d8] sm:$0xff]
    %v2257 = vld [vmem:[%s5 + $0x4e0] sm:$0xff]
    %v2258 = vld [vmem:[%s5 + $0x4e8] sm:$0xff]
    %v2259 = vld [vmem:[%s5 + $0x4f0] sm:$0xff]
    %v2260 = vld [vmem:[%s5 + $0x4f8] sm:$0xff]
    %v2261 = vld [vmem:[%s5 + $0x500] sm:$0xff]
    %v2262 = vld [vmem:[%s5 + $0x508] sm:$0xff]
    %v2263 = vld [vmem:[%s5 + $0x510] sm:$0xff]
    %v2264 = vld [vmem:[%s5 + $0x518] sm:$0xff]
    %v2265 = vld [vmem:[%s5 + $0x520] sm:$0xff]
    %v2266 = vld [vmem:[%s5 + $0x528] sm:$0xff]
    %v2267 = vld [vmem:[%s5 + $0x530] sm:$0xff]
    %v2268 = vld [vmem:[%s5 + $0x538] sm:$0xff]
    %v2269 = vld [vmem:[%s5 + $0x540] sm:$0xff]
    %v2270 = vld [vmem:[%s5 + $0x548] sm:$0xff]
    %v2271 = vld [vmem:[%s5 + $0x550] sm:$0xff]
    %v2272 = vld [vmem:[%s5 + $0x558] sm:$0xff]
    %v2273 = vld [vmem:[%s5 + $0x560] sm:$0xff]
    %v2274 = vld [vmem:[%s5 + $0x568] sm:$0xff]
    %v2275 = vld [vmem:[%s5 + $0x570] sm:$0xff]
    %v2276 = vld [vmem:[%s5 + $0x578] sm:$0xff]
    %v2277 = vld [vmem:[%s5 + $0x580] sm:$0xff]
    %v2278 = vld [vmem:[%s5 + $0x588] sm:$0xff]
    %v2279 = vld [vmem:[%s5 + $0x590] sm:$0xff]
    %v2280 = vld [vmem:[%s5 + $0x598] sm:$0xff]
    %v2281 = vld [vmem:[%s5 + $0x5a0] sm:$0xff]
    %v2282 = vld [vmem:[%s5 + $0x5a8] sm:$0xff]
    %v2283 = vld [vmem:[%s5 + $0x5b0] sm:$0xff]
    %v2284 = vld [vmem:[%s5 + $0x5b8] sm:$0xff]
    %v2285 = vld [vmem:[%s5 + $0x5c0] sm:$0xff]
    %v2286 = vld [vmem:[%s5 + $0x5c8] sm:$0xff]
    %v2287 = vld [vmem:[%s5 + $0x5d0] sm:$0xff]
    %v2288 = vld [vmem:[%s5 + $0x5d8] sm:$0xff]
    %v2289 = vld [vmem:[%s5 + $0x5e0] sm:$0xff]
    %v2290 = vld [vmem:[%s5 + $0x5e8] sm:$0xff]
    %v2291 = vld [vmem:[%s5 + $0x5f0] sm:$0xff]
    %v2292 = vld [vmem:[%s5 + $0x5f8] sm:$0xff]
    %v2293 = vld [vmem:[%s5 + $0x600] sm:$0xff]
    %v2294 = vld [vmem:[%s5 + $0x608] sm:$0xff]
    %v2295 = vld [vmem:[%s5 + $0x610] sm:$0xff]
    %v2296 = vld [vmem:[%s5 + $0x618] sm:$0xff]
    %v2297 = vld [vmem:[%s5 + $0x620] sm:$0xff]
    %v2298 = vld [vmem:[%s5 + $0x628] sm:$0xff]
    %v2299 = vld [vmem:[%s5 + $0x630] sm:$0xff]
    %v2300 = vld [vmem:[%s5 + $0x638] sm:$0xff]
    %v2301 = vld [vmem:[%s5 + $0x640] sm:$0xff]
    %v2302 = vld [vmem:[%s5 + $0x648] sm:$0xff]
    %v2303 = vld [vmem:[%s5 + $0x650] sm:$0xff]
    %v2304 = vld [vmem:[%s5 + $0x658] sm:$0xff]
    %v2305 = vld [vmem:[%s5 + $0x660] sm:$0xff]
    %v2306 = vld [vmem:[%s5 + $0x668] sm:$0xff]
    %v2307 = vld [vmem:[%s5 + $0x670] sm:$0xff]
    %v2308 = vld [vmem:[%s5 + $0x678] sm:$0xff]
    %v2309 = vld [vmem:[%s5 + $0x680] sm:$0xff]
    %v2310 = vld [vmem:[%s5 + $0x688] sm:$0xff]
    %v2311 = vld [vmem:[%s5 + $0x690] sm:$0xff]
    %v2312 = vld [vmem:[%s5 + $0x698] sm:$0xff]
    %v2313 = vld [vmem:[%s5 + $0x6a0] sm:$0xff]
    %v2314 = vld [vmem:[%s5 + $0x6a8] sm:$0xff]
    %v2315 = vld [vmem:[%s5 + $0x6b0] sm:$0xff]
    %v2316 = vld [vmem:[%s5 + $0x6b8] sm:$0xff]
    %v2317 = vld [vmem:[%s5 + $0x6c0] sm:$0xff]
    %v2318 = vld [vmem:[%s5 + $0x6c8] sm:$0xff]
    %v2319 = vld [vmem:[%s5 + $0x6d0] sm:$0xff]
    %v2320 = vld [vmem:[%s5 + $0x6d8] sm:$0xff]
    %v2321 = vld [vmem:[%s5 + $0x6e0] sm:$0xff]
    %v2322 = vld [vmem:[%s5 + $0x6e8] sm:$0xff]
    %v2323 = vld [vmem:[%s5 + $0x6f0] sm:$0xff]
    %v2324 = vld [vmem:[%s5 + $0x6f8] sm:$0xff]
    %v2325 = vld [vmem:[%s5 + $0x700] sm:$0xff]
    %v2326 = vld [vmem:[%s5 + $0x708] sm:$0xff]
    %v2327 = vld [vmem:[%s5 + $0x710] sm:$0xff]
    %v2328 = vld [vmem:[%s5 + $0x718] sm:$0xff]
    %v2329 = vld [vmem:[%s5 + $0x720] sm:$0xff]
    %v2330 = vld [vmem:[%s5 + $0x728] sm:$0xff]
    %v2331 = vld [vmem:[%s5 + $0x730] sm:$0xff]
    %v2332 = vld [vmem:[%s5 + $0x738] sm:$0xff]
    %v2333 = vld [vmem:[%s5 + $0x740] sm:$0xff]
    %v2334 = vld [vmem:[%s5 + $0x748] sm:$0xff]
    %v2335 = vld [vmem:[%s5 + $0x750] sm:$0xff]
    %v2336 = vld [vmem:[%s5 + $0x758] sm:$0xff]
    %v2337 = vld [vmem:[%s5 + $0x760] sm:$0xff]
    %v2338 = vld [vmem:[%s5 + $0x768] sm:$0xff]
    %v2339 = vld [vmem:[%s5 + $0x770] sm:$0xff]
    %v2340 = vld [vmem:[%s5 + $0x778] sm:$0xff]
    %v2341 = vld [vmem:[%s5 + $0x780] sm:$0xff]
    %v2342 = vld [vmem:[%s5 + $0x788] sm:$0xff]
    %v2343 = vld [vmem:[%s5 + $0x790] sm:$0xff]
    %v2344 = vld [vmem:[%s5 + $0x798] sm:$0xff]
    %v2345 = vld [vmem:[%s5 + $0x7a0] sm:$0xff]
    %v2346 = vld [vmem:[%s5 + $0x7a8] sm:$0xff]
    %v2347 = vld [vmem:[%s5 + $0x7b0] sm:$0xff]
    %v2348 = vld [vmem:[%s5 + $0x7b8] sm:$0xff]
    %v2349 = vld [vmem:[%s5 + $0x7c0] sm:$0xff]
    %v2350 = vld [vmem:[%s5 + $0x7c8] sm:$0xff]
    %v2351 = vld [vmem:[%s5 + $0x7d0] sm:$0xff]
    %v2352 = vld [vmem:[%s5 + $0x7d8] sm:$0xff]
    %v2353 = vld [vmem:[%s5 + $0x7e0] sm:$0xff]
    %v2354 = vld [vmem:[%s5 + $0x7e8] sm:$0xff]
    %v2355 = vld [vmem:[%s5 + $0x7f0] sm:$0xff]
    %v2356 = vld [vmem:[%s5 + $0x7f8] sm:$0xff]
    %v2357 = vld [vmem:[%s5 + $0x800] sm:$0xff]
    %v2358 = vld [vmem:[%s5 + $0x808] sm:$0xff]
    %v2359 = vld [vmem:[%s5 + $0x810] sm:$0xff]
    %v2360 = vld [vmem:[%s5 + $0x818] sm:$0xff]
    %v2361 = vld [vmem:[%s5 + $0x820] sm:$0xff]
    %v2362 = vld [vmem:[%s5 + $0x828] sm:$0xff]
    %v2363 = vld [vmem:[%s5 + $0x830] sm:$0xff]
    %v2364 = vld [vmem:[%s5 + $0x838] sm:$0xff]
    %v2365 = vld [vmem:[%s5 + $0x840] sm:$0xff]
    %v2366 = vld [vmem:[%s5 + $0x848] sm:$0xff]
    %v2367 = vld [vmem:[%s5 + $0x850] sm:$0xff]
    %v2368 = vld [vmem:[%s5 + $0x858] sm:$0xff]
    %v2369 = vld [vmem:[%s5 + $0x860] sm:$0xff]
    %v2370 = vld [vmem:[%s5 + $0x868] sm:$0xff]
    %v2371 = vld [vmem:[%s5 + $0x870] sm:$0xff]
    %v2372 = vld [vmem:[%s5 + $0x878] sm:$0xff]
    %v2373 = vld [vmem:[%s5 + $0x880] sm:$0xff]
    %v2374 = vld [vmem:[%s5 + $0x888] sm:$0xff]
    %v2375 = vld [vmem:[%s5 + $0x890] sm:$0xff]
    %v2376 = vld [vmem:[%s5 + $0x898] sm:$0xff]
    %v2377 = vld [vmem:[%s5 + $0x8a0] sm:$0xff]
    %v2378 = vld [vmem:[%s5 + $0x8a8] sm:$0xff]
    %v2379 = vld [vmem:[%s5 + $0x8b0] sm:$0xff]
    %v2380 = vld [vmem:[%s5 + $0x8b8] sm:$0xff]
    %v2381 = vld [vmem:[%s5 + $0x8c0] sm:$0xff]
    %v2382 = vld [vmem:[%s5 + $0x8c8] sm:$0xff]
    %v2383 = vld [vmem:[%s5 + $0x8d0] sm:$0xff]
    %v2384 = vld [vmem:[%s5 + $0x8d8] sm:$0xff]
    %v2385 = vld [vmem:[%s5 + $0x8e0] sm:$0xff]
    %v2386 = vld [vmem:[%s5 + $0x8e8] sm:$0xff]
    %v2387 = vld [vmem:[%s5 + $0x8f0] sm:$0xff]
    %v2388 = vld [vmem:[%s5 + $0x8f8] sm:$0xff]
    %v2389 = vld [vmem:[%s5 + $0x900] sm:$0xff]
    %v2390 = vld [vmem:[%s5 + $0x908] sm:$0xff]
    %v2391 = vld [vmem:[%s5 + $0x910] sm:$0xff]
    %v2392 = vld [vmem:[%s5 + $0x918] sm:$0xff]
    %v2393 = vld [vmem:[%s5 + $0x920] sm:$0xff]
    %v2394 = vld [vmem:[%s5 + $0x928] sm:$0xff]
    %v2395 = vld [vmem:[%s5 + $0x930] sm:$0xff]
    %v2396 = vld [vmem:[%s5 + $0x938] sm:$0xff]
    %v2397 = vld [vmem:[%s5 + $0x940] sm:$0xff]
    %v2398 = vld [vmem:[%s5 + $0x948] sm:$0xff]
    %v2399 = vld [vmem:[%s5 + $0x950] sm:$0xff]
    %v2400 = vld [vmem:[%s5 + $0x958] sm:$0xff]
    %v2401 = vld [vmem:[%s5 + $0x960] sm:$0xff]
    %v2402 = vld [vmem:[%s5 + $0x968] sm:$0xff]
    %v2403 = vld [vmem:[%s5 + $0x970] sm:$0xff]
    %v2404 = vld [vmem:[%s5 + $0x978] sm:$0xff]
    %v2405 = vld [vmem:[%s5 + $0x980] sm:$0xff]
    %v2406 = vld [vmem:[%s5 + $0x988] sm:$0xff]
    %v2407 = vld [vmem:[%s5 + $0x990] sm:$0xff]
    %v2408 = vld [vmem:[%s5 + $0x998] sm:$0xff]
    %v2409 = vld [vmem:[%s5 + $0x9a0] sm:$0xff]
    %v2410 = vld [vmem:[%s5 + $0x9a8] sm:$0xff]
    %v2411 = vld [vmem:[%s5 + $0x9b0] sm:$0xff]
    %v2412 = vld [vmem:[%s5 + $0x9b8] sm:$0xff]
    %v2413 = vld [vmem:[%s5 + $0x9c0] sm:$0xff]
    %v2414 = vld [vmem:[%s5 + $0x9c8] sm:$0xff]
    %v2415 = vld [vmem:[%s5 + $0x9d0] sm:$0xff]
    %v2416 = vld [vmem:[%s5 + $0x9d8] sm:$0xff]
    %v2417 = vld [vmem:[%s5 + $0x9e0] sm:$0xff]
    %v2418 = vld [vmem:[%s5 + $0x9e8] sm:$0xff]
    %v2419 = vld [vmem:[%s5 + $0x9f0] sm:$0xff]
    %v2420 = vld [vmem:[%s5 + $0x9f8] sm:$0xff]
    %v2421 = vld [vmem:[%s5 + $0xa00] sm:$0xff]
    %v2422 = vld [vmem:[%s5 + $0xa08] sm:$0xff]
    %v2423 = vld [vmem:[%s5 + $0xa10] sm:$0xff]
    %v2424 = vld [vmem:[%s5 + $0xa18] sm:$0xff]
    %v2425 = vld [vmem:[%s5 + $0xa20] sm:$0xff]
    %v2426 = vld [vmem:[%s5 + $0xa28] sm:$0xff]
    %v2427 = vld [vmem:[%s5 + $0xa30] sm:$0xff]
    %v2428 = vld [vmem:[%s5 + $0xa38] sm:$0xff]
    %v2429 = vld [vmem:[%s5 + $0xa40] sm:$0xff]
    %v2430 = vld [vmem:[%s5 + $0xa48] sm:$0xff]
    %v2431 = vld [vmem:[%s5 + $0xa50] sm:$0xff]
    %v2432 = vld [vmem:[%s5 + $0xa58] sm:$0xff]
    %v2433 = vld [vmem:[%s5 + $0xa60] sm:$0xff]
    %v2434 = vld [vmem:[%s5 + $0xa68] sm:$0xff]
    %v2435 = vld [vmem:[%s5 + $0xa70] sm:$0xff]
    %v2436 = vld [vmem:[%s5 + $0xa78] sm:$0xff]
    %v2437 = vld [vmem:[%s5 + $0xa80] sm:$0xff]
    %v2438 = vld [vmem:[%s5 + $0xa88] sm:$0xff]
    %v2439 = vld [vmem:[%s5 + $0xa90] sm:$0xff]
    %v2440 = vld [vmem:[%s5 + $0xa98] sm:$0xff]
    %v2441 = vld [vmem:[%s5 + $0xaa0] sm:$0xff]
    %v2442 = vld [vmem:[%s5 + $0xaa8] sm:$0xff]
    %v2443 = vld [vmem:[%s5 + $0xab0] sm:$0xff]
    %v2444 = vld [vmem:[%s5 + $0xab8] sm:$0xff]
    %v2445 = vld [vmem:[%s5 + $0xac0] sm:$0xff]
    %v2446 = vld [vmem:[%s5 + $0xac8] sm:$0xff]
    %v2447 = vld [vmem:[%s5 + $0xad0] sm:$0xff]
    %v2448 = vld [vmem:[%s5 + $0xad8] sm:$0xff]
    %v2449 = vld [vmem:[%s5 + $0xae0] sm:$0xff]
    %v2450 = vld [vmem:[%s5 + $0xae8] sm:$0xff]
    %v2451 = vld [vmem:[%s5 + $0xaf0] sm:$0xff]
    %v2452 = vld [vmem:[%s5 + $0xaf8] sm:$0xff]
    %v2453 = vld [vmem:[%s5 + $0xb00] sm:$0xff]
    %v2454 = vld [vmem:[%s5 + $0xb08] sm:$0xff]
    %v2455 = vld [vmem:[%s5 + $0xb10] sm:$0xff]
    %v2456 = vld [vmem:[%s5 + $0xb18] sm:$0xff]
    %v2457 = vld [vmem:[%s5 + $0xb20] sm:$0xff]
    %v2458 = vld [vmem:[%s5 + $0xb28] sm:$0xff]
    %v2459 = vld [vmem:[%s5 + $0xb30] sm:$0xff]
    %v2460 = vld [vmem:[%s5 + $0xb38] sm:$0xff]
    %v2461 = vld [vmem:[%s5 + $0xb40] sm:$0xff]
    %v2462 = vld [vmem:[%s5 + $0xb48] sm:$0xff]
    %v2463 = vld [vmem:[%s5 + $0xb50] sm:$0xff]
    %v2464 = vld [vmem:[%s5 + $0xb58] sm:$0xff]
    %v2465 = vld [vmem:[%s5 + $0xb60] sm:$0xff]
    %v2466 = vld [vmem:[%s5 + $0xb68] sm:$0xff]
    %v2467 = vld [vmem:[%s5 + $0xb70] sm:$0xff]
    %v2468 = vld [vmem:[%s5 + $0xb78] sm:$0xff]
    %v2469 = vld [vmem:[%s5 + $0xb80] sm:$0xff]
    %v2470 = vld [vmem:[%s5 + $0xb88] sm:$0xff]
    %v2471 = vld [vmem:[%s5 + $0xb90] sm:$0xff]
    %v2472 = vld [vmem:[%s5 + $0xb98] sm:$0xff]
    %v2473 = vld [vmem:[%s5 + $0xba0] sm:$0xff]
    %v2474 = vld [vmem:[%s5 + $0xba8] sm:$0xff]
    %v2475 = vld [vmem:[%s5 + $0xbb0] sm:$0xff]
    %v2476 = vld [vmem:[%s5 + $0xbb8] sm:$0xff]
    %v2477 = vld [vmem:[%s5 + $0xbc0] sm:$0xff]
    %v2478 = vld [vmem:[%s5 + $0xbc8] sm:$0xff]
    %v2479 = vld [vmem:[%s5 + $0xbd0] sm:$0xff]
    %v2480 = vld [vmem:[%s5 + $0xbd8] sm:$0xff]
    %v2481 = vld [vmem:[%s5 + $0xbe0] sm:$0xff]
    %v2482 = vld [vmem:[%s5 + $0xbe8] sm:$0xff]
    %v2483 = vld [vmem:[%s5 + $0xbf0] sm:$0xff]
    %v2484 = vld [vmem:[%s5 + $0xbf8] sm:$0xff]
    %v2485 = vld [vmem:[%s5 + $0xc00] sm:$0xff]
    %v2486 = vld [vmem:[%s5 + $0xc08] sm:$0xff]
    %v2487 = vld [vmem:[%s5 + $0xc10] sm:$0xff]
    %v2488 = vld [vmem:[%s5 + $0xc18] sm:$0xff]
    %v2489 = vld [vmem:[%s5 + $0xc20] sm:$0xff]
    %v2490 = vld [vmem:[%s5 + $0xc28] sm:$0xff]
    %v2491 = vld [vmem:[%s5 + $0xc30] sm:$0xff]
    %v2492 = vld [vmem:[%s5 + $0xc38] sm:$0xff]
    %v2493 = vld [vmem:[%s5 + $0xc40] sm:$0xff]
    %v2494 = vld [vmem:[%s5 + $0xc48] sm:$0xff]
    %v2495 = vld [vmem:[%s5 + $0xc50] sm:$0xff]
    %v2496 = vld [vmem:[%s5 + $0xc58] sm:$0xff]
    %v2497 = vld [vmem:[%s5 + $0xc60] sm:$0xff]
    %v2498 = vld [vmem:[%s5 + $0xc68] sm:$0xff]
    %v2499 = vld [vmem:[%s5 + $0xc70] sm:$0xff]
    %v2500 = vld [vmem:[%s5 + $0xc78] sm:$0xff]
    %v2501 = vld [vmem:[%s5 + $0xc80] sm:$0xff]
    %v2502 = vld [vmem:[%s5 + $0xc88] sm:$0xff]
    %v2503 = vld [vmem:[%s5 + $0xc90] sm:$0xff]
    %v2504 = vld [vmem:[%s5 + $0xc98] sm:$0xff]
    %v2505 = vld [vmem:[%s5 + $0xca0] sm:$0xff]
    %v2506 = vld [vmem:[%s5 + $0xca8] sm:$0xff]
    %v2507 = vld [vmem:[%s5 + $0xcb0] sm:$0xff]
    %v2508 = vld [vmem:[%s5 + $0xcb8] sm:$0xff]
    %v2509 = vld [vmem:[%s5 + $0xcc0] sm:$0xff]
    %v2510 = vld [vmem:[%s5 + $0xcc8] sm:$0xff]
    %v2511 = vld [vmem:[%s5 + $0xcd0] sm:$0xff]
    %v2512 = vld [vmem:[%s5 + $0xcd8] sm:$0xff]
    %v2513 = vld [vmem:[%s5 + $0xce0] sm:$0xff]
    %v2514 = vld [vmem:[%s5 + $0xce8] sm:$0xff]
    %v2515 = vld [vmem:[%s5 + $0xcf0] sm:$0xff]
    %v2516 = vld [vmem:[%s5 + $0xcf8] sm:$0xff]
    %v2517 = vld [vmem:[%s5 + $0xd00] sm:$0xff]
    %v2518 = vld [vmem:[%s5 + $0xd08] sm:$0xff]
    %v2519 = vld [vmem:[%s5 + $0xd10] sm:$0xff]
    %v2520 = vld [vmem:[%s5 + $0xd18] sm:$0xff]
    %v2521 = vld [vmem:[%s5 + $0xd20] sm:$0xff]
    %v2522 = vld [vmem:[%s5 + $0xd28] sm:$0xff]
    %v2523 = vld [vmem:[%s5 + $0xd30] sm:$0xff]
    %v2524 = vld [vmem:[%s5 + $0xd38] sm:$0xff]
    %v2525 = vld [vmem:[%s5 + $0xd40] sm:$0xff]
    %v2526 = vld [vmem:[%s5 + $0xd48] sm:$0xff]
    %v2527 = vld [vmem:[%s5 + $0xd50] sm:$0xff]
    %v2528 = vld [vmem:[%s5 + $0xd58] sm:$0xff]
    %v2529 = vld [vmem:[%s5 + $0xd60] sm:$0xff]
    %v2530 = vld [vmem:[%s5 + $0xd68] sm:$0xff]
    %v2531 = vld [vmem:[%s5 + $0xd70] sm:$0xff]
    %v2532 = vld [vmem:[%s5 + $0xd78] sm:$0xff]
    %v2533 = vld [vmem:[%s5 + $0xd80] sm:$0xff]
    %v2534 = vld [vmem:[%s5 + $0xd88] sm:$0xff]
    %v2535 = vld [vmem:[%s5 + $0xd90] sm:$0xff]
    %v2536 = vld [vmem:[%s5 + $0xd98] sm:$0xff]
    %v2537 = vld [vmem:[%s5 + $0xda0] sm:$0xff]
    %v2538 = vld [vmem:[%s5 + $0xda8] sm:$0xff]
    %v2539 = vld [vmem:[%s5 + $0xdb0] sm:$0xff]
    %v2540 = vld [vmem:[%s5 + $0xdb8] sm:$0xff]
    %v2541 = vld [vmem:[%s5 + $0xdc0] sm:$0xff]
    %v2542 = vld [vmem:[%s5 + $0xdc8] sm:$0xff]
    %v2543 = vld [vmem:[%s5 + $0xdd0] sm:$0xff]
    %v2544 = vld [vmem:[%s5 + $0xdd8] sm:$0xff]
    %v2545 = vld [vmem:[%s5 + $0xde0] sm:$0xff]
    %v2546 = vld [vmem:[%s5 + $0xde8] sm:$0xff]
    %v2547 = vld [vmem:[%s5 + $0xdf0] sm:$0xff]
    %v2548 = vld [vmem:[%s5 + $0xdf8] sm:$0xff]
    %v2549 = vld [vmem:[%s5 + $0xe00] sm:$0xff]
    %v2550 = vld [vmem:[%s5 + $0xe08] sm:$0xff]
    %v2551 = vld [vmem:[%s5 + $0xe10] sm:$0xff]
    %v2552 = vld [vmem:[%s5 + $0xe18] sm:$0xff]
    %v2553 = vld [vmem:[%s5 + $0xe20] sm:$0xff]
    %v2554 = vld [vmem:[%s5 + $0xe28] sm:$0xff]
    %v2555 = vld [vmem:[%s5 + $0xe30] sm:$0xff]
    %v2556 = vld [vmem:[%s5 + $0xe38] sm:$0xff]
    %v2557 = vld [vmem:[%s5 + $0xe40] sm:$0xff]
    %v2558 = vld [vmem:[%s5 + $0xe48] sm:$0xff]
    %v2559 = vld [vmem:[%s5 + $0xe50] sm:$0xff]
    %v2560 = vld [vmem:[%s5 + $0xe58] sm:$0xff]
    %v2561 = vld [vmem:[%s5 + $0xe60] sm:$0xff]
    %v2562 = vld [vmem:[%s5 + $0xe68] sm:$0xff]
    %v2563 = vld [vmem:[%s5 + $0xe70] sm:$0xff]
    %v2564 = vld [vmem:[%s5 + $0xe78] sm:$0xff]
    %v2565 = vld [vmem:[%s5 + $0xe80] sm:$0xff]
    %v2566 = vld [vmem:[%s5 + $0xe88] sm:$0xff]
    %v2567 = vld [vmem:[%s5 + $0xe90] sm:$0xff]
    %v2568 = vld [vmem:[%s5 + $0xe98] sm:$0xff]
    %v2569 = vld [vmem:[%s5 + $0xea0] sm:$0xff]
    %v2570 = vld [vmem:[%s5 + $0xea8] sm:$0xff]
    %v2571 = vld [vmem:[%s5 + $0xeb0] sm:$0xff]
    %v2572 = vld [vmem:[%s5 + $0xeb8] sm:$0xff]
    %v2573 = vld [vmem:[%s5 + $0xec0] sm:$0xff]
    %v2574 = vld [vmem:[%s5 + $0xec8] sm:$0xff]
    %v2575 = vld [vmem:[%s5 + $0xed0] sm:$0xff]
    %v2576 = vld [vmem:[%s5 + $0xed8] sm:$0xff]
    %v2577 = vld [vmem:[%s5 + $0xee0] sm:$0xff]
    %v2578 = vld [vmem:[%s5 + $0xee8] sm:$0xff]
    %v2579 = vld [vmem:[%s5 + $0xef0] sm:$0xff]
    %v2580 = vld [vmem:[%s5 + $0xef8] sm:$0xff]
    %v2581 = vld [vmem:[%s5 + $0xf00] sm:$0xff]
    %v2582 = vld [vmem:[%s5 + $0xf08] sm:$0xff]
    %v2583 = vld [vmem:[%s5 + $0xf10] sm:$0xff]
    %v2584 = vld [vmem:[%s5 + $0xf18] sm:$0xff]
    %v2585 = vld [vmem:[%s5 + $0xf20] sm:$0xff]
    %v2586 = vld [vmem:[%s5 + $0xf28] sm:$0xff]
    %v2587 = vld [vmem:[%s5 + $0xf30] sm:$0xff]
    %v2588 = vld [vmem:[%s5 + $0xf38] sm:$0xff]
    %v2589 = vld [vmem:[%s5 + $0xf40] sm:$0xff]
    %v2590 = vld [vmem:[%s5 + $0xf48] sm:$0xff]
    %v2591 = vld [vmem:[%s5 + $0xf50] sm:$0xff]
    %v2592 = vld [vmem:[%s5 + $0xf58] sm:$0xff]
    %v2593 = vld [vmem:[%s5 + $0xf60] sm:$0xff]
    %v2594 = vld [vmem:[%s5 + $0xf68] sm:$0xff]
    %v2595 = vld [vmem:[%s5 + $0xf70] sm:$0xff]
    %v2596 = vld [vmem:[%s5 + $0xf78] sm:$0xff]
    %v2597 = vld [vmem:[%s5 + $0xf80] sm:$0xff]
    %v2598 = vld [vmem:[%s5 + $0xf88] sm:$0xff]
    %v2599 = vld [vmem:[%s5 + $0xf90] sm:$0xff]
    %v2600 = vld [vmem:[%s5 + $0xf98] sm:$0xff]
    %v2601 = vld [vmem:[%s5 + $0xfa0] sm:$0xff]
    %v2602 = vld [vmem:[%s5 + $0xfa8] sm:$0xff]
    %v2603 = vld [vmem:[%s5 + $0xfb0] sm:$0xff]
    %v2604 = vld [vmem:[%s5 + $0xfb8] sm:$0xff]
    %v2605 = vld [vmem:[%s5 + $0xfc0] sm:$0xff]
    %v2606 = vld [vmem:[%s5 + $0xfc8] sm:$0xff]
    %v2607 = vld [vmem:[%s5 + $0xfd0] sm:$0xff]
    %v2608 = vld [vmem:[%s5 + $0xfd8] sm:$0xff]
    %v2609 = vld [vmem:[%s5 + $0xfe0] sm:$0xff]
    %v2610 = vld [vmem:[%s5 + $0xfe8] sm:$0xff]
    %v2611 = vld [vmem:[%s5 + $0xff0] sm:$0xff]
    %v2612 = vld [vmem:[%s5 + $0xff8] sm:$0xff]
    %v2613 = vld [vmem:[%s5 + $0x1000] sm:$0xff]
    %v2614 = vld [vmem:[%s5 + $0x1008] sm:$0xff]
    %v2615 = vld [vmem:[%s5 + $0x1010] sm:$0xff]
    %v2616 = vld [vmem:[%s5 + $0x1018] sm:$0xff]
    %v2617 = vld [vmem:[%s5 + $0x1020] sm:$0xff]
    %v2618 = vld [vmem:[%s5 + $0x1028] sm:$0xff]
    %v2619 = vld [vmem:[%s5 + $0x1030] sm:$0xff]
    %v2620 = vld [vmem:[%s5 + $0x1038] sm:$0xff]
    %v2621 = vld [vmem:[%s5 + $0x1040] sm:$0xff]
    %v2622 = vld [vmem:[%s5 + $0x1048] sm:$0xff]
    %v2623 = vld [vmem:[%s5 + $0x1050] sm:$0xff]
    %v2624 = vld [vmem:[%s5 + $0x1058] sm:$0xff]
    %v2625 = vld [vmem:[%s5 + $0x1060] sm:$0xff]
    %v2626 = vld [vmem:[%s5 + $0x1068] sm:$0xff]
    %v2627 = vld [vmem:[%s5 + $0x1070] sm:$0xff]
    %v2628 = vld [vmem:[%s5 + $0x1078] sm:$0xff]
    %v2629 = vld [vmem:[%s5 + $0x1080] sm:$0xff]
    %v2630 = vld [vmem:[%s5 + $0x1088] sm:$0xff]
    %v2631 = vld [vmem:[%s5 + $0x1090] sm:$0xff]
    %v2632 = vld [vmem:[%s5 + $0x1098] sm:$0xff]
    %v2633 = vld [vmem:[%s5 + $0x10a0] sm:$0xff]
    %v2634 = vld [vmem:[%s5 + $0x10a8] sm:$0xff]
    %v2635 = vld [vmem:[%s5 + $0x10b0] sm:$0xff]
    %v2636 = vld [vmem:[%s5 + $0x10b8] sm:$0xff]
    %v2637 = vld [vmem:[%s5 + $0x10c0] sm:$0xff]
    %v2638 = vld [vmem:[%s5 + $0x10c8] sm:$0xff]
    %v2639 = vld [vmem:[%s5 + $0x10d0] sm:$0xff]
    %v2640 = vld [vmem:[%s5 + $0x10d8] sm:$0xff]
    %v2641 = vld [vmem:[%s5 + $0x10e0] sm:$0xff]
    %v2642 = vld [vmem:[%s5 + $0x10e8] sm:$0xff]
    %v2643 = vld [vmem:[%s5 + $0x10f0] sm:$0xff]
    %v2644 = vld [vmem:[%s5 + $0x10f8] sm:$0xff]
    %v2645 = vld [vmem:[%s5 + $0x1100] sm:$0xff]
    %v2646 = vld [vmem:[%s5 + $0x1108] sm:$0xff]
    %v2647 = vld [vmem:[%s5 + $0x1110] sm:$0xff]
    %v2648 = vld [vmem:[%s5 + $0x1118] sm:$0xff]
    %v2649 = vld [vmem:[%s5 + $0x1120] sm:$0xff]
    %v2650 = vld [vmem:[%s5 + $0x1128] sm:$0xff]
    %v2651 = vld [vmem:[%s5 + $0x1130] sm:$0xff]
    %v2652 = vld [vmem:[%s5 + $0x1138] sm:$0xff]
    %v2653 = vld [vmem:[%s5 + $0x1140] sm:$0xff]
    %v2654 = vld [vmem:[%s5 + $0x1148] sm:$0xff]
    %v2655 = vld [vmem:[%s5 + $0x1150] sm:$0xff]
    %v2656 = vld [vmem:[%s5 + $0x1158] sm:$0xff]
    %v2657 = vld [vmem:[%s5 + $0x1160] sm:$0xff]
    %v2658 = vld [vmem:[%s5 + $0x1168] sm:$0xff]
    %v2659 = vld [vmem:[%s5 + $0x1170] sm:$0xff]
    %v2660 = vld [vmem:[%s5 + $0x1178] sm:$0xff]
    %v2661 = vld [vmem:[%s5 + $0x1180] sm:$0xff]
    %v2662 = vld [vmem:[%s5 + $0x1188] sm:$0xff]
    %v2663 = vld [vmem:[%s5 + $0x1190] sm:$0xff]
    %v2664 = vld [vmem:[%s5 + $0x1198] sm:$0xff]
    %v2665 = vld [vmem:[%s5 + $0x11a0] sm:$0xff]
    %v2666 = vld [vmem:[%s5 + $0x11a8] sm:$0xff]
    %v2667 = vld [vmem:[%s5 + $0x11b0] sm:$0xff]
    %v2668 = vld [vmem:[%s5 + $0x11b8] sm:$0xff]
    %v2669 = vld [vmem:[%s5 + $0x11c0] sm:$0xff]
    %v2670 = vld [vmem:[%s5 + $0x11c8] sm:$0xff]
    %v2671 = vld [vmem:[%s5 + $0x11d0] sm:$0xff]
    %v2672 = vld [vmem:[%s5 + $0x11d8] sm:$0xff]
    %v2673 = vld [vmem:[%s5 + $0x11e0] sm:$0xff]
    %v2674 = vld [vmem:[%s5 + $0x11e8] sm:$0xff]
    %v2675 = vld [vmem:[%s5 + $0x11f0] sm:$0xff]
    %v2676 = vld [vmem:[%s5 + $0x11f8] sm:$0xff]
    %v2677 = vld [vmem:[%s5 + $0x1200] sm:$0xff]
    %v2678 = vld [vmem:[%s5 + $0x1208] sm:$0xff]
    %v2679 = vld [vmem:[%s5 + $0x1210] sm:$0xff]
    %v2680 = vld [vmem:[%s5 + $0x1218] sm:$0xff]
    %v2681 = vld [vmem:[%s5 + $0x1220] sm:$0xff]
    %v2682 = vld [vmem:[%s5 + $0x1228] sm:$0xff]
    %v2683 = vld [vmem:[%s5 + $0x1230] sm:$0xff]
    %v2684 = vld [vmem:[%s5 + $0x1238] sm:$0xff]
    %v2685 = vld [vmem:[%s5 + $0x1240] sm:$0xff]
    %v2686 = vld [vmem:[%s5 + $0x1248] sm:$0xff]
    %v2687 = vld [vmem:[%s5 + $0x1250] sm:$0xff]
    %v2688 = vld [vmem:[%s5 + $0x1258] sm:$0xff]
    %v2689 = vld [vmem:[%s5 + $0x1260] sm:$0xff]
    %v2690 = vld [vmem:[%s5 + $0x1268] sm:$0xff]
    %v2691 = vld [vmem:[%s5 + $0x1270] sm:$0xff]
    %v2692 = vld [vmem:[%s5 + $0x1278] sm:$0xff]
    %v2693 = vld [vmem:[%s5 + $0x1280] sm:$0xff]
    %v2694 = vld [vmem:[%s5 + $0x1288] sm:$0xff]
    %v2695 = vld [vmem:[%s5 + $0x1290] sm:$0xff]
    %v2696 = vld [vmem:[%s5 + $0x1298] sm:$0xff]
    %v2697 = vld [vmem:[%s5 + $0x12a0] sm:$0xff]
    %v2698 = vld [vmem:[%s5 + $0x12a8] sm:$0xff]
    %v2699 = vld [vmem:[%s5 + $0x12b0] sm:$0xff]
    %v2700 = vld [vmem:[%s5 + $0x12b8] sm:$0xff]
    %v2701 = vld [vmem:[%s5 + $0x12c0] sm:$0xff]
    %v2702 = vld [vmem:[%s5 + $0x12c8] sm:$0xff]
    %v2703 = vld [vmem:[%s5 + $0x12d0] sm:$0xff]
    %v2704 = vld [vmem:[%s5 + $0x12d8] sm:$0xff]
    %v2705 = vld [vmem:[%s5 + $0x12e0] sm:$0xff]
    %v2706 = vld [vmem:[%s5 + $0x12e8] sm:$0xff]
    %v2707 = vld [vmem:[%s5 + $0x12f0] sm:$0xff]
    %v2708 = vld [vmem:[%s5 + $0x12f8] sm:$0xff]
    %v2709 = vld [vmem:[%s5 + $0x1300] sm:$0xff]
    %v2710 = vld [vmem:[%s5 + $0x1308] sm:$0xff]
    %v2711 = vld [vmem:[%s5 + $0x1310] sm:$0xff]
    %v2712 = vld [vmem:[%s5 + $0x1318] sm:$0xff]
    %v2713 = vld [vmem:[%s5 + $0x1320] sm:$0xff]
    %v2714 = vld [vmem:[%s5 + $0x1328] sm:$0xff]
    %v2715 = vld [vmem:[%s5 + $0x1330] sm:$0xff]
    %v2716 = vld [vmem:[%s5 + $0x1338] sm:$0xff]
    %v2717 = vld [vmem:[%s5 + $0x1340] sm:$0xff]
    %v2718 = vld [vmem:[%s5 + $0x1348] sm:$0xff]
    %v2719 = vld [vmem:[%s5 + $0x1350] sm:$0xff]
    %v2720 = vld [vmem:[%s5 + $0x1358] sm:$0xff]
    %v2721 = vld [vmem:[%s5 + $0x1360] sm:$0xff]
    %v2722 = vld [vmem:[%s5 + $0x1368] sm:$0xff]
    %v2723 = vld [vmem:[%s5 + $0x1370] sm:$0xff]
    %v2724 = vld [vmem:[%s5 + $0x1378] sm:$0xff]
    %v2725 = vld [vmem:[%s5 + $0x1380] sm:$0xff]
    %v2726 = vld [vmem:[%s5 + $0x1388] sm:$0xff]
    %v2727 = vld [vmem:[%s5 + $0x1390] sm:$0xff]
    %v2728 = vld [vmem:[%s5 + $0x1398] sm:$0xff]
    %v2729 = vld [vmem:[%s5 + $0x13a0] sm:$0xff]
    %v2730 = vld [vmem:[%s5 + $0x13a8] sm:$0xff]
    %v2731 = vld [vmem:[%s5 + $0x13b0] sm:$0xff]
    %v2732 = vld [vmem:[%s5 + $0x13b8] sm:$0xff]
    %v2733 = vld [vmem:[%s5 + $0x13c0] sm:$0xff]
    %v2734 = vld [vmem:[%s5 + $0x13c8] sm:$0xff]
    %v2735 = vld [vmem:[%s5 + $0x13d0] sm:$0xff]
    %v2736 = vld [vmem:[%s5 + $0x13d8] sm:$0xff]
    %v2737 = vld [vmem:[%s5 + $0x13e0] sm:$0xff]
    %v2738 = vld [vmem:[%s5 + $0x13e8] sm:$0xff]
    %v2739 = vld [vmem:[%s5 + $0x13f0] sm:$0xff]
    %v2740 = vld [vmem:[%s5 + $0x13f8] sm:$0xff]
    %v2741 = vld [vmem:[%s6] sm:$0x3]
    %v2743 = vperm.slane %v2741, 0
    %v2744 = vperm.slane %v2741, 1
    %2757 = vst [vmem:[#allocation1] ss:$2 sm:$0xff] %v2091
    %s2758 = scalar_lea.vmem [#allocation1], 16
    %2759 = vst [vmem:[%s2758] ss:$2 sm:$0xff] %v2092
    %s2760 = scalar_lea.vmem [#allocation1], 32
    %2761 = vst [vmem:[%s2760] ss:$2 sm:$0xff] %v2093
    %s2762 = scalar_lea.vmem [#allocation1], 48
    %2763 = vst [vmem:[%s2762] ss:$2 sm:$0xff] %v2094
    %v2764 = vld.sshfl [vmem:[#allocation1] sm:$0xff pattern:$0x75316420]
    %v2765 = vld.sshfl [vmem:[#allocation1 + $0x8] sm:$0xff pattern:$0x75316420]
    %v2766 = vld.sshfl [vmem:[#allocation1 + $0x10] sm:$0xff pattern:$0x75316420]
    %v2767 = vld.sshfl [vmem:[#allocation1 + $0x18] sm:$0xff pattern:$0x75316420]
    %v2768 = vld.sshfl [vmem:[#allocation1 + $0x20] sm:$0xff pattern:$0x75316420]
    %v2769 = vld.sshfl [vmem:[#allocation1 + $0x28] sm:$0xff pattern:$0x75316420]
    %v2770 = vld.sshfl [vmem:[#allocation1 + $0x30] sm:$0xff pattern:$0x75316420]
    %v2771 = vld.sshfl [vmem:[#allocation1 + $0x38] sm:$0xff pattern:$0x75316420]
    %2772 = vst [vmem:[#allocation1] ss:$2 sm:$0xff] %v2095
    %2773 = vst [vmem:[%s2758] ss:$2 sm:$0xff] %v2096
    %2774 = vst [vmem:[%s2760] ss:$2 sm:$0xff] %v2097
    %2775 = vst [vmem:[%s2762] ss:$2 sm:$0xff] %v2098
    %v2776 = vld.sshfl [vmem:[#allocation1] sm:$0xff pattern:$0x75316420]
    %v2777 = vld.sshfl [vmem:[#allocation1 + $0x8] sm:$0xff pattern:$0x75316420]
    %v2778 = vld.sshfl [vmem:[#allocation1 + $0x10] sm:$0xff pattern:$0x75316420]
    %v2779 = vld.sshfl [vmem:[#allocation1 + $0x18] sm:$0xff pattern:$0x75316420]
    %v2780 = vld.sshfl [vmem:[#allocation1 + $0x20] sm:$0xff pattern:$0x75316420]
    %v2781 = vld.sshfl [vmem:[#allocation1 + $0x28] sm:$0xff pattern:$0x75316420]
    %v2782 = vld.sshfl [vmem:[#allocation1 + $0x30] sm:$0xff pattern:$0x75316420]
    %v2783 = vld.sshfl [vmem:[#allocation1 + $0x38] sm:$0xff pattern:$0x75316420]
    %2784 = vst [vmem:[#allocation1] ss:$2 sm:$0xff] %v2099
    %2785 = vst [vmem:[%s2758] ss:$2 sm:$0xff] %v2100
    %v2786 = vld.sshfl [vmem:[#allocation1] sm:$0xff pattern:$0x75316420]
    %v2787 = vld.sshfl [vmem:[#allocation1 + $0x8] sm:$0xff pattern:$0x75316420]
    %v2788 = vld.sshfl [vmem:[#allocation1 + $0x10] sm:$0xff pattern:$0x75316420]
    %v2789 = vld.sshfl [vmem:[#allocation1 + $0x18] sm:$0xff pattern:$0x75316420]
    %2810 = vmatpush.msra.mxu0 %v2131
    %2811 = vmatpush.msra.mxu0 %v2129
    %2812 = vmatpush.msra.mxu0 %v2127
    %2813 = vmatpush.msra.mxu0 %v2125
    %2814 = vmatpush.msra.mxu0 %v2123
    %2815 = vmatpush.msra.mxu0 %v2121
    %2816 = vmatpush.msra.mxu0 %v2119
    %2817 = vmatpush.msra.mxu0 %v2117
    %2818 = vmatpush.msra.mxu0 %v2115
    %2819 = vmatpush.msra.mxu0 %v2113
    %2820 = vmatpush.msra.mxu0 %v2111
    %2821 = vmatpush.msra.mxu0 %v2109
    %2822 = vmatpush.msra.mxu0 %v2107
    %2823 = vmatpush.msra.mxu0 %v2105
    %2824 = vmatpush.msra.mxu0 %v2103
    %2825 = vmatpush.msra.mxu0 %v2101
    %2826 = vmatmul.f32.gmra.mxu0 %v2764
    %v2827 = vpop.f32.mrf.mxu0
    %v2828 = vadd.f32 %v2743, %v2827
    %2829 = vdwg.mxu0
    %2830 = vmatpush.msra.mxu0 %v2163
    %2831 = vmatpush.msra.mxu0 %v2161
    %2832 = vmatpush.msra.mxu0 %v2159
    %2833 = vmatpush.msra.mxu0 %v2157
    %2834 = vmatpush.msra.mxu0 %v2155
    %2835 = vmatpush.msra.mxu0 %v2153
    %2836 = vmatpush.msra.mxu0 %v2151
    %2837 = vmatpush.msra.mxu0 %v2149
    %2838 = vmatpush.msra.mxu0 %v2147
    %2839 = vmatpush.msra.mxu0 %v2145
    %2840 = vmatpush.msra.mxu0 %v2143
    %2841 = vmatpush.msra.mxu0 %v2141
    %2842 = vmatpush.msra.mxu0 %v2139
    %2843 = vmatpush.msra.mxu0 %v2137
    %2844 = vmatpush.msra.mxu0 %v2135
    %2845 = vmatpush.msra.mxu0 %v2133
    %2846 = vmatmul.f32.gmra.mxu0 %v2765
    %v2847 = vpop.f32.mrf.mxu0
    %v2848 = vadd.f32 %v2828, %v2847
    %2849 = vdwg.mxu0
    %2850 = vmatpush.msra.mxu0 %v2195
    %2851 = vmatpush.msra.mxu0 %v2193
    %2852 = vmatpush.msra.mxu0 %v2191
    %2853 = vmatpush.msra.mxu0 %v2189
    %2854 = vmatpush.msra.mxu0 %v2187
    %2855 = vmatpush.msra.mxu0 %v2185
    %2856 = vmatpush.msra.mxu0 %v2183
    %2857 = vmatpush.msra.mxu0 %v2181
    %2858 = vmatpush.msra.mxu0 %v2179
    %2859 = vmatpush.msra.mxu0 %v2177
    %2860 = vmatpush.msra.mxu0 %v2175
    %2861 = vmatpush.msra.mxu0 %v2173
    %2862 = vmatpush.msra.mxu0 %v2171
    %2863 = vmatpush.msra.mxu0 %v2169
    %2864 = vmatpush.msra.mxu0 %v2167
    %2865 = vmatpush.msra.mxu0 %v2165
    %2866 = vmatmul.f32.gmra.mxu0 %v2766
    %v2867 = vpop.f32.mrf.mxu0
    %v2868 = vadd.f32 %v2848, %v2867
    %2869 = vdwg.mxu0
    %2870 = vmatpush.msra.mxu0 %v2227
    %2871 = vmatpush.msra.mxu0 %v2225
    %2872 = vmatpush.msra.mxu0 %v2223
    %2873 = vmatpush.msra.mxu0 %v2221
    %2874 = vmatpush.msra.mxu0 %v2219
    %2875 = vmatpush.msra.mxu0 %v2217
    %2876 = vmatpush.msra.mxu0 %v2215
    %2877 = vmatpush.msra.mxu0 %v2213
    %2878 = vmatpush.msra.mxu0 %v2211
    %2879 = vmatpush.msra.mxu0 %v2209
    %2880 = vmatpush.msra.mxu0 %v2207
    %2881 = vmatpush.msra.mxu0 %v2205
    %2882 = vmatpush.msra.mxu0 %v2203
    %2883 = vmatpush.msra.mxu0 %v2201
    %2884 = vmatpush.msra.mxu0 %v2199
    %2885 = vmatpush.msra.mxu0 %v2197
    %2886 = vmatmul.f32.gmra.mxu0 %v2767
    %v2887 = vpop.f32.mrf.mxu0
    %v2888 = vadd.f32 %v2868, %v2887
    %2889 = vdwg.mxu0
    %2890 = vmatpush.msra.mxu0 %v2259
    %2891 = vmatpush.msra.mxu0 %v2257
    %2892 = vmatpush.msra.mxu0 %v2255
    %2893 = vmatpush.msra.mxu0 %v2253
    %2894 = vmatpush.msra.mxu0 %v2251
    %2895 = vmatpush.msra.mxu0 %v2249
    %2896 = vmatpush.msra.mxu0 %v2247
    %2897 = vmatpush.msra.mxu0 %v2245
    %2898 = vmatpush.msra.mxu0 %v2243
    %2899 = vmatpush.msra.mxu0 %v2241
    %2900 = vmatpush.msra.mxu0 %v2239
    %2901 = vmatpush.msra.mxu0 %v2237
    %2902 = vmatpush.msra.mxu0 %v2235
    %2903 = vmatpush.msra.mxu0 %v2233
    %2904 = vmatpush.msra.mxu0 %v2231
    %2905 = vmatpush.msra.mxu0 %v2229
    %2906 = vmatmul.f32.gmra.mxu0 %v2768
    %v2907 = vpop.f32.mrf.mxu0
    %v2908 = vadd.f32 %v2888, %v2907
    %2909 = vdwg.mxu0
    %2910 = vmatpush.msra.mxu0 %v2291
    %2911 = vmatpush.msra.mxu0 %v2289
    %2912 = vmatpush.msra.mxu0 %v2287
    %2913 = vmatpush.msra.mxu0 %v2285
    %2914 = vmatpush.msra.mxu0 %v2283
    %2915 = vmatpush.msra.mxu0 %v2281
    %2916 = vmatpush.msra.mxu0 %v2279
    %2917 = vmatpush.msra.mxu0 %v2277
    %2918 = vmatpush.msra.mxu0 %v2275
    %2919 = vmatpush.msra.mxu0 %v2273
    %2920 = vmatpush.msra.mxu0 %v2271
    %2921 = vmatpush.msra.mxu0 %v2269
    %2922 = vmatpush.msra.mxu0 %v2267
    %2923 = vmatpush.msra.mxu0 %v2265
    %2924 = vmatpush.msra.mxu0 %v2263
    %2925 = vmatpush.msra.mxu0 %v2261
    %2926 = vmatmul.f32.gmra.mxu0 %v2769
    %v2927 = vpop.f32.mrf.mxu0
    %v2928 = vadd.f32 %v2908, %v2927
    %2929 = vdwg.mxu0
    %2930 = vmatpush.msra.mxu0 %v2323
    %2931 = vmatpush.msra.mxu0 %v2321
    %2932 = vmatpush.msra.mxu0 %v2319
    %2933 = vmatpush.msra.mxu0 %v2317
    %2934 = vmatpush.msra.mxu0 %v2315
    %2935 = vmatpush.msra.mxu0 %v2313
    %2936 = vmatpush.msra.mxu0 %v2311
    %2937 = vmatpush.msra.mxu0 %v2309
    %2938 = vmatpush.msra.mxu0 %v2307
    %2939 = vmatpush.msra.mxu0 %v2305
    %2940 = vmatpush.msra.mxu0 %v2303
    %2941 = vmatpush.msra.mxu0 %v2301
    %2942 = vmatpush.msra.mxu0 %v2299
    %2943 = vmatpush.msra.mxu0 %v2297
    %2944 = vmatpush.msra.mxu0 %v2295
    %2945 = vmatpush.msra.mxu0 %v2293
    %2946 = vmatmul.f32.gmra.mxu0 %v2770
    %v2947 = vpop.f32.mrf.mxu0
    %v2948 = vadd.f32 %v2928, %v2947
    %2949 = vdwg.mxu0
    %2950 = vmatpush.msra.mxu0 %v2355
    %2951 = vmatpush.msra.mxu0 %v2353
    %2952 = vmatpush.msra.mxu0 %v2351
    %2953 = vmatpush.msra.mxu0 %v2349
    %2954 = vmatpush.msra.mxu0 %v2347
    %2955 = vmatpush.msra.mxu0 %v2345
    %2956 = vmatpush.msra.mxu0 %v2343
    %2957 = vmatpush.msra.mxu0 %v2341
    %2958 = vmatpush.msra.mxu0 %v2339
    %2959 = vmatpush.msra.mxu0 %v2337
    %2960 = vmatpush.msra.mxu0 %v2335
    %2961 = vmatpush.msra.mxu0 %v2333
    %2962 = vmatpush.msra.mxu0 %v2331
    %2963 = vmatpush.msra.mxu0 %v2329
    %2964 = vmatpush.msra.mxu0 %v2327
    %2965 = vmatpush.msra.mxu0 %v2325
    %2966 = vmatmul.f32.gmra.mxu0 %v2771
    %v2967 = vpop.f32.mrf.mxu0
    %v2968 = vadd.f32 %v2948, %v2967
    %2969 = vdwg.mxu0
    %2970 = vmatpush.msra.mxu0 %v2387
    %2971 = vmatpush.msra.mxu0 %v2385
    %2972 = vmatpush.msra.mxu0 %v2383
    %2973 = vmatpush.msra.mxu0 %v2381
    %2974 = vmatpush.msra.mxu0 %v2379
    %2975 = vmatpush.msra.mxu0 %v2377
    %2976 = vmatpush.msra.mxu0 %v2375
    %2977 = vmatpush.msra.mxu0 %v2373
    %2978 = vmatpush.msra.mxu0 %v2371
    %2979 = vmatpush.msra.mxu0 %v2369
    %2980 = vmatpush.msra.mxu0 %v2367
    %2981 = vmatpush.msra.mxu0 %v2365
    %2982 = vmatpush.msra.mxu0 %v2363
    %2983 = vmatpush.msra.mxu0 %v2361
    %2984 = vmatpush.msra.mxu0 %v2359
    %2985 = vmatpush.msra.mxu0 %v2357
    %2986 = vmatmul.f32.gmra.mxu0 %v2776
    %v2987 = vpop.f32.mrf.mxu0
    %v2988 = vadd.f32 %v2968, %v2987
    %2989 = vdwg.mxu0
    %2990 = vmatpush.msra.mxu0 %v2419
    %2991 = vmatpush.msra.mxu0 %v2417
    %2992 = vmatpush.msra.mxu0 %v2415
    %2993 = vmatpush.msra.mxu0 %v2413
    %2994 = vmatpush.msra.mxu0 %v2411
    %2995 = vmatpush.msra.mxu0 %v2409
    %2996 = vmatpush.msra.mxu0 %v2407
    %2997 = vmatpush.msra.mxu0 %v2405
    %2998 = vmatpush.msra.mxu0 %v2403
    %2999 = vmatpush.msra.mxu0 %v2401
    %3000 = vmatpush.msra.mxu0 %v2399
    %3001 = vmatpush.msra.mxu0 %v2397
    %3002 = vmatpush.msra.mxu0 %v2395
    %3003 = vmatpush.msra.mxu0 %v2393
    %3004 = vmatpush.msra.mxu0 %v2391
    %3005 = vmatpush.msra.mxu0 %v2389
    %3006 = vmatmul.f32.gmra.mxu0 %v2777
    %v3007 = vpop.f32.mrf.mxu0
    %v3008 = vadd.f32 %v2988, %v3007
    %3009 = vdwg.mxu0
    %3010 = vmatpush.msra.mxu0 %v2451
    %3011 = vmatpush.msra.mxu0 %v2449
    %3012 = vmatpush.msra.mxu0 %v2447
    %3013 = vmatpush.msra.mxu0 %v2445
    %3014 = vmatpush.msra.mxu0 %v2443
    %3015 = vmatpush.msra.mxu0 %v2441
    %3016 = vmatpush.msra.mxu0 %v2439
    %3017 = vmatpush.msra.mxu0 %v2437
    %3018 = vmatpush.msra.mxu0 %v2435
    %3019 = vmatpush.msra.mxu0 %v2433
    %3020 = vmatpush.msra.mxu0 %v2431
    %3021 = vmatpush.msra.mxu0 %v2429
    %3022 = vmatpush.msra.mxu0 %v2427
    %3023 = vmatpush.msra.mxu0 %v2425
    %3024 = vmatpush.msra.mxu0 %v2423
    %3025 = vmatpush.msra.mxu0 %v2421
    %3026 = vmatmul.f32.gmra.mxu0 %v2778
    %v3027 = vpop.f32.mrf.mxu0
    %v3028 = vadd.f32 %v3008, %v3027
    %3029 = vdwg.mxu0
    %3030 = vmatpush.msra.mxu0 %v2483
    %3031 = vmatpush.msra.mxu0 %v2481
    %3032 = vmatpush.msra.mxu0 %v2479
    %3033 = vmatpush.msra.mxu0 %v2477
    %3034 = vmatpush.msra.mxu0 %v2475
    %3035 = vmatpush.msra.mxu0 %v2473
    %3036 = vmatpush.msra.mxu0 %v2471
    %3037 = vmatpush.msra.mxu0 %v2469
    %3038 = vmatpush.msra.mxu0 %v2467
    %3039 = vmatpush.msra.mxu0 %v2465
    %3040 = vmatpush.msra.mxu0 %v2463
    %3041 = vmatpush.msra.mxu0 %v2461
    %3042 = vmatpush.msra.mxu0 %v2459
    %3043 = vmatpush.msra.mxu0 %v2457
    %3044 = vmatpush.msra.mxu0 %v2455
    %3045 = vmatpush.msra.mxu0 %v2453
    %3046 = vmatmul.f32.gmra.mxu0 %v2779
    %v3047 = vpop.f32.mrf.mxu0
    %v3048 = vadd.f32 %v3028, %v3047
    %3049 = vdwg.mxu0
    %3050 = vmatpush.msra.mxu0 %v2515
    %3051 = vmatpush.msra.mxu0 %v2513
    %3052 = vmatpush.msra.mxu0 %v2511
    %3053 = vmatpush.msra.mxu0 %v2509
    %3054 = vmatpush.msra.mxu0 %v2507
    %3055 = vmatpush.msra.mxu0 %v2505
    %3056 = vmatpush.msra.mxu0 %v2503
    %3057 = vmatpush.msra.mxu0 %v2501
    %3058 = vmatpush.msra.mxu0 %v2499
    %3059 = vmatpush.msra.mxu0 %v2497
    %3060 = vmatpush.msra.mxu0 %v2495
    %3061 = vmatpush.msra.mxu0 %v2493
    %3062 = vmatpush.msra.mxu0 %v2491
    %3063 = vmatpush.msra.mxu0 %v2489
    %3064 = vmatpush.msra.mxu0 %v2487
    %3065 = vmatpush.msra.mxu0 %v2485
    %3066 = vmatmul.f32.gmra.mxu0 %v2780
    %v3067 = vpop.f32.mrf.mxu0
    %v3068 = vadd.f32 %v3048, %v3067
    %3069 = vdwg.mxu0
    %3070 = vmatpush.msra.mxu0 %v2547
    %3071 = vmatpush.msra.mxu0 %v2545
    %3072 = vmatpush.msra.mxu0 %v2543
    %3073 = vmatpush.msra.mxu0 %v2541
    %3074 = vmatpush.msra.mxu0 %v2539
    %3075 = vmatpush.msra.mxu0 %v2537
    %3076 = vmatpush.msra.mxu0 %v2535
    %3077 = vmatpush.msra.mxu0 %v2533
    %3078 = vmatpush.msra.mxu0 %v2531
    %3079 = vmatpush.msra.mxu0 %v2529
    %3080 = vmatpush.msra.mxu0 %v2527
    %3081 = vmatpush.msra.mxu0 %v2525
    %3082 = vmatpush.msra.mxu0 %v2523
    %3083 = vmatpush.msra.mxu0 %v2521
    %3084 = vmatpush.msra.mxu0 %v2519
    %3085 = vmatpush.msra.mxu0 %v2517
    %3086 = vmatmul.f32.gmra.mxu0 %v2781
    %v3087 = vpop.f32.mrf.mxu0
    %v3088 = vadd.f32 %v3068, %v3087
    %3089 = vdwg.mxu0
    %3090 = vmatpush.msra.mxu0 %v2579
    %3091 = vmatpush.msra.mxu0 %v2577
    %3092 = vmatpush.msra.mxu0 %v2575
    %3093 = vmatpush.msra.mxu0 %v2573
    %3094 = vmatpush.msra.mxu0 %v2571
    %3095 = vmatpush.msra.mxu0 %v2569
    %3096 = vmatpush.msra.mxu0 %v2567
    %3097 = vmatpush.msra.mxu0 %v2565
    %3098 = vmatpush.msra.mxu0 %v2563
    %3099 = vmatpush.msra.mxu0 %v2561
    %3100 = vmatpush.msra.mxu0 %v2559
    %3101 = vmatpush.msra.mxu0 %v2557
    %3102 = vmatpush.msra.mxu0 %v2555
    %3103 = vmatpush.msra.mxu0 %v2553
    %3104 = vmatpush.msra.mxu0 %v2551
    %3105 = vmatpush.msra.mxu0 %v2549
    %3106 = vmatmul.f32.gmra.mxu0 %v2782
    %v3107 = vpop.f32.mrf.mxu0
    %v3108 = vadd.f32 %v3088, %v3107
    %3109 = vdwg.mxu0
    %3110 = vmatpush.msra.mxu0 %v2611
    %3111 = vmatpush.msra.mxu0 %v2609
    %3112 = vmatpush.msra.mxu0 %v2607
    %3113 = vmatpush.msra.mxu0 %v2605
    %3114 = vmatpush.msra.mxu0 %v2603
    %3115 = vmatpush.msra.mxu0 %v2601
    %3116 = vmatpush.msra.mxu0 %v2599
    %3117 = vmatpush.msra.mxu0 %v2597
    %3118 = vmatpush.msra.mxu0 %v2595
    %3119 = vmatpush.msra.mxu0 %v2593
    %3120 = vmatpush.msra.mxu0 %v2591
    %3121 = vmatpush.msra.mxu0 %v2589
    %3122 = vmatpush.msra.mxu0 %v2587
    %3123 = vmatpush.msra.mxu0 %v2585
    %3124 = vmatpush.msra.mxu0 %v2583
    %3125 = vmatpush.msra.mxu0 %v2581
    %3126 = vmatmul.f32.gmra.mxu0 %v2783
    %v3127 = vpop.f32.mrf.mxu0
    %v3128 = vadd.f32 %v3108, %v3127
    %3129 = vdwg.mxu0
    %3130 = vmatpush.msra.mxu0 %v2643
    %3131 = vmatpush.msra.mxu0 %v2641
    %3132 = vmatpush.msra.mxu0 %v2639
    %3133 = vmatpush.msra.mxu0 %v2637
    %3134 = vmatpush.msra.mxu0 %v2635
    %3135 = vmatpush.msra.mxu0 %v2633
    %3136 = vmatpush.msra.mxu0 %v2631
    %3137 = vmatpush.msra.mxu0 %v2629
    %3138 = vmatpush.msra.mxu0 %v2627
    %3139 = vmatpush.msra.mxu0 %v2625
    %3140 = vmatpush.msra.mxu0 %v2623
    %3141 = vmatpush.msra.mxu0 %v2621
    %3142 = vmatpush.msra.mxu0 %v2619
    %3143 = vmatpush.msra.mxu0 %v2617
    %3144 = vmatpush.msra.mxu0 %v2615
    %3145 = vmatpush.msra.mxu0 %v2613
    %3146 = vmatmul.f32.gmra.mxu0 %v2786
    %v3147 = vpop.f32.mrf.mxu0
    %v3148 = vadd.f32 %v3128, %v3147
    %3149 = vdwg.mxu0
    %3150 = vmatpush.msra.mxu0 %v2675
    %3151 = vmatpush.msra.mxu0 %v2673
    %3152 = vmatpush.msra.mxu0 %v2671
    %3153 = vmatpush.msra.mxu0 %v2669
    %3154 = vmatpush.msra.mxu0 %v2667
    %3155 = vmatpush.msra.mxu0 %v2665
    %3156 = vmatpush.msra.mxu0 %v2663
    %3157 = vmatpush.msra.mxu0 %v2661
    %3158 = vmatpush.msra.mxu0 %v2659
    %3159 = vmatpush.msra.mxu0 %v2657
    %3160 = vmatpush.msra.mxu0 %v2655
    %3161 = vmatpush.msra.mxu0 %v2653
    %3162 = vmatpush.msra.mxu0 %v2651
    %3163 = vmatpush.msra.mxu0 %v2649
    %3164 = vmatpush.msra.mxu0 %v2647
    %3165 = vmatpush.msra.mxu0 %v2645
    %3166 = vmatmul.f32.gmra.mxu0 %v2787
    %v3167 = vpop.f32.mrf.mxu0
    %v3168 = vadd.f32 %v3148, %v3167
    %3169 = vdwg.mxu0
    %3170 = vmatpush.msra.mxu0 %v2707
    %3171 = vmatpush.msra.mxu0 %v2705
    %3172 = vmatpush.msra.mxu0 %v2703
    %3173 = vmatpush.msra.mxu0 %v2701
    %3174 = vmatpush.msra.mxu0 %v2699
    %3175 = vmatpush.msra.mxu0 %v2697
    %3176 = vmatpush.msra.mxu0 %v2695
    %3177 = vmatpush.msra.mxu0 %v2693
    %3178 = vmatpush.msra.mxu0 %v2691
    %3179 = vmatpush.msra.mxu0 %v2689
    %3180 = vmatpush.msra.mxu0 %v2687
    %3181 = vmatpush.msra.mxu0 %v2685
    %3182 = vmatpush.msra.mxu0 %v2683
    %3183 = vmatpush.msra.mxu0 %v2681
    %3184 = vmatpush.msra.mxu0 %v2679
    %3185 = vmatpush.msra.mxu0 %v2677
    %3186 = vmatmul.f32.gmra.mxu0 %v2788
    %v3187 = vpop.f32.mrf.mxu0
    %v3188 = vadd.f32 %v3168, %v3187
    %3189 = vdwg.mxu0
    %3190 = vmatpush.msra.mxu0 %v2739
    %3191 = vmatpush.msra.mxu0 %v2737
    %3192 = vmatpush.msra.mxu0 %v2735
    %3193 = vmatpush.msra.mxu0 %v2733
    %3194 = vmatpush.msra.mxu0 %v2731
    %3195 = vmatpush.msra.mxu0 %v2729
    %3196 = vmatpush.msra.mxu0 %v2727
    %3197 = vmatpush.msra.mxu0 %v2725
    %3198 = vmatpush.msra.mxu0 %v2723
    %3199 = vmatpush.msra.mxu0 %v2721
    %3200 = vmatpush.msra.mxu0 %v2719
    %3201 = vmatpush.msra.mxu0 %v2717
    %3202 = vmatpush.msra.mxu0 %v2715
    %3203 = vmatpush.msra.mxu0 %v2713
    %3204 = vmatpush.msra.mxu0 %v2711
    %3205 = vmatpush.msra.mxu0 %v2709
    %3206 = vmatmul.f32.gmra.mxu0 %v2789
    %v3207 = vpop.f32.mrf.mxu0
    %v3208 = vadd.f32 %v3188, %v3207
    %3209 = vdwg.mxu0
    %3210 = vmatpush.msra.mxu0 %v2132
    %3211 = vmatpush.msra.mxu0 %v2130
    %3212 = vmatpush.msra.mxu0 %v2128
    %3213 = vmatpush.msra.mxu0 %v2126
    %3214 = vmatpush.msra.mxu0 %v2124
    %3215 = vmatpush.msra.mxu0 %v2122
    %3216 = vmatpush.msra.mxu0 %v2120
    %3217 = vmatpush.msra.mxu0 %v2118
    %3218 = vmatpush.msra.mxu0 %v2116
    %3219 = vmatpush.msra.mxu0 %v2114
    %3220 = vmatpush.msra.mxu0 %v2112
    %3221 = vmatpush.msra.mxu0 %v2110
    %3222 = vmatpush.msra.mxu0 %v2108
    %3223 = vmatpush.msra.mxu0 %v2106
    %3224 = vmatpush.msra.mxu0 %v2104
    %3225 = vmatpush.msra.mxu0 %v2102
    %3226 = vmatmul.f32.gmra.mxu0 %v2764
    %v3227 = vpop.f32.mrf.mxu0
    %v3228 = vadd.f32 %v2744, %v3227
    %3229 = vdwg.mxu0
    %3230 = vmatpush.msra.mxu0 %v2164
    %3231 = vmatpush.msra.mxu0 %v2162
    %3232 = vmatpush.msra.mxu0 %v2160
    %3233 = vmatpush.msra.mxu0 %v2158
    %3234 = vmatpush.msra.mxu0 %v2156
    %3235 = vmatpush.msra.mxu0 %v2154
    %3236 = vmatpush.msra.mxu0 %v2152
    %3237 = vmatpush.msra.mxu0 %v2150
    %3238 = vmatpush.msra.mxu0 %v2148
    %3239 = vmatpush.msra.mxu0 %v2146
    %3240 = vmatpush.msra.mxu0 %v2144
    %3241 = vmatpush.msra.mxu0 %v2142
    %3242 = vmatpush.msra.mxu0 %v2140
    %3243 = vmatpush.msra.mxu0 %v2138
    %3244 = vmatpush.msra.mxu0 %v2136
    %3245 = vmatpush.msra.mxu0 %v2134
    %3246 = vmatmul.f32.gmra.mxu0 %v2765
    %v3247 = vpop.f32.mrf.mxu0
    %v3248 = vadd.f32 %v3228, %v3247
    %3249 = vdwg.mxu0
    %3250 = vmatpush.msra.mxu0 %v2196
    %3251 = vmatpush.msra.mxu0 %v2194
    %3252 = vmatpush.msra.mxu0 %v2192
    %3253 = vmatpush.msra.mxu0 %v2190
    %3254 = vmatpush.msra.mxu0 %v2188
    %3255 = vmatpush.msra.mxu0 %v2186
    %3256 = vmatpush.msra.mxu0 %v2184
    %3257 = vmatpush.msra.mxu0 %v2182
    %3258 = vmatpush.msra.mxu0 %v2180
    %3259 = vmatpush.msra.mxu0 %v2178
    %3260 = vmatpush.msra.mxu0 %v2176
    %3261 = vmatpush.msra.mxu0 %v2174
    %3262 = vmatpush.msra.mxu0 %v2172
    %3263 = vmatpush.msra.mxu0 %v2170
    %3264 = vmatpush.msra.mxu0 %v2168
    %3265 = vmatpush.msra.mxu0 %v2166
    %3266 = vmatmul.f32.gmra.mxu0 %v2766
    %v3267 = vpop.f32.mrf.mxu0
    %v3268 = vadd.f32 %v3248, %v3267
    %3269 = vdwg.mxu0
    %3270 = vmatpush.msra.mxu0 %v2228
    %3271 = vmatpush.msra.mxu0 %v2226
    %3272 = vmatpush.msra.mxu0 %v2224
    %3273 = vmatpush.msra.mxu0 %v2222
    %3274 = vmatpush.msra.mxu0 %v2220
    %3275 = vmatpush.msra.mxu0 %v2218
    %3276 = vmatpush.msra.mxu0 %v2216
    %3277 = vmatpush.msra.mxu0 %v2214
    %3278 = vmatpush.msra.mxu0 %v2212
    %3279 = vmatpush.msra.mxu0 %v2210
    %3280 = vmatpush.msra.mxu0 %v2208
    %3281 = vmatpush.msra.mxu0 %v2206
    %3282 = vmatpush.msra.mxu0 %v2204
    %3283 = vmatpush.msra.mxu0 %v2202
    %3284 = vmatpush.msra.mxu0 %v2200
    %3285 = vmatpush.msra.mxu0 %v2198
    %3286 = vmatmul.f32.gmra.mxu0 %v2767
    %v3287 = vpop.f32.mrf.mxu0
    %v3288 = vadd.f32 %v3268, %v3287
    %3289 = vdwg.mxu0
    %3290 = vmatpush.msra.mxu0 %v2260
    %3291 = vmatpush.msra.mxu0 %v2258
    %3292 = vmatpush.msra.mxu0 %v2256
    %3293 = vmatpush.msra.mxu0 %v2254
    %3294 = vmatpush.msra.mxu0 %v2252
    %3295 = vmatpush.msra.mxu0 %v2250
    %3296 = vmatpush.msra.mxu0 %v2248
    %3297 = vmatpush.msra.mxu0 %v2246
    %3298 = vmatpush.msra.mxu0 %v2244
    %3299 = vmatpush.msra.mxu0 %v2242
    %3300 = vmatpush.msra.mxu0 %v2240
    %3301 = vmatpush.msra.mxu0 %v2238
    %3302 = vmatpush.msra.mxu0 %v2236
    %3303 = vmatpush.msra.mxu0 %v2234
    %3304 = vmatpush.msra.mxu0 %v2232
    %3305 = vmatpush.msra.mxu0 %v2230
    %3306 = vmatmul.f32.gmra.mxu0 %v2768
    %v3307 = vpop.f32.mrf.mxu0
    %v3308 = vadd.f32 %v3288, %v3307
    %3309 = vdwg.mxu0
    %3310 = vmatpush.msra.mxu0 %v2292
    %3311 = vmatpush.msra.mxu0 %v2290
    %3312 = vmatpush.msra.mxu0 %v2288
    %3313 = vmatpush.msra.mxu0 %v2286
    %3314 = vmatpush.msra.mxu0 %v2284
    %3315 = vmatpush.msra.mxu0 %v2282
    %3316 = vmatpush.msra.mxu0 %v2280
    %3317 = vmatpush.msra.mxu0 %v2278
    %3318 = vmatpush.msra.mxu0 %v2276
    %3319 = vmatpush.msra.mxu0 %v2274
    %3320 = vmatpush.msra.mxu0 %v2272
    %3321 = vmatpush.msra.mxu0 %v2270
    %3322 = vmatpush.msra.mxu0 %v2268
    %3323 = vmatpush.msra.mxu0 %v2266
    %3324 = vmatpush.msra.mxu0 %v2264
    %3325 = vmatpush.msra.mxu0 %v2262
    %3326 = vmatmul.f32.gmra.mxu0 %v2769
    %v3327 = vpop.f32.mrf.mxu0
    %v3328 = vadd.f32 %v3308, %v3327
    %3329 = vdwg.mxu0
    %3330 = vmatpush.msra.mxu0 %v2324
    %3331 = vmatpush.msra.mxu0 %v2322
    %3332 = vmatpush.msra.mxu0 %v2320
    %3333 = vmatpush.msra.mxu0 %v2318
    %3334 = vmatpush.msra.mxu0 %v2316
    %3335 = vmatpush.msra.mxu0 %v2314
    %3336 = vmatpush.msra.mxu0 %v2312
    %3337 = vmatpush.msra.mxu0 %v2310
    %3338 = vmatpush.msra.mxu0 %v2308
    %3339 = vmatpush.msra.mxu0 %v2306
    %3340 = vmatpush.msra.mxu0 %v2304
    %3341 = vmatpush.msra.mxu0 %v2302
    %3342 = vmatpush.msra.mxu0 %v2300
    %3343 = vmatpush.msra.mxu0 %v2298
    %3344 = vmatpush.msra.mxu0 %v2296
    %3345 = vmatpush.msra.mxu0 %v2294
    %3346 = vmatmul.f32.gmra.mxu0 %v2770
    %v3347 = vpop.f32.mrf.mxu0
    %v3348 = vadd.f32 %v3328, %v3347
    %3349 = vdwg.mxu0
    %3350 = vmatpush.msra.mxu0 %v2356
    %3351 = vmatpush.msra.mxu0 %v2354
    %3352 = vmatpush.msra.mxu0 %v2352
    %3353 = vmatpush.msra.mxu0 %v2350
    %3354 = vmatpush.msra.mxu0 %v2348
    %3355 = vmatpush.msra.mxu0 %v2346
    %3356 = vmatpush.msra.mxu0 %v2344
    %3357 = vmatpush.msra.mxu0 %v2342
    %3358 = vmatpush.msra.mxu0 %v2340
    %3359 = vmatpush.msra.mxu0 %v2338
    %3360 = vmatpush.msra.mxu0 %v2336
    %3361 = vmatpush.msra.mxu0 %v2334
    %3362 = vmatpush.msra.mxu0 %v2332
    %3363 = vmatpush.msra.mxu0 %v2330
    %3364 = vmatpush.msra.mxu0 %v2328
    %3365 = vmatpush.msra.mxu0 %v2326
    %3366 = vmatmul.f32.gmra.mxu0 %v2771
    %v3367 = vpop.f32.mrf.mxu0
    %v3368 = vadd.f32 %v3348, %v3367
    %3369 = vdwg.mxu0
    %3370 = vmatpush.msra.mxu0 %v2388
    %3371 = vmatpush.msra.mxu0 %v2386
    %3372 = vmatpush.msra.mxu0 %v2384
    %3373 = vmatpush.msra.mxu0 %v2382
    %3374 = vmatpush.msra.mxu0 %v2380
    %3375 = vmatpush.msra.mxu0 %v2378
    %3376 = vmatpush.msra.mxu0 %v2376
    %3377 = vmatpush.msra.mxu0 %v2374
    %3378 = vmatpush.msra.mxu0 %v2372
    %3379 = vmatpush.msra.mxu0 %v2370
    %3380 = vmatpush.msra.mxu0 %v2368
    %3381 = vmatpush.msra.mxu0 %v2366
    %3382 = vmatpush.msra.mxu0 %v2364
    %3383 = vmatpush.msra.mxu0 %v2362
    %3384 = vmatpush.msra.mxu0 %v2360
    %3385 = vmatpush.msra.mxu0 %v2358
    %3386 = vmatmul.f32.gmra.mxu0 %v2776
    %v3387 = vpop.f32.mrf.mxu0
    %v3388 = vadd.f32 %v3368, %v3387
    %3389 = vdwg.mxu0
    %3390 = vmatpush.msra.mxu0 %v2420
    %3391 = vmatpush.msra.mxu0 %v2418
    %3392 = vmatpush.msra.mxu0 %v2416
    %3393 = vmatpush.msra.mxu0 %v2414
    %3394 = vmatpush.msra.mxu0 %v2412
    %3395 = vmatpush.msra.mxu0 %v2410
    %3396 = vmatpush.msra.mxu0 %v2408
    %3397 = vmatpush.msra.mxu0 %v2406
    %3398 = vmatpush.msra.mxu0 %v2404
    %3399 = vmatpush.msra.mxu0 %v2402
    %3400 = vmatpush.msra.mxu0 %v2400
    %3401 = vmatpush.msra.mxu0 %v2398
    %3402 = vmatpush.msra.mxu0 %v2396
    %3403 = vmatpush.msra.mxu0 %v2394
    %3404 = vmatpush.msra.mxu0 %v2392
    %3405 = vmatpush.msra.mxu0 %v2390
    %3406 = vmatmul.f32.gmra.mxu0 %v2777
    %v3407 = vpop.f32.mrf.mxu0
    %v3408 = vadd.f32 %v3388, %v3407
    %3409 = vdwg.mxu0
    %3410 = vmatpush.msra.mxu0 %v2452
    %3411 = vmatpush.msra.mxu0 %v2450
    %3412 = vmatpush.msra.mxu0 %v2448
    %3413 = vmatpush.msra.mxu0 %v2446
    %3414 = vmatpush.msra.mxu0 %v2444
    %3415 = vmatpush.msra.mxu0 %v2442
    %3416 = vmatpush.msra.mxu0 %v2440
    %3417 = vmatpush.msra.mxu0 %v2438
    %3418 = vmatpush.msra.mxu0 %v2436
    %3419 = vmatpush.msra.mxu0 %v2434
    %3420 = vmatpush.msra.mxu0 %v2432
    %3421 = vmatpush.msra.mxu0 %v2430
    %3422 = vmatpush.msra.mxu0 %v2428
    %3423 = vmatpush.msra.mxu0 %v2426
    %3424 = vmatpush.msra.mxu0 %v2424
    %3425 = vmatpush.msra.mxu0 %v2422
    %3426 = vmatmul.f32.gmra.mxu0 %v2778
    %v3427 = vpop.f32.mrf.mxu0
    %v3428 = vadd.f32 %v3408, %v3427
    %3429 = vdwg.mxu0
    %3430 = vmatpush.msra.mxu0 %v2484
    %3431 = vmatpush.msra.mxu0 %v2482
    %3432 = vmatpush.msra.mxu0 %v2480
    %3433 = vmatpush.msra.mxu0 %v2478
    %3434 = vmatpush.msra.mxu0 %v2476
    %3435 = vmatpush.msra.mxu0 %v2474
    %3436 = vmatpush.msra.mxu0 %v2472
    %3437 = vmatpush.msra.mxu0 %v2470
    %3438 = vmatpush.msra.mxu0 %v2468
    %3439 = vmatpush.msra.mxu0 %v2466
    %3440 = vmatpush.msra.mxu0 %v2464
    %3441 = vmatpush.msra.mxu0 %v2462
    %3442 = vmatpush.msra.mxu0 %v2460
    %3443 = vmatpush.msra.mxu0 %v2458
    %3444 = vmatpush.msra.mxu0 %v2456
    %3445 = vmatpush.msra.mxu0 %v2454
    %3446 = vmatmul.f32.gmra.mxu0 %v2779
    %v3447 = vpop.f32.mrf.mxu0
    %v3448 = vadd.f32 %v3428, %v3447
    %3449 = vdwg.mxu0
    %3450 = vmatpush.msra.mxu0 %v2516
    %3451 = vmatpush.msra.mxu0 %v2514
    %3452 = vmatpush.msra.mxu0 %v2512
    %3453 = vmatpush.msra.mxu0 %v2510
    %3454 = vmatpush.msra.mxu0 %v2508
    %3455 = vmatpush.msra.mxu0 %v2506
    %3456 = vmatpush.msra.mxu0 %v2504
    %3457 = vmatpush.msra.mxu0 %v2502
    %3458 = vmatpush.msra.mxu0 %v2500
    %3459 = vmatpush.msra.mxu0 %v2498
    %3460 = vmatpush.msra.mxu0 %v2496
    %3461 = vmatpush.msra.mxu0 %v2494
    %3462 = vmatpush.msra.mxu0 %v2492
    %3463 = vmatpush.msra.mxu0 %v2490
    %3464 = vmatpush.msra.mxu0 %v2488
    %3465 = vmatpush.msra.mxu0 %v2486
    %3466 = vmatmul.f32.gmra.mxu0 %v2780
    %v3467 = vpop.f32.mrf.mxu0
    %v3468 = vadd.f32 %v3448, %v3467
    %3469 = vdwg.mxu0
    %3470 = vmatpush.msra.mxu0 %v2548
    %3471 = vmatpush.msra.mxu0 %v2546
    %3472 = vmatpush.msra.mxu0 %v2544
    %3473 = vmatpush.msra.mxu0 %v2542
    %3474 = vmatpush.msra.mxu0 %v2540
    %3475 = vmatpush.msra.mxu0 %v2538
    %3476 = vmatpush.msra.mxu0 %v2536
    %3477 = vmatpush.msra.mxu0 %v2534
    %3478 = vmatpush.msra.mxu0 %v2532
    %3479 = vmatpush.msra.mxu0 %v2530
    %3480 = vmatpush.msra.mxu0 %v2528
    %3481 = vmatpush.msra.mxu0 %v2526
    %3482 = vmatpush.msra.mxu0 %v2524
    %3483 = vmatpush.msra.mxu0 %v2522
    %3484 = vmatpush.msra.mxu0 %v2520
    %3485 = vmatpush.msra.mxu0 %v2518
    %3486 = vmatmul.f32.gmra.mxu0 %v2781
    %v3487 = vpop.f32.mrf.mxu0
    %v3488 = vadd.f32 %v3468, %v3487
    %3489 = vdwg.mxu0
    %3490 = vmatpush.msra.mxu0 %v2580
    %3491 = vmatpush.msra.mxu0 %v2578
    %3492 = vmatpush.msra.mxu0 %v2576
    %3493 = vmatpush.msra.mxu0 %v2574
    %3494 = vmatpush.msra.mxu0 %v2572
    %3495 = vmatpush.msra.mxu0 %v2570
    %3496 = vmatpush.msra.mxu0 %v2568
    %3497 = vmatpush.msra.mxu0 %v2566
    %3498 = vmatpush.msra.mxu0 %v2564
    %3499 = vmatpush.msra.mxu0 %v2562
    %3500 = vmatpush.msra.mxu0 %v2560
    %3501 = vmatpush.msra.mxu0 %v2558
    %3502 = vmatpush.msra.mxu0 %v2556
    %3503 = vmatpush.msra.mxu0 %v2554
    %3504 = vmatpush.msra.mxu0 %v2552
    %3505 = vmatpush.msra.mxu0 %v2550
    %3506 = vmatmul.f32.gmra.mxu0 %v2782
    %v3507 = vpop.f32.mrf.mxu0
    %v3508 = vadd.f32 %v3488, %v3507
    %3509 = vdwg.mxu0
    %3510 = vmatpush.msra.mxu0 %v2612
    %3511 = vmatpush.msra.mxu0 %v2610
    %3512 = vmatpush.msra.mxu0 %v2608
    %3513 = vmatpush.msra.mxu0 %v2606
    %3514 = vmatpush.msra.mxu0 %v2604
    %3515 = vmatpush.msra.mxu0 %v2602
    %3516 = vmatpush.msra.mxu0 %v2600
    %3517 = vmatpush.msra.mxu0 %v2598
    %3518 = vmatpush.msra.mxu0 %v2596
    %3519 = vmatpush.msra.mxu0 %v2594
    %3520 = vmatpush.msra.mxu0 %v2592
    %3521 = vmatpush.msra.mxu0 %v2590
    %3522 = vmatpush.msra.mxu0 %v2588
    %3523 = vmatpush.msra.mxu0 %v2586
    %3524 = vmatpush.msra.mxu0 %v2584
    %3525 = vmatpush.msra.mxu0 %v2582
    %3526 = vmatmul.f32.gmra.mxu0 %v2783
    %v3527 = vpop.f32.mrf.mxu0
    %v3528 = vadd.f32 %v3508, %v3527
    %3529 = vdwg.mxu0
    %3530 = vmatpush.msra.mxu0 %v2644
    %3531 = vmatpush.msra.mxu0 %v2642
    %3532 = vmatpush.msra.mxu0 %v2640
    %3533 = vmatpush.msra.mxu0 %v2638
    %3534 = vmatpush.msra.mxu0 %v2636
    %3535 = vmatpush.msra.mxu0 %v2634
    %3536 = vmatpush.msra.mxu0 %v2632
    %3537 = vmatpush.msra.mxu0 %v2630
    %3538 = vmatpush.msra.mxu0 %v2628
    %3539 = vmatpush.msra.mxu0 %v2626
    %3540 = vmatpush.msra.mxu0 %v2624
    %3541 = vmatpush.msra.mxu0 %v2622
    %3542 = vmatpush.msra.mxu0 %v2620
    %3543 = vmatpush.msra.mxu0 %v2618
    %3544 = vmatpush.msra.mxu0 %v2616
    %3545 = vmatpush.msra.mxu0 %v2614
    %3546 = vmatmul.f32.gmra.mxu0 %v2786
    %v3547 = vpop.f32.mrf.mxu0
    %v3548 = vadd.f32 %v3528, %v3547
    %3549 = vdwg.mxu0
    %3550 = vmatpush.msra.mxu0 %v2676
    %3551 = vmatpush.msra.mxu0 %v2674
    %3552 = vmatpush.msra.mxu0 %v2672
    %3553 = vmatpush.msra.mxu0 %v2670
    %3554 = vmatpush.msra.mxu0 %v2668
    %3555 = vmatpush.msra.mxu0 %v2666
    %3556 = vmatpush.msra.mxu0 %v2664
    %3557 = vmatpush.msra.mxu0 %v2662
    %3558 = vmatpush.msra.mxu0 %v2660
    %3559 = vmatpush.msra.mxu0 %v2658
    %3560 = vmatpush.msra.mxu0 %v2656
    %3561 = vmatpush.msra.mxu0 %v2654
    %3562 = vmatpush.msra.mxu0 %v2652
    %3563 = vmatpush.msra.mxu0 %v2650
    %3564 = vmatpush.msra.mxu0 %v2648
    %3565 = vmatpush.msra.mxu0 %v2646
    %3566 = vmatmul.f32.gmra.mxu0 %v2787
    %v3567 = vpop.f32.mrf.mxu0
    %v3568 = vadd.f32 %v3548, %v3567
    %3569 = vdwg.mxu0
    %3570 = vmatpush.msra.mxu0 %v2708
    %3571 = vmatpush.msra.mxu0 %v2706
    %3572 = vmatpush.msra.mxu0 %v2704
    %3573 = vmatpush.msra.mxu0 %v2702
    %3574 = vmatpush.msra.mxu0 %v2700
    %3575 = vmatpush.msra.mxu0 %v2698
    %3576 = vmatpush.msra.mxu0 %v2696
    %3577 = vmatpush.msra.mxu0 %v2694
    %3578 = vmatpush.msra.mxu0 %v2692
    %3579 = vmatpush.msra.mxu0 %v2690
    %3580 = vmatpush.msra.mxu0 %v2688
    %3581 = vmatpush.msra.mxu0 %v2686
    %3582 = vmatpush.msra.mxu0 %v2684
    %3583 = vmatpush.msra.mxu0 %v2682
    %3584 = vmatpush.msra.mxu0 %v2680
    %3585 = vmatpush.msra.mxu0 %v2678
    %3586 = vmatmul.f32.gmra.mxu0 %v2788
    %v3587 = vpop.f32.mrf.mxu0
    %v3588 = vadd.f32 %v3568, %v3587
    %3589 = vdwg.mxu0
    %3590 = vmatpush.msra.mxu0 %v2740
    %3591 = vmatpush.msra.mxu0 %v2738
    %3592 = vmatpush.msra.mxu0 %v2736
    %3593 = vmatpush.msra.mxu0 %v2734
    %3594 = vmatpush.msra.mxu0 %v2732
    %3595 = vmatpush.msra.mxu0 %v2730
    %3596 = vmatpush.msra.mxu0 %v2728
    %3597 = vmatpush.msra.mxu0 %v2726
    %3598 = vmatpush.msra.mxu0 %v2724
    %3599 = vmatpush.msra.mxu0 %v2722
    %3600 = vmatpush.msra.mxu0 %v2720
    %3601 = vmatpush.msra.mxu0 %v2718
    %3602 = vmatpush.msra.mxu0 %v2716
    %3603 = vmatpush.msra.mxu0 %v2714
    %3604 = vmatpush.msra.mxu0 %v2712
    %3605 = vmatpush.msra.mxu0 %v2710
    %3606 = vmatmul.f32.gmra.mxu0 %v2789
    %v3607 = vpop.f32.mrf.mxu0
    %v3608 = vadd.f32 %v3588, %v3607
    %3609 = vdwg.mxu0
    %v3610 = vmax.f32 %v3208, 0.0
    %v3611 = vmax.f32 %v3608, 0.0
    %v3612 = vld [vmem:[%s7] sm:$0xff]
    %v3613 = vld [vmem:[%s7 + $0x8] sm:$0xff]
    %v3614 = vld [vmem:[%s7 + $0x10] sm:$0xff]
    %v3615 = vld [vmem:[%s7 + $0x18] sm:$0xff]
    %v3616 = vld [vmem:[%s7 + $0x20] sm:$0xff]
    %v3617 = vld [vmem:[%s7 + $0x28] sm:$0xff]
    %v3618 = vld [vmem:[%s7 + $0x30] sm:$0xff]
    %v3619 = vld [vmem:[%s7 + $0x38] sm:$0xff]
    %v3620 = vld [vmem:[%s7 + $0x40] sm:$0xff]
    %v3621 = vld [vmem:[%s7 + $0x48] sm:$0xff]
    %v3622 = vld [vmem:[%s7 + $0x50] sm:$0xff]
    %v3623 = vld [vmem:[%s7 + $0x58] sm:$0xff]
    %v3624 = vld [vmem:[%s7 + $0x60] sm:$0xff]
    %v3625 = vld [vmem:[%s7 + $0x68] sm:$0xff]
    %v3626 = vld [vmem:[%s7 + $0x70] sm:$0xff]
    %v3627 = vld [vmem:[%s7 + $0x78] sm:$0xff]
    %v3628 = vld [vmem:[%s7 + $0x80] sm:$0xff]
    %v3629 = vld [vmem:[%s7 + $0x88] sm:$0xff]
    %v3630 = vld [vmem:[%s7 + $0x90] sm:$0xff]
    %v3631 = vld [vmem:[%s7 + $0x98] sm:$0xff]
    %v3632 = vld [vmem:[%s7 + $0xa0] sm:$0xff]
    %v3633 = vld [vmem:[%s7 + $0xa8] sm:$0xff]
    %v3634 = vld [vmem:[%s7 + $0xb0] sm:$0xff]
    %v3635 = vld [vmem:[%s7 + $0xb8] sm:$0xff]
    %v3636 = vld [vmem:[%s7 + $0xc0] sm:$0xff]
    %v3637 = vld [vmem:[%s7 + $0xc8] sm:$0xff]
    %v3638 = vld [vmem:[%s7 + $0xd0] sm:$0xff]
    %v3639 = vld [vmem:[%s7 + $0xd8] sm:$0xff]
    %v3640 = vld [vmem:[%s7 + $0xe0] sm:$0xff]
    %v3641 = vld [vmem:[%s7 + $0xe8] sm:$0xff]
    %v3642 = vld [vmem:[%s7 + $0xf0] sm:$0xff]
    %v3643 = vld [vmem:[%s7 + $0xf8] sm:$0xff]
    %v3644 = vld [vmem:[#allocation9] sm:$0x1]
    %v3646 = vperm.slane %v3644, 0
    %3647 = vset.pattern.permute.xlu0 0
    %3648 = vperm.xlu0 %3647, %v3646
    %v3649 = vpop.permute.xlu0 %3648
    %3651 = vmatpush.msra.mxu0 %v3627
    %3652 = vmatpush.msra.mxu0 %v3626
    %3653 = vmatpush.msra.mxu0 %v3625
    %3654 = vmatpush.msra.mxu0 %v3624
    %3655 = vmatpush.msra.mxu0 %v3623
    %3656 = vmatpush.msra.mxu0 %v3622
    %3657 = vmatpush.msra.mxu0 %v3621
    %3658 = vmatpush.msra.mxu0 %v3620
    %3659 = vmatpush.msra.mxu0 %v3619
    %3660 = vmatpush.msra.mxu0 %v3618
    %3661 = vmatpush.msra.mxu0 %v3617
    %3662 = vmatpush.msra.mxu0 %v3616
    %3663 = vmatpush.msra.mxu0 %v3615
    %3664 = vmatpush.msra.mxu0 %v3614
    %3665 = vmatpush.msra.mxu0 %v3613
    %3666 = vmatpush.msra.mxu0 %v3612
    %3667 = vmatmul.f32.gmra.mxu0 %v3610
    %v3668 = vpop.f32.mrf.mxu0
    %v3669 = vadd.f32 %v3649, %v3668
    %3670 = vdwg.mxu0
    %3671 = vmatpush.msra.mxu0 %v3643
    %3672 = vmatpush.msra.mxu0 %v3642
    %3673 = vmatpush.msra.mxu0 %v3641
    %3674 = vmatpush.msra.mxu0 %v3640
    %3675 = vmatpush.msra.mxu0 %v3639
    %3676 = vmatpush.msra.mxu0 %v3638
    %3677 = vmatpush.msra.mxu0 %v3637
    %3678 = vmatpush.msra.mxu0 %v3636
    %3679 = vmatpush.msra.mxu0 %v3635
    %3680 = vmatpush.msra.mxu0 %v3634
    %3681 = vmatpush.msra.mxu0 %v3633
    %3682 = vmatpush.msra.mxu0 %v3632
    %3683 = vmatpush.msra.mxu0 %v3631
    %3684 = vmatpush.msra.mxu0 %v3630
    %3685 = vmatpush.msra.mxu0 %v3629
    %3686 = vmatpush.msra.mxu0 %v3628
    %3687 = vmatmul.f32.gmra.mxu0 %v3611
    %v3688 = vpop.f32.mrf.mxu0
    %v3689 = vadd.f32 %v3669, %v3688
    %3690 = vdwg.mxu0
    %3692 = vrot.lane.b32.xlu0 %v3689, 127
    %v3693 = vpop.permute.xlu0 %3692
    %v3695 = vmax.f32 %v3689, %v3693
    %v3696 = vrot.slane %v3689, 2
    %v3698 = vmax.f32 %v3695, %v3696
    %3699 = vrot.lane.b32.xlu0 %v3696, 127
    %v3700 = vpop.permute.xlu0 %3699
    %v3702 = vmax.f32 %v3698, %v3700
    %v3703 = vsub.f32 %v3689, %v3702
    %v3704 = vmul.f32 %v3703, 1.442695
    %v3705 = vpow.pop %v3704
    %3707 = vrot.lane.b32.xlu0 %v3702, 1
    %v3708 = vpop.permute.xlu0 %3707
    %v3710 = vsub.f32 %v3689, %v3708
    %v3711 = vmul.f32 %v3710, 1.442695
    %v3712 = vpow.pop %v3711
    %v3713 = vrot.slane %v3702, 6
    %v3715 = vsub.f32 %v3689, %v3713
    %v3716 = vmul.f32 %v3715, 1.442695
    %v3717 = vpow.pop %v3716
    %3718 = vrot.lane.b32.xlu0 %v3713, 1
    %v3719 = vpop.permute.xlu0 %3718
    %v3721 = vsub.f32 %v3689, %v3719
    %v3722 = vmul.f32 %v3721, 1.442695
    %v3723 = vpow.pop %v3722
    %3725 = vrot.lane.b32.xlu0 %v3712, 127
    %v3726 = vpop.permute.xlu0 %3725
    %v3728 = vadd.f32 %v3705, %v3726
    %v3730 = vrot.slane %v3717, 2
    %v3732 = vadd.f32 %v3728, %v3730
    %v3734 = vrot.slane %v3723, 2
    %3735 = vrot.lane.b32.xlu0 %v3734, 127
    %v3736 = vpop.permute.xlu0 %3735
    %v3738 = vadd.f32 %v3732, %v3736
    %v3739 = vrcp.pop %v3738
    %v3740 = vmul.f32 %v3738, %v3739
    %v3741 = vsub.f32 2.0, %v3740
    %v3742 = vmul.f32 %v3739, %v3741
    %v3743 = vmul.f32 %v3705, -1.0
    %v3744 = vadd.f32 %v3743, 0.0
    %v3745 = vadd.f32 %v3744, %v3726
    %v3746 = vmul.f32 %v3717, -1.0
    %v3748 = vrot.slane %v3746, 2
    %v3750 = vadd.f32 %v3745, %v3748
    %v3751 = vadd.f32 %v3750, %v3736
    %v3752 = vmul.f32 %v3751, %v3742
    %v3753 = vmul.f32 %v3712, -1.0
    %3755 = vrot.lane.b32.xlu0 %v3753, 127
    %v3756 = vpop.permute.xlu0 %3755
    %v3758 = vadd.f32 %v3744, %v3756
    %v3759 = vadd.f32 %v3758, %v3730
    %v3760 = vadd.f32 %v3759, %v3736
    %v3761 = vmul.f32 %v3760, %v3742
    %3763 = vrot.lane.b32.xlu0 %v3761, 1
    %v3764 = vpop.permute.xlu0 %3763
    %vm3766 = vcmask 7168
    %v3767 = vsel %vm3766, %v3752, %v3764
    %vm3768 = vcmask 9216
    %3769 = vst.msk [vmem:[#allocation16] sm:$0x3] %vm3768, %v3767
    %3770 = vst [vmem:[#allocation7] sm:$0xff] 0.0
    %3771 = vst [vmem:[#allocation7 + $0x8] sm:$0xff] 0.0
    %3772 = vst [vmem:[#allocation7 + $0x10] sm:$0xff] 0.0
    %3773 = vst [vmem:[#allocation7 + $0x18] sm:$0xff] 0.0
    %v3776 = vrot.slane %v3611, 6
    %v3777 = vsel %vm540, %v3610, %v3776
    %3779 = vst [vmem:[#allocation7 + $0xa] sm:$0xf] %v3777
    %3780 = vst.sshfl [vmem:[#allocation1] sm:$0xff pattern:$0x73625140] %v3610
    %3781 = vst.sshfl [vmem:[#allocation1 + $0x8] sm:$0xff pattern:$0x73625140] %v3611
    %s3782 = scalar_lea.vmem [#allocation1], 1
    %v3783 = vld [vmem:[%s3782] ss:$4 sm:$0xff]
    %3785 = vst [vmem:[#allocation7 + $0x12] sm:$0xf] %v3783
    %v3786 = vld [vmem:[#allocation7] sm:$0xff]
    %v3787 = vld [vmem:[#allocation7 + $0x8] sm:$0xff]
    %v3788 = vld [vmem:[#allocation7 + $0x10] sm:$0xff]
    %3792 = vst [vmem:[#allocation1] ss:$2 sm:$0xff] %v3786
    %s3793 = scalar_lea.vmem [#allocation1], 16
    %3794 = vst [vmem:[%s3793] ss:$2 sm:$0xff] %v3787
    %s3795 = scalar_lea.vmem [#allocation1], 32
    %3796 = vst [vmem:[%s3795] ss:$2 sm:$0xff] %v3788
    %v3797 = vld.sshfl [vmem:[#allocation1] sm:$0xff pattern:$0x75643120]
    %v3798 = vld.sshfl [vmem:[#allocation1 + $0x8] sm:$0xff pattern:$0x75643120]
    %v3799 = vld.sshfl [vmem:[#allocation1 + $0x10] sm:$0xff pattern:$0x75643120]
    %v3800 = vld.sshfl [vmem:[#allocation1 + $0x18] sm:$0xff pattern:$0x75643120]
    %v3801 = vld.sshfl [vmem:[#allocation1 + $0x20] sm:$0xff pattern:$0x75643120]
    %v3802 = vld.sshfl [vmem:[#allocation1 + $0x28] sm:$0xff pattern:$0x75643120]
    %3809 = vst [vmem:[#allocation8] sm:$0x33] %v3797
    %3810 = vst [vmem:[#allocation8 + $0x8] sm:$0x33] %v3798
    %3811 = vst [vmem:[#allocation8 + $0x10] sm:$0x33] %v3799
    %3812 = vst [vmem:[#allocation8 + $0x18] sm:$0x33] %v3800
    %3813 = vst [vmem:[#allocation8 + $0x20] sm:$0x33] %v3801
    %3814 = vst [vmem:[#allocation8 + $0x28] sm:$0x33] %v3802
    %v3815 = vld [vmem:[#allocation7 + $0x8] sm:$0xff]
    %v3816 = vld [vmem:[#allocation7 + $0x10] sm:$0xff]
    %v3817 = vld [vmem:[#allocation7 + $0x18] sm:$0xff]
    %s3821 = scalar_lea.vmem [#allocation1], 1
    %3822 = vst [vmem:[%s3821] ss:$2 sm:$0xff] %v3815
    %s3823 = scalar_lea.vmem [#allocation1], 17
    %3824 = vst [vmem:[%s3823] ss:$2 sm:$0xff] %v3816
    %s3825 = scalar_lea.vmem [#allocation1], 33
    %3826 = vst [vmem:[%s3825] ss:$2 sm:$0xff] %v3817
    %v3827 = vld.sshfl [vmem:[#allocation1] sm:$0xff pattern:$0x75643120]
    %v3828 = vld.sshfl [vmem:[#allocation1 + $0x8] sm:$0xff pattern:$0x75643120]
    %v3829 = vld.sshfl [vmem:[#allocation1 + $0x10] sm:$0xff pattern:$0x75643120]
    %v3830 = vld.sshfl [vmem:[#allocation1 + $0x18] sm:$0xff pattern:$0x75643120]
    %v3831 = vld.sshfl [vmem:[#allocation1 + $0x20] sm:$0xff pattern:$0x75643120]
    %v3832 = vld.sshfl [vmem:[#allocation1 + $0x28] sm:$0xff pattern:$0x75643120]
    %3839 = vst [vmem:[#allocation8] sm:$0xcc] %v3827
    %3840 = vst [vmem:[#allocation8 + $0x8] sm:$0xcc] %v3828
    %3841 = vst [vmem:[#allocation8 + $0x10] sm:$0xcc] %v3829
    %3842 = vst [vmem:[#allocation8 + $0x18] sm:$0xcc] %v3830
    %3843 = vst [vmem:[#allocation8 + $0x20] sm:$0xcc] %v3831
    %3844 = vst [vmem:[#allocation8 + $0x28] sm:$0xcc] %v3832
    %v3845 = vld [vmem:[#allocation8] sm:$0xff]
    %v3846 = vld [vmem:[#allocation8 + $0x8] sm:$0xff]
    %v3847 = vld [vmem:[#allocation8 + $0x10] sm:$0xff]
    %v3848 = vld [vmem:[#allocation8 + $0x18] sm:$0xff]
    %v3849 = vld [vmem:[#allocation8 + $0x20] sm:$0xff]
    %v3850 = vld [vmem:[#allocation8 + $0x28] sm:$0xff]
    %v3851 = vld [vmem:[%s9] sm:$0xff]
    %v3852 = vld [vmem:[%s9 + $0x8] sm:$0xff]
    %v3853 = vld [vmem:[%s9 + $0x10] sm:$0xff]
    %v3854 = vld [vmem:[%s9 + $0x18] sm:$0xff]
    %v3855 = vld [vmem:[%s9 + $0x20] sm:$0xff]
    %v3856 = vld [vmem:[%s9 + $0x28] sm:$0xff]
    %v3857 = vld [vmem:[%s9 + $0x30] sm:$0xff]
    %v3858 = vld [vmem:[%s9 + $0x38] sm:$0xff]
    %v3859 = vld [vmem:[%s9 + $0x40] sm:$0xff]
    %v3860 = vld [vmem:[%s9 + $0x48] sm:$0xff]
    %v3861 = vld [vmem:[%s9 + $0x50] sm:$0xff]
    %v3862 = vld [vmem:[%s9 + $0x58] sm:$0xff]
    %v3863 = vld [vmem:[%s9 + $0x60] sm:$0xff]
    %v3864 = vld [vmem:[%s9 + $0x68] sm:$0xff]
    %v3865 = vld [vmem:[%s9 + $0x70] sm:$0xff]
    %v3866 = vld [vmem:[%s9 + $0x78] sm:$0xff]
    %v3867 = vld [vmem:[%s9 + $0x80] sm:$0xff]
    %v3868 = vld [vmem:[%s9 + $0x88] sm:$0xff]
    %v3869 = vld [vmem:[%s9 + $0x90] sm:$0xff]
    %v3870 = vld [vmem:[%s9 + $0x98] sm:$0xff]
    %v3871 = vld [vmem:[%s9 + $0xa0] sm:$0xff]
    %v3872 = vld [vmem:[%s9 + $0xa8] sm:$0xff]
    %v3873 = vld [vmem:[%s9 + $0xb0] sm:$0xff]
    %v3874 = vld [vmem:[%s9 + $0xb8] sm:$0xff]
    %v3875 = vld [vmem:[%s9 + $0xc0] sm:$0xff]
    %v3876 = vld [vmem:[%s9 + $0xc8] sm:$0xff]
    %v3877 = vld [vmem:[%s9 + $0xd0] sm:$0xff]
    %v3878 = vld [vmem:[%s9 + $0xd8] sm:$0xff]
    %v3879 = vld [vmem:[%s9 + $0xe0] sm:$0xff]
    %v3880 = vld [vmem:[%s9 + $0xe8] sm:$0xff]
    %v3881 = vld [vmem:[%s9 + $0xf0] sm:$0xff]
    %v3882 = vld [vmem:[%s9 + $0xf8] sm:$0xff]
    %v3883 = vld [vmem:[%s9 + $0x100] sm:$0xff]
    %v3884 = vld [vmem:[%s9 + $0x108] sm:$0xff]
    %v3885 = vld [vmem:[%s9 + $0x110] sm:$0xff]
    %v3886 = vld [vmem:[%s9 + $0x118] sm:$0xff]
    %v3887 = vld [vmem:[%s9 + $0x120] sm:$0xff]
    %v3888 = vld [vmem:[%s9 + $0x128] sm:$0xff]
    %v3889 = vld [vmem:[%s9 + $0x130] sm:$0xff]
    %v3890 = vld [vmem:[%s9 + $0x138] sm:$0xff]
    %v3891 = vld [vmem:[%s9 + $0x140] sm:$0xff]
    %v3892 = vld [vmem:[%s9 + $0x148] sm:$0xff]
    %v3893 = vld [vmem:[%s9 + $0x150] sm:$0xff]
    %v3894 = vld [vmem:[%s9 + $0x158] sm:$0xff]
    %v3895 = vld [vmem:[%s9 + $0x160] sm:$0xff]
    %v3896 = vld [vmem:[%s9 + $0x168] sm:$0xff]
    %v3897 = vld [vmem:[%s9 + $0x170] sm:$0xff]
    %v3898 = vld [vmem:[%s9 + $0x178] sm:$0xff]
    %v3899 = vld [vmem:[%s9 + $0x180] sm:$0xff]
    %v3900 = vld [vmem:[%s9 + $0x188] sm:$0xff]
    %v3901 = vld [vmem:[%s9 + $0x190] sm:$0xff]
    %v3902 = vld [vmem:[%s9 + $0x198] sm:$0xff]
    %v3903 = vld [vmem:[%s9 + $0x1a0] sm:$0xff]
    %v3904 = vld [vmem:[%s9 + $0x1a8] sm:$0xff]
    %v3905 = vld [vmem:[%s9 + $0x1b0] sm:$0xff]
    %v3906 = vld [vmem:[%s9 + $0x1b8] sm:$0xff]
    %v3907 = vld [vmem:[%s9 + $0x1c0] sm:$0xff]
    %v3908 = vld [vmem:[%s9 + $0x1c8] sm:$0xff]
    %v3909 = vld [vmem:[%s9 + $0x1d0] sm:$0xff]
    %v3910 = vld [vmem:[%s9 + $0x1d8] sm:$0xff]
    %v3911 = vld [vmem:[%s9 + $0x1e0] sm:$0xff]
    %v3912 = vld [vmem:[%s9 + $0x1e8] sm:$0xff]
    %v3913 = vld [vmem:[%s9 + $0x1f0] sm:$0xff]
    %v3914 = vld [vmem:[%s9 + $0x1f8] sm:$0xff]
    %v3915 = vld [vmem:[%s9 + $0x200] sm:$0xff]
    %v3916 = vld [vmem:[%s9 + $0x208] sm:$0xff]
    %v3917 = vld [vmem:[%s9 + $0x210] sm:$0xff]
    %v3918 = vld [vmem:[%s9 + $0x218] sm:$0xff]
    %v3919 = vld [vmem:[%s9 + $0x220] sm:$0xff]
    %v3920 = vld [vmem:[%s9 + $0x228] sm:$0xff]
    %v3921 = vld [vmem:[%s9 + $0x230] sm:$0xff]
    %v3922 = vld [vmem:[%s9 + $0x238] sm:$0xff]
    %v3923 = vld [vmem:[%s9 + $0x240] sm:$0xff]
    %v3924 = vld [vmem:[%s9 + $0x248] sm:$0xff]
    %v3925 = vld [vmem:[%s9 + $0x250] sm:$0xff]
    %v3926 = vld [vmem:[%s9 + $0x258] sm:$0xff]
    %v3927 = vld [vmem:[%s9 + $0x260] sm:$0xff]
    %v3928 = vld [vmem:[%s9 + $0x268] sm:$0xff]
    %v3929 = vld [vmem:[%s9 + $0x270] sm:$0xff]
    %v3930 = vld [vmem:[%s9 + $0x278] sm:$0xff]
    %v3931 = vld [vmem:[%s9 + $0x280] sm:$0xff]
    %v3932 = vld [vmem:[%s9 + $0x288] sm:$0xff]
    %v3933 = vld [vmem:[%s9 + $0x290] sm:$0xff]
    %v3934 = vld [vmem:[%s9 + $0x298] sm:$0xff]
    %v3935 = vld [vmem:[%s9 + $0x2a0] sm:$0xff]
    %v3936 = vld [vmem:[%s9 + $0x2a8] sm:$0xff]
    %v3937 = vld [vmem:[%s9 + $0x2b0] sm:$0xff]
    %v3938 = vld [vmem:[%s9 + $0x2b8] sm:$0xff]
    %v3939 = vld [vmem:[%s9 + $0x2c0] sm:$0xff]
    %v3940 = vld [vmem:[%s9 + $0x2c8] sm:$0xff]
    %v3941 = vld [vmem:[%s9 + $0x2d0] sm:$0xff]
    %v3942 = vld [vmem:[%s9 + $0x2d8] sm:$0xff]
    %v3943 = vld [vmem:[%s9 + $0x2e0] sm:$0xff]
    %v3944 = vld [vmem:[%s9 + $0x2e8] sm:$0xff]
    %v3945 = vld [vmem:[%s9 + $0x2f0] sm:$0xff]
    %v3946 = vld [vmem:[%s9 + $0x2f8] sm:$0xff]
    %v3947 = vld [vmem:[%s9 + $0x300] sm:$0xff]
    %v3948 = vld [vmem:[%s9 + $0x308] sm:$0xff]
    %v3949 = vld [vmem:[%s9 + $0x310] sm:$0xff]
    %v3950 = vld [vmem:[%s9 + $0x318] sm:$0xff]
    %v3951 = vld [vmem:[%s9 + $0x320] sm:$0xff]
    %v3952 = vld [vmem:[%s9 + $0x328] sm:$0xff]
    %v3953 = vld [vmem:[%s9 + $0x330] sm:$0xff]
    %v3954 = vld [vmem:[%s9 + $0x338] sm:$0xff]
    %v3955 = vld [vmem:[%s9 + $0x340] sm:$0xff]
    %v3956 = vld [vmem:[%s9 + $0x348] sm:$0xff]
    %v3957 = vld [vmem:[%s9 + $0x350] sm:$0xff]
    %v3958 = vld [vmem:[%s9 + $0x358] sm:$0xff]
    %v3959 = vld [vmem:[%s9 + $0x360] sm:$0xff]
    %v3960 = vld [vmem:[%s9 + $0x368] sm:$0xff]
    %v3961 = vld [vmem:[%s9 + $0x370] sm:$0xff]
    %v3962 = vld [vmem:[%s9 + $0x378] sm:$0xff]
    %v3963 = vld [vmem:[%s9 + $0x380] sm:$0xff]
    %v3964 = vld [vmem:[%s9 + $0x388] sm:$0xff]
    %v3965 = vld [vmem:[%s9 + $0x390] sm:$0xff]
    %v3966 = vld [vmem:[%s9 + $0x398] sm:$0xff]
    %v3967 = vld [vmem:[%s9 + $0x3a0] sm:$0xff]
    %v3968 = vld [vmem:[%s9 + $0x3a8] sm:$0xff]
    %v3969 = vld [vmem:[%s9 + $0x3b0] sm:$0xff]
    %v3970 = vld [vmem:[%s9 + $0x3b8] sm:$0xff]
    %v3971 = vld [vmem:[%s9 + $0x3c0] sm:$0xff]
    %v3972 = vld [vmem:[%s9 + $0x3c8] sm:$0xff]
    %v3973 = vld [vmem:[%s9 + $0x3d0] sm:$0xff]
    %v3974 = vld [vmem:[%s9 + $0x3d8] sm:$0xff]
    %v3975 = vld [vmem:[%s9 + $0x3e0] sm:$0xff]
    %v3976 = vld [vmem:[%s9 + $0x3e8] sm:$0xff]
    %v3977 = vld [vmem:[%s9 + $0x3f0] sm:$0xff]
    %v3978 = vld [vmem:[%s9 + $0x3f8] sm:$0xff]
    %v3979 = vld [vmem:[%s9 + $0x400] sm:$0xff]
    %v3980 = vld [vmem:[%s9 + $0x408] sm:$0xff]
    %v3981 = vld [vmem:[%s9 + $0x410] sm:$0xff]
    %v3982 = vld [vmem:[%s9 + $0x418] sm:$0xff]
    %v3983 = vld [vmem:[%s9 + $0x420] sm:$0xff]
    %v3984 = vld [vmem:[%s9 + $0x428] sm:$0xff]
    %v3985 = vld [vmem:[%s9 + $0x430] sm:$0xff]
    %v3986 = vld [vmem:[%s9 + $0x438] sm:$0xff]
    %v3987 = vld [vmem:[%s9 + $0x440] sm:$0xff]
    %v3988 = vld [vmem:[%s9 + $0x448] sm:$0xff]
    %v3989 = vld [vmem:[%s9 + $0x450] sm:$0xff]
    %v3990 = vld [vmem:[%s9 + $0x458] sm:$0xff]
    %v3991 = vld [vmem:[%s9 + $0x460] sm:$0xff]
    %v3992 = vld [vmem:[%s9 + $0x468] sm:$0xff]
    %v3993 = vld [vmem:[%s9 + $0x470] sm:$0xff]
    %v3994 = vld [vmem:[%s9 + $0x478] sm:$0xff]
    %v3995 = vld [vmem:[%s9 + $0x480] sm:$0xff]
    %v3996 = vld [vmem:[%s9 + $0x488] sm:$0xff]
    %v3997 = vld [vmem:[%s9 + $0x490] sm:$0xff]
    %v3998 = vld [vmem:[%s9 + $0x498] sm:$0xff]
    %v3999 = vld [vmem:[%s9 + $0x4a0] sm:$0xff]
    %v4000 = vld [vmem:[%s9 + $0x4a8] sm:$0xff]
    %v4001 = vld [vmem:[%s9 + $0x4b0] sm:$0xff]
    %v4002 = vld [vmem:[%s9 + $0x4b8] sm:$0xff]
    %v4003 = vld [vmem:[%s9 + $0x4c0] sm:$0xff]
    %v4004 = vld [vmem:[%s9 + $0x4c8] sm:$0xff]
    %v4005 = vld [vmem:[%s9 + $0x4d0] sm:$0xff]
    %v4006 = vld [vmem:[%s9 + $0x4d8] sm:$0xff]
    %v4007 = vld [vmem:[%s9 + $0x4e0] sm:$0xff]
    %v4008 = vld [vmem:[%s9 + $0x4e8] sm:$0xff]
    %v4009 = vld [vmem:[%s9 + $0x4f0] sm:$0xff]
    %v4010 = vld [vmem:[%s9 + $0x4f8] sm:$0xff]
    %v4011 = vld [vmem:[%s9 + $0x500] sm:$0xff]
    %v4012 = vld [vmem:[%s9 + $0x508] sm:$0xff]
    %v4013 = vld [vmem:[%s9 + $0x510] sm:$0xff]
    %v4014 = vld [vmem:[%s9 + $0x518] sm:$0xff]
    %v4015 = vld [vmem:[%s9 + $0x520] sm:$0xff]
    %v4016 = vld [vmem:[%s9 + $0x528] sm:$0xff]
    %v4017 = vld [vmem:[%s9 + $0x530] sm:$0xff]
    %v4018 = vld [vmem:[%s9 + $0x538] sm:$0xff]
    %v4019 = vld [vmem:[%s9 + $0x540] sm:$0xff]
    %v4020 = vld [vmem:[%s9 + $0x548] sm:$0xff]
    %v4021 = vld [vmem:[%s9 + $0x550] sm:$0xff]
    %v4022 = vld [vmem:[%s9 + $0x558] sm:$0xff]
    %v4023 = vld [vmem:[%s9 + $0x560] sm:$0xff]
    %v4024 = vld [vmem:[%s9 + $0x568] sm:$0xff]
    %v4025 = vld [vmem:[%s9 + $0x570] sm:$0xff]
    %v4026 = vld [vmem:[%s9 + $0x578] sm:$0xff]
    %v4027 = vld [vmem:[%s9 + $0x580] sm:$0xff]
    %v4028 = vld [vmem:[%s9 + $0x588] sm:$0xff]
    %v4029 = vld [vmem:[%s9 + $0x590] sm:$0xff]
    %v4030 = vld [vmem:[%s9 + $0x598] sm:$0xff]
    %v4031 = vld [vmem:[%s9 + $0x5a0] sm:$0xff]
    %v4032 = vld [vmem:[%s9 + $0x5a8] sm:$0xff]
    %v4033 = vld [vmem:[%s9 + $0x5b0] sm:$0xff]
    %v4034 = vld [vmem:[%s9 + $0x5b8] sm:$0xff]
    %v4035 = vld [vmem:[%s9 + $0x5c0] sm:$0xff]
    %v4036 = vld [vmem:[%s9 + $0x5c8] sm:$0xff]
    %v4037 = vld [vmem:[%s9 + $0x5d0] sm:$0xff]
    %v4038 = vld [vmem:[%s9 + $0x5d8] sm:$0xff]
    %v4039 = vld [vmem:[%s9 + $0x5e0] sm:$0xff]
    %v4040 = vld [vmem:[%s9 + $0x5e8] sm:$0xff]
    %v4041 = vld [vmem:[%s9 + $0x5f0] sm:$0xff]
    %v4042 = vld [vmem:[%s9 + $0x5f8] sm:$0xff]
    %v4043 = vld [vmem:[%s10] sm:$0x1]
    %v4045 = vperm.slane %v4043, 0
    %4053 = vst [vmem:[#allocation1] ss:$2 sm:$0xff] %v3845
    %s4054 = scalar_lea.vmem [#allocation1], 16
    %4055 = vst [vmem:[%s4054] ss:$2 sm:$0xff] %v3846
    %s4056 = scalar_lea.vmem [#allocation1], 32
    %4057 = vst [vmem:[%s4056] ss:$2 sm:$0xff] %v3847
    %s4058 = scalar_lea.vmem [#allocation1], 48
    %4059 = vst [vmem:[%s4058] ss:$2 sm:$0xff] %v3848
    %v4060 = vld.sshfl [vmem:[#allocation1] sm:$0xff pattern:$0x75316420]
    %v4061 = vld.sshfl [vmem:[#allocation1 + $0x8] sm:$0xff pattern:$0x75316420]
    %v4062 = vld.sshfl [vmem:[#allocation1 + $0x10] sm:$0xff pattern:$0x75316420]
    %v4063 = vld.sshfl [vmem:[#allocation1 + $0x18] sm:$0xff pattern:$0x75316420]
    %v4064 = vld.sshfl [vmem:[#allocation1 + $0x20] sm:$0xff pattern:$0x75316420]
    %v4065 = vld.sshfl [vmem:[#allocation1 + $0x28] sm:$0xff pattern:$0x75316420]
    %v4066 = vld.sshfl [vmem:[#allocation1 + $0x30] sm:$0xff pattern:$0x75316420]
    %v4067 = vld.sshfl [vmem:[#allocation1 + $0x38] sm:$0xff pattern:$0x75316420]
    %4068 = vst [vmem:[#allocation1] ss:$2 sm:$0xff] %v3849
    %4069 = vst [vmem:[%s4054] ss:$2 sm:$0xff] %v3850
    %v4070 = vld.sshfl [vmem:[#allocation1] sm:$0xff pattern:$0x75316420]
    %v4071 = vld.sshfl [vmem:[#allocation1 + $0x8] sm:$0xff pattern:$0x75316420]
    %v4072 = vld.sshfl [vmem:[#allocation1 + $0x10] sm:$0xff pattern:$0x75316420]
    %v4073 = vld.sshfl [vmem:[#allocation1 + $0x18] sm:$0xff pattern:$0x75316420]
    %4086 = vmatpush.msra.mxu0 %v3866
    %4087 = vmatpush.msra.mxu0 %v3865
    %4088 = vmatpush.msra.mxu0 %v3864
    %4089 = vmatpush.msra.mxu0 %v3863
    %4090 = vmatpush.msra.mxu0 %v3862
    %4091 = vmatpush.msra.mxu0 %v3861
    %4092 = vmatpush.msra.mxu0 %v3860
    %4093 = vmatpush.msra.mxu0 %v3859
    %4094 = vmatpush.msra.mxu0 %v3858
    %4095 = vmatpush.msra.mxu0 %v3857
    %4096 = vmatpush.msra.mxu0 %v3856
    %4097 = vmatpush.msra.mxu0 %v3855
    %4098 = vmatpush.msra.mxu0 %v3854
    %4099 = vmatpush.msra.mxu0 %v3853
    %4100 = vmatpush.msra.mxu0 %v3852
    %4101 = vmatpush.msra.mxu0 %v3851
    %4102 = vmatmul.f32.gmra.mxu0 %v4060
    %v4103 = vpop.f32.mrf.mxu0
    %v4104 = vadd.f32 %v4045, %v4103
    %4105 = vdwg.mxu0
    %4106 = vmatpush.msra.mxu0 %v3882
    %4107 = vmatpush.msra.mxu0 %v3881
    %4108 = vmatpush.msra.mxu0 %v3880
    %4109 = vmatpush.msra.mxu0 %v3879
    %4110 = vmatpush.msra.mxu0 %v3878
    %4111 = vmatpush.msra.mxu0 %v3877
    %4112 = vmatpush.msra.mxu0 %v3876
    %4113 = vmatpush.msra.mxu0 %v3875
    %4114 = vmatpush.msra.mxu0 %v3874
    %4115 = vmatpush.msra.mxu0 %v3873
    %4116 = vmatpush.msra.mxu0 %v3872
    %4117 = vmatpush.msra.mxu0 %v3871
    %4118 = vmatpush.msra.mxu0 %v3870
    %4119 = vmatpush.msra.mxu0 %v3869
    %4120 = vmatpush.msra.mxu0 %v3868
    %4121 = vmatpush.msra.mxu0 %v3867
    %4122 = vmatmul.f32.gmra.mxu0 %v4061
    %v4123 = vpop.f32.mrf.mxu0
    %v4124 = vadd.f32 %v4104, %v4123
    %4125 = vdwg.mxu0
    %4126 = vmatpush.msra.mxu0 %v3898
    %4127 = vmatpush.msra.mxu0 %v3897
    %4128 = vmatpush.msra.mxu0 %v3896
    %4129 = vmatpush.msra.mxu0 %v3895
    %4130 = vmatpush.msra.mxu0 %v3894
    %4131 = vmatpush.msra.mxu0 %v3893
    %4132 = vmatpush.msra.mxu0 %v3892
    %4133 = vmatpush.msra.mxu0 %v3891
    %4134 = vmatpush.msra.mxu0 %v3890
    %4135 = vmatpush.msra.mxu0 %v3889
    %4136 = vmatpush.msra.mxu0 %v3888
    %4137 = vmatpush.msra.mxu0 %v3887
    %4138 = vmatpush.msra.mxu0 %v3886
    %4139 = vmatpush.msra.mxu0 %v3885
    %4140 = vmatpush.msra.mxu0 %v3884
    %4141 = vmatpush.msra.mxu0 %v3883
    %4142 = vmatmul.f32.gmra.mxu0 %v4062
    %v4143 = vpop.f32.mrf.mxu0
    %v4144 = vadd.f32 %v4124, %v4143
    %4145 = vdwg.mxu0
    %4146 = vmatpush.msra.mxu0 %v3914
    %4147 = vmatpush.msra.mxu0 %v3913
    %4148 = vmatpush.msra.mxu0 %v3912
    %4149 = vmatpush.msra.mxu0 %v3911
    %4150 = vmatpush.msra.mxu0 %v3910
    %4151 = vmatpush.msra.mxu0 %v3909
    %4152 = vmatpush.msra.mxu0 %v3908
    %4153 = vmatpush.msra.mxu0 %v3907
    %4154 = vmatpush.msra.mxu0 %v3906
    %4155 = vmatpush.msra.mxu0 %v3905
    %4156 = vmatpush.msra.mxu0 %v3904
    %4157 = vmatpush.msra.mxu0 %v3903
    %4158 = vmatpush.msra.mxu0 %v3902
    %4159 = vmatpush.msra.mxu0 %v3901
    %4160 = vmatpush.msra.mxu0 %v3900
    %4161 = vmatpush.msra.mxu0 %v3899
    %4162 = vmatmul.f32.gmra.mxu0 %v4063
    %v4163 = vpop.f32.mrf.mxu0
    %v4164 = vadd.f32 %v4144, %v4163
    %4165 = vdwg.mxu0
    %4166 = vmatpush.msra.mxu0 %v3930
    %4167 = vmatpush.msra.mxu0 %v3929
    %4168 = vmatpush.msra.mxu0 %v3928
    %4169 = vmatpush.msra.mxu0 %v3927
    %4170 = vmatpush.msra.mxu0 %v3926
    %4171 = vmatpush.msra.mxu0 %v3925
    %4172 = vmatpush.msra.mxu0 %v3924
    %4173 = vmatpush.msra.mxu0 %v3923
    %4174 = vmatpush.msra.mxu0 %v3922
    %4175 = vmatpush.msra.mxu0 %v3921
    %4176 = vmatpush.msra.mxu0 %v3920
    %4177 = vmatpush.msra.mxu0 %v3919
    %4178 = vmatpush.msra.mxu0 %v3918
    %4179 = vmatpush.msra.mxu0 %v3917
    %4180 = vmatpush.msra.mxu0 %v3916
    %4181 = vmatpush.msra.mxu0 %v3915
    %4182 = vmatmul.f32.gmra.mxu0 %v4064
    %v4183 = vpop.f32.mrf.mxu0
    %v4184 = vadd.f32 %v4164, %v4183
    %4185 = vdwg.mxu0
    %4186 = vmatpush.msra.mxu0 %v3946
    %4187 = vmatpush.msra.mxu0 %v3945
    %4188 = vmatpush.msra.mxu0 %v3944
    %4189 = vmatpush.msra.mxu0 %v3943
    %4190 = vmatpush.msra.mxu0 %v3942
    %4191 = vmatpush.msra.mxu0 %v3941
    %4192 = vmatpush.msra.mxu0 %v3940
    %4193 = vmatpush.msra.mxu0 %v3939
    %4194 = vmatpush.msra.mxu0 %v3938
    %4195 = vmatpush.msra.mxu0 %v3937
    %4196 = vmatpush.msra.mxu0 %v3936
    %4197 = vmatpush.msra.mxu0 %v3935
    %4198 = vmatpush.msra.mxu0 %v3934
    %4199 = vmatpush.msra.mxu0 %v3933
    %4200 = vmatpush.msra.mxu0 %v3932
    %4201 = vmatpush.msra.mxu0 %v3931
    %4202 = vmatmul.f32.gmra.mxu0 %v4065
    %v4203 = vpop.f32.mrf.mxu0
    %v4204 = vadd.f32 %v4184, %v4203
    %4205 = vdwg.mxu0
    %4206 = vmatpush.msra.mxu0 %v3962
    %4207 = vmatpush.msra.mxu0 %v3961
    %4208 = vmatpush.msra.mxu0 %v3960
    %4209 = vmatpush.msra.mxu0 %v3959
    %4210 = vmatpush.msra.mxu0 %v3958
    %4211 = vmatpush.msra.mxu0 %v3957
    %4212 = vmatpush.msra.mxu0 %v3956
    %4213 = vmatpush.msra.mxu0 %v3955
    %4214 = vmatpush.msra.mxu0 %v3954
    %4215 = vmatpush.msra.mxu0 %v3953
    %4216 = vmatpush.msra.mxu0 %v3952
    %4217 = vmatpush.msra.mxu0 %v3951
    %4218 = vmatpush.msra.mxu0 %v3950
    %4219 = vmatpush.msra.mxu0 %v3949
    %4220 = vmatpush.msra.mxu0 %v3948
    %4221 = vmatpush.msra.mxu0 %v3947
    %4222 = vmatmul.f32.gmra.mxu0 %v4066
    %v4223 = vpop.f32.mrf.mxu0
    %v4224 = vadd.f32 %v4204, %v4223
    %4225 = vdwg.mxu0
    %4226 = vmatpush.msra.mxu0 %v3978
    %4227 = vmatpush.msra.mxu0 %v3977
    %4228 = vmatpush.msra.mxu0 %v3976
    %4229 = vmatpush.msra.mxu0 %v3975
    %4230 = vmatpush.msra.mxu0 %v3974
    %4231 = vmatpush.msra.mxu0 %v3973
    %4232 = vmatpush.msra.mxu0 %v3972
    %4233 = vmatpush.msra.mxu0 %v3971
    %4234 = vmatpush.msra.mxu0 %v3970
    %4235 = vmatpush.msra.mxu0 %v3969
    %4236 = vmatpush.msra.mxu0 %v3968
    %4237 = vmatpush.msra.mxu0 %v3967
    %4238 = vmatpush.msra.mxu0 %v3966
    %4239 = vmatpush.msra.mxu0 %v3965
    %4240 = vmatpush.msra.mxu0 %v3964
    %4241 = vmatpush.msra.mxu0 %v3963
    %4242 = vmatmul.f32.gmra.mxu0 %v4067
    %v4243 = vpop.f32.mrf.mxu0
    %v4244 = vadd.f32 %v4224, %v4243
    %4245 = vdwg.mxu0
    %4246 = vmatpush.msra.mxu0 %v3994
    %4247 = vmatpush.msra.mxu0 %v3993
    %4248 = vmatpush.msra.mxu0 %v3992
    %4249 = vmatpush.msra.mxu0 %v3991
    %4250 = vmatpush.msra.mxu0 %v3990
    %4251 = vmatpush.msra.mxu0 %v3989
    %4252 = vmatpush.msra.mxu0 %v3988
    %4253 = vmatpush.msra.mxu0 %v3987
    %4254 = vmatpush.msra.mxu0 %v3986
    %4255 = vmatpush.msra.mxu0 %v3985
    %4256 = vmatpush.msra.mxu0 %v3984
    %4257 = vmatpush.msra.mxu0 %v3983
    %4258 = vmatpush.msra.mxu0 %v3982
    %4259 = vmatpush.msra.mxu0 %v3981
    %4260 = vmatpush.msra.mxu0 %v3980
    %4261 = vmatpush.msra.mxu0 %v3979
    %4262 = vmatmul.f32.gmra.mxu0 %v4070
    %v4263 = vpop.f32.mrf.mxu0
    %v4264 = vadd.f32 %v4244, %v4263
    %4265 = vdwg.mxu0
    %4266 = vmatpush.msra.mxu0 %v4010
    %4267 = vmatpush.msra.mxu0 %v4009
    %4268 = vmatpush.msra.mxu0 %v4008
    %4269 = vmatpush.msra.mxu0 %v4007
    %4270 = vmatpush.msra.mxu0 %v4006
    %4271 = vmatpush.msra.mxu0 %v4005
    %4272 = vmatpush.msra.mxu0 %v4004
    %4273 = vmatpush.msra.mxu0 %v4003
    %4274 = vmatpush.msra.mxu0 %v4002
    %4275 = vmatpush.msra.mxu0 %v4001
    %4276 = vmatpush.msra.mxu0 %v4000
    %4277 = vmatpush.msra.mxu0 %v3999
    %4278 = vmatpush.msra.mxu0 %v3998
    %4279 = vmatpush.msra.mxu0 %v3997
    %4280 = vmatpush.msra.mxu0 %v3996
    %4281 = vmatpush.msra.mxu0 %v3995
    %4282 = vmatmul.f32.gmra.mxu0 %v4071
    %v4283 = vpop.f32.mrf.mxu0
    %v4284 = vadd.f32 %v4264, %v4283
    %4285 = vdwg.mxu0
    %4286 = vmatpush.msra.mxu0 %v4026
    %4287 = vmatpush.msra.mxu0 %v4025
    %4288 = vmatpush.msra.mxu0 %v4024
    %4289 = vmatpush.msra.mxu0 %v4023
    %4290 = vmatpush.msra.mxu0 %v4022
    %4291 = vmatpush.msra.mxu0 %v4021
    %4292 = vmatpush.msra.mxu0 %v4020
    %4293 = vmatpush.msra.mxu0 %v4019
    %4294 = vmatpush.msra.mxu0 %v4018
    %4295 = vmatpush.msra.mxu0 %v4017
    %4296 = vmatpush.msra.mxu0 %v4016
    %4297 = vmatpush.msra.mxu0 %v4015
    %4298 = vmatpush.msra.mxu0 %v4014
    %4299 = vmatpush.msra.mxu0 %v4013
    %4300 = vmatpush.msra.mxu0 %v4012
    %4301 = vmatpush.msra.mxu0 %v4011
    %4302 = vmatmul.f32.gmra.mxu0 %v4072
    %v4303 = vpop.f32.mrf.mxu0
    %v4304 = vadd.f32 %v4284, %v4303
    %4305 = vdwg.mxu0
    %4306 = vmatpush.msra.mxu0 %v4042
    %4307 = vmatpush.msra.mxu0 %v4041
    %4308 = vmatpush.msra.mxu0 %v4040
    %4309 = vmatpush.msra.mxu0 %v4039
    %4310 = vmatpush.msra.mxu0 %v4038
    %4311 = vmatpush.msra.mxu0 %v4037
    %4312 = vmatpush.msra.mxu0 %v4036
    %4313 = vmatpush.msra.mxu0 %v4035
    %4314 = vmatpush.msra.mxu0 %v4034
    %4315 = vmatpush.msra.mxu0 %v4033
    %4316 = vmatpush.msra.mxu0 %v4032
    %4317 = vmatpush.msra.mxu0 %v4031
    %4318 = vmatpush.msra.mxu0 %v4030
    %4319 = vmatpush.msra.mxu0 %v4029
    %4320 = vmatpush.msra.mxu0 %v4028
    %4321 = vmatpush.msra.mxu0 %v4027
    %4322 = vmatmul.f32.gmra.mxu0 %v4073
    %v4323 = vpop.f32.mrf.mxu0
    %v4324 = vadd.f32 %v4304, %v4323
    %4325 = vdwg.mxu0
    %4327 = vrot.lane.b32.xlu0 %v4324, 112
    %v4328 = vpop.permute.xlu0 %4327
    %v4330 = vadd.f32 %v4324, %v4328
    %v4331 = vrot.slane %v4324, 2
    %v4333 = vadd.f32 %v4330, %v4331
    %4334 = vrot.lane.b32.xlu0 %v4331, 112
    %v4335 = vpop.permute.xlu0 %4334
    %v4337 = vadd.f32 %v4333, %v4335
    %v4338 = vmul.f32 %v4337, 0.25
    %v4339 = vld [vmem:[%s11] sm:$0x1]
    %v4341 = vperm.slane %v4339, 0
    %v4343 = vmul.f32 %v4338, %v4341
    %vm4344 = vcmask 123904
    %v4345 = vsel %vm4344, %v4343, 0.0
    %4346 = vadd.xlane.f32.xlu0 %v4345
    %v4347 = vpop.xlane.xlu0 %4346
    %v4348 = vld [vmem:[#allocation10] sm:$0x1]
    %v4350 = vperm.slane %v4348, 0
    %v4352 = vadd.f32 %v4347, %v4350
    %v4353 = vsub.f32 0.0, %v4352
    %v4354 = vmul.f32 %v4353, 1.442695
    %v4355 = vpow.pop %v4354
    %v4356 = vadd.f32 %v4355, 1.0
    %v4357 = vrcp.pop %v4356
    %v4358 = vmul.f32 %v4356, %v4357
    %v4359 = vsub.f32 1.0, %v4358
    %v4360 = vmul.f32 %v4357, %v4359
    %v4361 = vadd.f32 %v4357, %v4360
    %vm4362 = vweird.f32 %v4356
    %vm4363 = vweird.f32 %v4357
    %vm4364 = vmor %vm4362, %vm4363
    %v4365 = vsel %vm4364, %v4357, %v4361
    %v4366 = vand.u32 2147483647, %v4356
    %vm4367 = vcmp.eq.f32.partialorder %v4366, 8.507059e+37
    %v4368 = vand.u32 %v4356, 2147483648
    %v4369 = vor.u32 1.1754944e-38, %v4368
    %v4370 = vsel %vm4367, %v4369, %v4365
    %v4371 = vmul.f32 1.0, %v4370
    %vm4372 = vcmask 1024
    %4373 = vst.msk [vmem:[%s14] sm:$0x3] %vm4372, %v4371
    // Predicated region
    $region62: #{planner_forward.1} parent=1 // pred_check
      _
    $region63: #{planner_forward.1} parent=1 // pred_check_branch
      %4375 = sbr.rel (0) target = $region65
    $region64: #{planner_forward.1} parent=1 // pred_region
      %4377 = vsyncadd [#allocation13], 0
      %s4379 = sshll.u32 [#allocation16], 4
      %s4380 = int_to_ptr.vmem [resolvable:$true] %s4379
      %s4381 = sshll.u32 %s13, 4
      %s4382 = int_to_ptr.hbm [resolvable:$true] %s4381
      %4384 = dma.vmem_to_hbm [thread:$0]  %s4380, 32, %s4382, [#allocation13]
    $region65: #{planner_forward.1} parent=1 // pred_fallthru
      _
    // Predicated region
    $region66: #{planner_forward.1} parent=1 // pred_check
      _
    $region67: #{planner_forward.1} parent=1 // pred_check_branch
      %4386 = sbr.rel (0) target = $region69
    $region68: #{planner_forward.1} parent=1 // pred_region
      _
    $region69: #{planner_forward.1} parent=1 // pred_fallthru
      _
    // Predicated region
    $region70: #{planner_forward.1} parent=1 // pred_check
      _
    $region71: #{planner_forward.1} parent=1 // pred_check_branch
      %4388 = sbr.rel (0) target = $region73
    $region72: #{planner_forward.1} parent=1 // pred_region
      %4390 = dma.done [#allocation13], 32
    $region73: #{planner_forward.1} parent=1 // pred_fallthru
      _
    // Predicated region
    $region74: #{planner_forward.1} parent=1 // pred_check
      _
    $region75: #{planner_forward.1} parent=1 // pred_check_branch
      %4392 = sbr.rel (0) target = $region77
    $region76: #{planner_forward.1} parent=1 // pred_region
      _
    $region77: #{planner_forward.1} parent=1 // pred_fallthru
      _
    %4393 = vsyncpa [#allocation12], 1
    %4394 = vsyncpa [#allocation15], 1
    %4395 = vsyncpa [#allocation13], 1

</llo_original>
